<compile_context>
chip_gen: v7x
topology: tpu7x:2x2x1
jax: 0.10.0
libtpu: 0.0.40
codegen_flags: <defaults>
</compile_context>

<pallas_src>
import numpy as np
import jax
import jax.numpy as jnp
from jax import lax
from jax.experimental import pallas as pl
from jax.experimental.pallas import tpu as pltpu  # noqa: F401  (TPU backend)

# ------------------------- small, module-consistent config -------------------------
VOCAB = 32
SEQ = 8            # sequence_length == n_input_tokens
N_LAYERS = 2
EMB_DIM = 16
MODEL_DIM = 32
K_DIM = 8
V_DIM = 8
N_HEADS = 4
FF_DIM = 64
PAD_IDX = 0
BATCH = 2
LN_EPS = 1e-5

HK = N_HEADS * K_DIM          # 32
HV = N_HEADS * V_DIM          # 32
QKV = 2 * HK + HV             # 96
BS = BATCH * SEQ              # 16


# ------------------------------------ fused kernel ----------------------------------

def _encoder_kernel(tok_ref, negmask_ref, emb_ref, pe_ref, w_emb_ref, b_emb_ref,
                    w_qkv_ref, b_qkv_ref, w_o_ref, b_o_ref, ln_g_ref, ln_b_ref,
                    w1_ref, b1_ref, w2_ref, b2_ref, ff_g_ref, ff_b_ref,
                    w_out_ref, b_out_ref, out_ref):
    f32 = jnp.float32

    # ---- token-embedding gather as a one-hot MXU matmul (table lives in VMEM) ----
    tok = tok_ref[...]                                                  # (BS, 1) int32
    vocab_ids = lax.broadcasted_iota(jnp.int32, (BS, VOCAB), 1)
    one_hot = (tok == vocab_ids).astype(f32)                            # (BS, VOCAB)
    emb = jnp.dot(one_hot, emb_ref[...], preferred_element_type=f32)    # (BS, E)

    # ---- add positional encoding, project to model_dim ----
    emb = (emb.reshape(BATCH, SEQ, EMB_DIM) + pe_ref[...]).reshape(BS, EMB_DIM)
    x = jnp.dot(emb, w_emb_ref[...], preferred_element_type=f32) + b_emb_ref[...]   # (BS, D)

    # additive key-padding mask, broadcast ONCE (hoisted out of all unrolled loops)
    neg_mask = jnp.broadcast_to(negmask_ref[...], (BATCH, SEQ, SEQ))    # (B, Sq, Sk)

    scale = 1.0 / float(np.sqrt(K_DIM))
    inv_sd = 1.0 / float(SEQ * MODEL_DIM)

    for l in range(N_LAYERS):                       # static unroll (N_LAYERS == 2)
        # ------------------------ multi-head self-attention ------------------------
        qkv = jnp.dot(x, w_qkv_ref[l], preferred_element_type=f32) + b_qkv_ref[l]   # (BS, 96)
        qkv3 = qkv.reshape(BATCH, SEQ, QKV)
        w_o_l = w_o_ref[l]                                              # (HV, D)

        acc = None
        for h in range(N_HEADS):                                        # static unroll
            q_h = qkv3[:, :, h * K_DIM:(h + 1) * K_DIM]                 # (B, S, K)
            k_h = qkv3[:, :, HK + h * K_DIM:HK + (h + 1) * K_DIM]       # (B, S, K)
            v_h = qkv3[:, :, 2 * HK + h * V_DIM:2 * HK + (h + 1) * V_DIM]   # (B, S, V)

            s = jnp.einsum('bqk,bjk->bqj', q_h, k_h,
                           preferred_element_type=f32) * scale + neg_mask    # (B, S, S)
            m = jnp.max(s, axis=-1, keepdims=True)
            p = jnp.exp(s - m)
            p = p * pl.reciprocal(jnp.sum(p, axis=-1, keepdims=True), approx=True)
            ctx = jnp.einsum('bqj,bjv->bqv', p, v_h, preferred_element_type=f32)  # (B, S, V)

            # accumulate through the head's slice of the output projection (no concat)
            contrib = jnp.einsum('bqv,vd->bqd', ctx,
                                 w_o_l[h * V_DIM:(h + 1) * V_DIM, :],
                                 preferred_element_type=f32)                        # (B, S, D)
            acc = contrib if acc is None else acc + contrib

        y = acc + b_o_ref[l] + x.reshape(BATCH, SEQ, MODEL_DIM)
        # LayerNorm over [sequence_length, model_dim] per batch element
        mu = jnp.sum(jnp.sum(y, axis=2, keepdims=True), axis=1, keepdims=True) * inv_sd
        d = y - mu
        var = jnp.sum(jnp.sum(d * d, axis=2, keepdims=True), axis=1, keepdims=True) * inv_sd
        y = d * lax.rsqrt(var + LN_EPS) * ln_g_ref[l] + ln_b_ref[l]
        x = y.reshape(BS, MODEL_DIM)

        # ------------------------------ feed forward --------------------------------
        hdn = jnp.dot(x, w1_ref[l], preferred_element_type=f32) + b1_ref[l]   # (BS, FF)
        hdn = jnp.maximum(hdn, 0.0)                                           # ReLU
        o = jnp.dot(hdn, w2_ref[l], preferred_element_type=f32) + b2_ref[l]   # (BS, D)
        y = o + x                                       # dropout(p=0) == identity
        # LayerNorm over [model_dim] only
        mu = jnp.mean(y, axis=-1, keepdims=True)
        d = y - mu
        var = jnp.mean(d * d, axis=-1, keepdims=True)
        x = d * lax.rsqrt(var + LN_EPS) * ff_g_ref[l] + ff_b_ref[l]

    # -------------------------------- output linear ---------------------------------
    out_ref[...] = jnp.dot(x, w_out_ref[...], preferred_element_type=f32) + b_out_ref[...]


# -------------------------------- pallas_call wrapper --------------------------------

def encoder_transformer_forward(tokens, attention_mask, params):
    B, S = tokens.shape
    tok2 = tokens.reshape(B * S, 1).astype(jnp.int32)
    # additive key-padding mask precomputed once (glue; matches masked_fill(-inf))
    neg_mask = jnp.where(attention_mask == 0, -1e30, 0.0).astype(jnp.float32).reshape(B, 1, S)

    out2 = pl.pallas_call(
        _encoder_kernel,
        out_shape=jax.ShapeDtypeStruct((B * S, VOCAB), jnp.float32),
        # no grid: single invocation, single TensorCore, everything resident in VMEM
    )(tok2, neg_mask,
      params["emb_table"], params["pe"], params["w_emb"], params["b_emb"],
      params["w_qkv"], params["b_qkv"], params["w_o"], params["b_o"],
      params["ln_g"], params["ln_b"], params["w1"], params["b1"],
      params["w2"], params["b2"], params["ff_g"], params["ff_b"],
      params["w_out"], params["b_out"])
    return out2.reshape(B, S, VOCAB)


encoder_transformer_forward = jax.jit(encoder_transformer_forward)


# ------------------------------- parameters / glue -----------------------------------

def generate_pe_matrix(embedding_dim, n_tokens):
    i = np.arange(embedding_dim)
    denom = np.power(10000.0, 2.0 * i / embedding_dim)
    pos = np.arange(n_tokens)
    ratio = pos[:, None] / denom[None, :]
    sin_m, cos_m = np.sin(ratio), np.cos(ratio)
    pe = np.zeros_like(ratio)
    for j in range(embedding_dim):
        pe[:, j] = sin_m[:, j // 2] if j % 2 == 0 else cos_m[:, j // 2]
    return jnp.asarray(pe, jnp.float32)


def _xavier_normal(key, fan_in, fan_out):
    std = float(np.sqrt(2.0 / (fan_in + fan_out)))
    return jax.random.normal(key, (fan_in, fan_out), jnp.float32) * std


def _uniform_bias(key, n, scale=0.05):
    return jax.random.uniform(key, (1, n), jnp.float32, -scale, scale)


def init_params(key):
    keys = iter(jax.random.split(key, 64))
    params = {}
    emb_table = jax.random.normal(next(keys), (VOCAB, EMB_DIM), jnp.float32)
    params["emb_table"] = emb_table.at[PAD_IDX].set(0.0)      # padding_idx row zeroed
    params["pe"] = generate_pe_matrix(EMB_DIM, SEQ)
    params["w_emb"] = _xavier_normal(next(keys), EMB_DIM, MODEL_DIM)
    params["b_emb"] = _uniform_bias(next(keys), MODEL_DIM)

    w_qkv, b_qkv, w_o, b_o, ln_g, ln_b = [], [], [], [], [], []
    w1, b1, w2, b2, ff_g, ff_b = [], [], [], [], [], []
    for _ in range(N_LAYERS):
        # linear_m_qk: torch weight (2*H*K, D); stored transposed (D, 2*H*K) with
        # column layout (k, n, h) exactly as in rearrange 'b s (k n h) -> h b s k n'
        wqk_raw = _xavier_normal(next(keys), MODEL_DIM, 2 * N_HEADS * K_DIM)
        bqk_raw = jax.random.uniform(next(keys), (2 * N_HEADS * K_DIM,), jnp.float32, -0.05, 0.05)
        w_r = wqk_raw.reshape(MODEL_DIM, K_DIM, 2, N_HEADS)
        b_r = bqk_raw.reshape(K_DIM, 2, N_HEADS)
        w_q = jnp.transpose(w_r[:, :, 0, :], (0, 2, 1)).reshape(MODEL_DIM, HK)   # head-major cols
        w_k = jnp.transpose(w_r[:, :, 1, :], (0, 2, 1)).reshape(MODEL_DIM, HK)
        b_q = jnp.transpose(b_r[:, 0, :], (1, 0)).reshape(1, HK)
        b_k = jnp.transpose(b_r[:, 1, :], (1, 0)).reshape(1, HK)
        # linear_m_v: column layout (v, h) -> permute to head-major
        wv_raw = _xavier_normal(next(keys), MODEL_DIM, HV)
        bv_raw = jax.random.uniform(next(keys), (HV,), jnp.float32, -0.05, 0.05)
        w_v = jnp.transpose(wv_raw.reshape(MODEL_DIM, V_DIM, N_HEADS), (0, 2, 1)).reshape(MODEL_DIM, HV)
        b_v = jnp.transpose(bv_raw.reshape(V_DIM, N_HEADS), (1, 0)).reshape(1, HV)
        # fuse q/k/v into one projection (single MXU push per layer)
        w_qkv.append(jnp.concatenate([w_q, w_k, w_v], axis=1))        # (D, 96)
        b_qkv.append(jnp.concatenate([b_q, b_k, b_v], axis=1))        # (1, 96)
        w_o.append(_xavier_normal(next(keys), HV, MODEL_DIM))
        b_o.append(_uniform_bias(next(keys), MODEL_DIM))
        ln_g.append(jnp.ones((SEQ, MODEL_DIM), jnp.float32))          # LayerNorm([S, D])
        ln_b.append(jnp.zeros((SEQ, MODEL_DIM), jnp.float32))
        w1.append(_xavier_normal(next(keys), MODEL_DIM, FF_DIM))
        b1.append(_uniform_bias(next(keys), FF_DIM))
        w2.append(_xavier_normal(next(keys), FF_DIM, MODEL_DIM))
        b2.append(_uniform_bias(next(keys), MODEL_DIM))
        ff_g.append(jnp.ones((1, MODEL_DIM), jnp.float32))            # LayerNorm([D])
        ff_b.append(jnp.zeros((1, MODEL_DIM), jnp.float32))

    for name, vals in [("w_qkv", w_qkv), ("b_qkv", b_qkv), ("w_o", w_o), ("b_o", b_o),
                       ("ln_g", ln_g), ("ln_b", ln_b), ("w1", w1), ("b1", b1),
                       ("w2", w2), ("b2", b2), ("ff_g", ff_g), ("ff_b", ff_b)]:
        params[name] = jnp.stack(vals, axis=0)                        # leading layer dim

    params["w_out"] = _xavier_normal(next(keys), MODEL_DIM, VOCAB)
    params["b_out"] = _uniform_bias(next(keys), VOCAB)
    return params


# --------------------------------- pure-JAX reference --------------------------------

def reference_forward(tokens, attention_mask, params):
    x = params["emb_table"][tokens] + params["pe"][None]
    x = x @ params["w_emb"] + params["b_emb"]
    pad = attention_mask == 0
    for l in range(N_LAYERS):
        B, S, _ = x.shape
        w = params["w_qkv"][l]
        bq = params["b_qkv"][l]
        q = (x @ w[:, :HK] + bq[:, :HK]).reshape(B, S, N_HEADS, K_DIM)
        k = (x @ w[:, HK:2 * HK] + bq[:, HK:2 * HK]).reshape(B, S, N_HEADS, K_DIM)
        v = (x @ w[:, 2 * HK:] + bq[:, 2 * HK:]).reshape(B, S, N_HEADS, V_DIM)
        scores = jnp.einsum("bihk,bjhk->bhij", q, k) / np.sqrt(K_DIM)
        scores = jnp.where(pad[:, None, None, :], -1e30, scores)
        attn = jax.nn.softmax(scores, axis=-1)
        o = jnp.einsum("bhij,bjhv->bihv", attn, v).reshape(B, S, HV)
        y = o @ params["w_o"][l] + params["b_o"][l] + x
        mu = jnp.mean(y, axis=(1, 2), keepdims=True)
        var = jnp.mean((y - mu) ** 2, axis=(1, 2), keepdims=True)
        x = (y - mu) / jnp.sqrt(var + LN_EPS) * params["ln_g"][l] + params["ln_b"][l]
        h = jnp.maximum(x @ params["w1"][l] + params["b1"][l], 0.0)
        y = h @ params["w2"][l] + params["b2"][l] + x
        mu = jnp.mean(y, axis=-1, keepdims=True)
        var = jnp.mean((y - mu) ** 2, axis=-1, keepdims=True)
        x = (y - mu) / jnp.sqrt(var + LN_EPS) * params["ff_g"][l] + params["ff_b"][l]
    return x @ params["w_out"] + params["b_out"]


# --------------------------------------- main ----------------------------------------

if __name__ == "__main__":
    key = jax.random.PRNGKey(0)
    params = init_params(key)

    tok_key = jax.random.fold_in(key, 123)
    tokens = jax.random.randint(tok_key, (BATCH, SEQ), 1, VOCAB)       # valid ids
    tokens = tokens.at[:, -2:].set(PAD_IDX)                            # padding tail
    attention_mask = jnp.ones((BATCH, SEQ), jnp.int32).at[:, -2:].set(0)

    out = encoder_transformer_forward(tokens, attention_mask, params)
    out = jax.block_until_ready(out)
    assert out.shape == (BATCH, SEQ, VOCAB)

    ref = reference_forward(tokens, attention_mask, params)
    np.testing.assert_allclose(np.asarray(out), np.asarray(ref), rtol=2e-2, atol=2e-2)
    print("KERNEL_OK")
</pallas_src>

<mosaic_0001>
module attributes {stable_mosaic.version = 11 : i64} {
  func.func @_encoder_kernel(%arg0: memref<16x1xi32, #tpu.memory_space<vmem>>, %arg1: memref<2x1x8xf32, #tpu.memory_space<vmem>>, %arg2: memref<32x16xf32, #tpu.memory_space<vmem>>, %arg3: memref<8x16xf32, #tpu.memory_space<vmem>>, %arg4: memref<16x32xf32, #tpu.memory_space<vmem>>, %arg5: memref<1x32xf32, #tpu.memory_space<vmem>>, %arg6: memref<2x32x96xf32, #tpu.memory_space<vmem>>, %arg7: memref<2x1x96xf32, #tpu.memory_space<vmem>>, %arg8: memref<2x32x32xf32, #tpu.memory_space<vmem>>, %arg9: memref<2x1x32xf32, #tpu.memory_space<vmem>>, %arg10: memref<2x8x32xf32, #tpu.memory_space<vmem>>, %arg11: memref<2x8x32xf32, #tpu.memory_space<vmem>>, %arg12: memref<2x32x64xf32, #tpu.memory_space<vmem>>, %arg13: memref<2x1x64xf32, #tpu.memory_space<vmem>>, %arg14: memref<2x64x32xf32, #tpu.memory_space<vmem>>, %arg15: memref<2x1x32xf32, #tpu.memory_space<vmem>>, %arg16: memref<2x1x32xf32, #tpu.memory_space<vmem>>, %arg17: memref<2x1x32xf32, #tpu.memory_space<vmem>>, %arg18: memref<32x32xf32, #tpu.memory_space<vmem>>, %arg19: memref<1x32xf32, #tpu.memory_space<vmem>>, %arg20: memref<16x32xf32, #tpu.memory_space<vmem>>) attributes {dimension_semantics = [], scalar_prefetch = 0 : i64, scratch_operands = 0 : i64, tpu.core_type = #tpu.core_type<tc>} {
    %c0 = arith.constant 0 : index
    %c0_0 = arith.constant 0 : index
    %0 = vector.load %arg0[%c0, %c0_0] : memref<16x1xi32, #tpu.memory_space<vmem>>, vector<16x1xi32>
    %1 = tpu.iota {dimensions = array<i32: 1>} : vector<16x32xi32>
    %2 = vector.broadcast %0 : vector<16x1xi32> to vector<16x32xi32>
    %3 = arith.cmpi eq, %2, %1 : vector<16x32xi32>
    %4 = arith.extui %3 : vector<16x32xi1> to vector<16x32xi32>
    %5 = arith.sitofp %4 : vector<16x32xi32> to vector<16x32xf32>
    %c0_1 = arith.constant 0 : index
    %c0_2 = arith.constant 0 : index
    %6 = vector.load %arg2[%c0_1, %c0_2] : memref<32x16xf32, #tpu.memory_space<vmem>>, vector<32x16xf32>
    %cst = arith.constant dense<0.000000e+00> : vector<16x16xf32>
    %7 = tpu.matmul %5, %6, %cst {dimension_numbers = #tpu.dot_dimension_numbers<[1], [0], [0], [1], [0, 0, 1, 1], [], []>} : vector<16x32xf32>, vector<32x16xf32>, vector<16x16xf32> -> vector<16x16xf32>
    %8 = vector.shape_cast %7 : vector<16x16xf32> to vector<2x8x16xf32>
    %c0_3 = arith.constant 0 : index
    %c0_4 = arith.constant 0 : index
    %9 = vector.load %arg3[%c0_3, %c0_4] : memref<8x16xf32, #tpu.memory_space<vmem>>, vector<8x16xf32>
    %10 = vector.shape_cast %9 : vector<8x16xf32> to vector<1x8x16xf32>
    %11 = vector.broadcast %10 : vector<1x8x16xf32> to vector<2x8x16xf32>
    %12 = arith.addf %8, %11 : vector<2x8x16xf32>
    %13 = vector.shape_cast %12 : vector<2x8x16xf32> to vector<16x16xf32>
    %c0_5 = arith.constant 0 : index
    %c0_6 = arith.constant 0 : index
    %14 = vector.load %arg4[%c0_5, %c0_6] : memref<16x32xf32, #tpu.memory_space<vmem>>, vector<16x32xf32>
    %cst_7 = arith.constant dense<0.000000e+00> : vector<16x32xf32>
    %15 = tpu.matmul %13, %14, %cst_7 {dimension_numbers = #tpu.dot_dimension_numbers<[1], [0], [0], [1], [0, 0, 1, 1], [], []>} : vector<16x16xf32>, vector<16x32xf32>, vector<16x32xf32> -> vector<16x32xf32>
    %c0_8 = arith.constant 0 : index
    %c0_9 = arith.constant 0 : index
    %16 = vector.load %arg5[%c0_8, %c0_9] : memref<1x32xf32, #tpu.memory_space<vmem>>, vector<1x32xf32>
    %17 = vector.broadcast %16 : vector<1x32xf32> to vector<16x32xf32>
    %18 = arith.addf %15, %17 : vector<16x32xf32>
    %c0_10 = arith.constant 0 : index
    %c0_11 = arith.constant 0 : index
    %c0_12 = arith.constant 0 : index
    %19 = vector.load %arg1[%c0_10, %c0_11, %c0_12] : memref<2x1x8xf32, #tpu.memory_space<vmem>>, vector<2x1x8xf32>
    %20 = vector.shape_cast %19 : vector<2x1x8xf32> to vector<2x1x8xf32>
    %21 = vector.broadcast %20 : vector<2x1x8xf32> to vector<2x8x8xf32>
    %c0_13 = arith.constant 0 : index
    %c0_14 = arith.constant 0 : index
    %c0_15 = arith.constant 0 : index
    %22 = vector.load %arg6[%c0_13, %c0_14, %c0_15] : memref<2x32x96xf32, #tpu.memory_space<vmem>>, vector<1x32x96xf32>
    %23 = vector.shape_cast %22 : vector<1x32x96xf32> to vector<32x96xf32>
    %cst_16 = arith.constant dense<0.000000e+00> : vector<16x96xf32>
    %24 = tpu.matmul %18, %23, %cst_16 {dimension_numbers = #tpu.dot_dimension_numbers<[1], [0], [0], [1], [0, 0, 1, 1], [], []>} : vector<16x32xf32>, vector<32x96xf32>, vector<16x96xf32> -> vector<16x96xf32>
    %c0_17 = arith.constant 0 : index
    %c0_18 = arith.constant 0 : index
    %c0_19 = arith.constant 0 : index
    %25 = vector.load %arg7[%c0_17, %c0_18, %c0_19] : memref<2x1x96xf32, #tpu.memory_space<vmem>>, vector<1x1x96xf32>
    %26 = vector.shape_cast %25 : vector<1x1x96xf32> to vector<1x96xf32>
    %27 = vector.broadcast %26 : vector<1x96xf32> to vector<16x96xf32>
    %28 = arith.addf %24, %27 : vector<16x96xf32>
    %29 = vector.shape_cast %28 : vector<16x96xf32> to vector<2x8x96xf32>
    %c0_20 = arith.constant 0 : index
    %c0_21 = arith.constant 0 : index
    %c0_22 = arith.constant 0 : index
    %30 = vector.load %arg8[%c0_20, %c0_21, %c0_22] : memref<2x32x32xf32, #tpu.memory_space<vmem>>, vector<1x32x32xf32>
    %31 = vector.shape_cast %30 : vector<1x32x32xf32> to vector<32x32xf32>
    %32 = vector.extract_strided_slice %29 {offsets = [0, 0, 0], sizes = [2, 8, 8], strides = [1, 1, 1]} : vector<2x8x96xf32> to vector<2x8x8xf32>
    %33 = vector.extract_strided_slice %29 {offsets = [0, 0, 32], sizes = [2, 8, 8], strides = [1, 1, 1]} : vector<2x8x96xf32> to vector<2x8x8xf32>
    %34 = vector.extract_strided_slice %29 {offsets = [0, 0, 64], sizes = [2, 8, 8], strides = [1, 1, 1]} : vector<2x8x96xf32> to vector<2x8x8xf32>
    "tpu.trace_start"() <{level = 10 : i32, message = "bqk,bjk->bqj"}> : () -> ()
    %cst_23 = arith.constant dense<0.000000e+00> : vector<2x8x8xf32>
    %35 = tpu.matmul %32, %33, %cst_23 {dimension_numbers = #tpu.dot_dimension_numbers<[2], [2], [1], [1], [0, 0, 0, 1, 1, 1], [0], [0]>} : vector<2x8x8xf32>, vector<2x8x8xf32>, vector<2x8x8xf32> -> vector<2x8x8xf32>
    "tpu.trace_stop"() : () -> ()
    %cst_24 = arith.constant 0.353553385 : f32
    %36 = vector.broadcast %cst_24 : f32 to vector<2x8x8xf32>
    %37 = arith.mulf %35, %36 : vector<2x8x8xf32>
    %38 = arith.addf %37, %21 : vector<2x8x8xf32>
    %cst_25 = arith.constant dense<0xFF800000> : vector<2x8xf32>
    %39 = vector.multi_reduction <maximumf>, %38, %cst_25 [2] : vector<2x8x8xf32> to vector<2x8xf32>
    %40 = vector.shape_cast %39 : vector<2x8xf32> to vector<2x8x1xf32>
    %41 = vector.broadcast %40 : vector<2x8x1xf32> to vector<2x8x8xf32>
    %42 = arith.subf %38, %41 : vector<2x8x8xf32>
    %43 = math.exp %42 : vector<2x8x8xf32>
    %cst_26 = arith.constant dense<0.000000e+00> : vector<2x8xf32>
    %44 = vector.multi_reduction <add>, %43, %cst_26 [2] : vector<2x8x8xf32> to vector<2x8xf32>
    %45 = vector.shape_cast %44 : vector<2x8xf32> to vector<2x8x1xf32>
    %46 = tpu.reciprocal %45 {approx = true} : vector<2x8x1xf32> -> vector<2x8x1xf32>
    %47 = vector.broadcast %46 : vector<2x8x1xf32> to vector<2x8x8xf32>
    %48 = arith.mulf %43, %47 : vector<2x8x8xf32>
    "tpu.trace_start"() <{level = 10 : i32, message = "bqj,bjv->bqv"}> : () -> ()
    %cst_27 = arith.constant dense<0.000000e+00> : vector<2x8x8xf32>
    %49 = tpu.matmul %48, %34, %cst_27 {dimension_numbers = #tpu.dot_dimension_numbers<[2], [1], [1], [2], [0, 0, 0, 1, 1, 2], [0], [0]>} : vector<2x8x8xf32>, vector<2x8x8xf32>, vector<2x8x8xf32> -> vector<2x8x8xf32>
    "tpu.trace_stop"() : () -> ()
    %50 = vector.extract_strided_slice %31 {offsets = [0, 0], sizes = [8, 32], strides = [1, 1]} : vector<32x32xf32> to vector<8x32xf32>
    "tpu.trace_start"() <{level = 10 : i32, message = "bqv,vd->bqd"}> : () -> ()
    %cst_28 = arith.constant dense<0.000000e+00> : vector<2x8x32xf32>
    %51 = tpu.matmul %49, %50, %cst_28 {dimension_numbers = #tpu.dot_dimension_numbers<[2], [0], [0, 1], [1], [0, 0, 0, 1, 1, 1], [], []>} : vector<2x8x8xf32>, vector<8x32xf32>, vector<2x8x32xf32> -> vector<2x8x32xf32>
    "tpu.trace_stop"() : () -> ()
    %52 = vector.extract_strided_slice %29 {offsets = [0, 0, 8], sizes = [2, 8, 8], strides = [1, 1, 1]} : vector<2x8x96xf32> to vector<2x8x8xf32>
    %53 = vector.extract_strided_slice %29 {offsets = [0, 0, 40], sizes = [2, 8, 8], strides = [1, 1, 1]} : vector<2x8x96xf32> to vector<2x8x8xf32>
    %54 = vector.extract_strided_slice %29 {offsets = [0, 0, 72], sizes = [2, 8, 8], strides = [1, 1, 1]} : vector<2x8x96xf32> to vector<2x8x8xf32>
    "tpu.trace_start"() <{level = 10 : i32, message = "bqk,bjk->bqj"}> : () -> ()
    %cst_29 = arith.constant dense<0.000000e+00> : vector<2x8x8xf32>
    %55 = tpu.matmul %52, %53, %cst_29 {dimension_numbers = #tpu.dot_dimension_numbers<[2], [2], [1], [1], [0, 0, 0, 1, 1, 1], [0], [0]>} : vector<2x8x8xf32>, vector<2x8x8xf32>, vector<2x8x8xf32> -> vector<2x8x8xf32>
    "tpu.trace_stop"() : () -> ()
    %cst_30 = arith.constant 0.353553385 : f32
    %56 = vector.broadcast %cst_30 : f32 to vector<2x8x8xf32>
    %57 = arith.mulf %55, %56 : vector<2x8x8xf32>
    %58 = arith.addf %57, %21 : vector<2x8x8xf32>
    %cst_31 = arith.constant dense<0xFF800000> : vector<2x8xf32>
    %59 = vector.multi_reduction <maximumf>, %58, %cst_31 [2] : vector<2x8x8xf32> to vector<2x8xf32>
    %60 = vector.shape_cast %59 : vector<2x8xf32> to vector<2x8x1xf32>
    %61 = vector.broadcast %60 : vector<2x8x1xf32> to vector<2x8x8xf32>
    %62 = arith.subf %58, %61 : vector<2x8x8xf32>
    %63 = math.exp %62 : vector<2x8x8xf32>
    %cst_32 = arith.constant dense<0.000000e+00> : vector<2x8xf32>
    %64 = vector.multi_reduction <add>, %63, %cst_32 [2] : vector<2x8x8xf32> to vector<2x8xf32>
    %65 = vector.shape_cast %64 : vector<2x8xf32> to vector<2x8x1xf32>
    %66 = tpu.reciprocal %65 {approx = true} : vector<2x8x1xf32> -> vector<2x8x1xf32>
    %67 = vector.broadcast %66 : vector<2x8x1xf32> to vector<2x8x8xf32>
    %68 = arith.mulf %63, %67 : vector<2x8x8xf32>
    "tpu.trace_start"() <{level = 10 : i32, message = "bqj,bjv->bqv"}> : () -> ()
    %cst_33 = arith.constant dense<0.000000e+00> : vector<2x8x8xf32>
    %69 = tpu.matmul %68, %54, %cst_33 {dimension_numbers = #tpu.dot_dimension_numbers<[2], [1], [1], [2], [0, 0, 0, 1, 1, 2], [0], [0]>} : vector<2x8x8xf32>, vector<2x8x8xf32>, vector<2x8x8xf32> -> vector<2x8x8xf32>
    "tpu.trace_stop"() : () -> ()
    %70 = vector.extract_strided_slice %31 {offsets = [8, 0], sizes = [8, 32], strides = [1, 1]} : vector<32x32xf32> to vector<8x32xf32>
    "tpu.trace_start"() <{level = 10 : i32, message = "bqv,vd->bqd"}> : () -> ()
    %cst_34 = arith.constant dense<0.000000e+00> : vector<2x8x32xf32>
    %71 = tpu.matmul %69, %70, %cst_34 {dimension_numbers = #tpu.dot_dimension_numbers<[2], [0], [0, 1], [1], [0, 0, 0, 1, 1, 1], [], []>} : vector<2x8x8xf32>, vector<8x32xf32>, vector<2x8x32xf32> -> vector<2x8x32xf32>
    "tpu.trace_stop"() : () -> ()
    %72 = arith.addf %51, %71 : vector<2x8x32xf32>
    %73 = vector.extract_strided_slice %29 {offsets = [0, 0, 16], sizes = [2, 8, 8], strides = [1, 1, 1]} : vector<2x8x96xf32> to vector<2x8x8xf32>
    %74 = vector.extract_strided_slice %29 {offsets = [0, 0, 48], sizes = [2, 8, 8], strides = [1, 1, 1]} : vector<2x8x96xf32> to vector<2x8x8xf32>
    %75 = vector.extract_strided_slice %29 {offsets = [0, 0, 80], sizes = [2, 8, 8], strides = [1, 1, 1]} : vector<2x8x96xf32> to vector<2x8x8xf32>
    "tpu.trace_start"() <{level = 10 : i32, message = "bqk,bjk->bqj"}> : () -> ()
    %cst_35 = arith.constant dense<0.000000e+00> : vector<2x8x8xf32>
    %76 = tpu.matmul %73, %74, %cst_35 {dimension_numbers = #tpu.dot_dimension_numbers<[2], [2], [1], [1], [0, 0, 0, 1, 1, 1], [0], [0]>} : vector<2x8x8xf32>, vector<2x8x8xf32>, vector<2x8x8xf32> -> vector<2x8x8xf32>
    "tpu.trace_stop"() : () -> ()
    %cst_36 = arith.constant 0.353553385 : f32
    %77 = vector.broadcast %cst_36 : f32 to vector<2x8x8xf32>
    %78 = arith.mulf %76, %77 : vector<2x8x8xf32>
    %79 = arith.addf %78, %21 : vector<2x8x8xf32>
    %cst_37 = arith.constant dense<0xFF800000> : vector<2x8xf32>
    %80 = vector.multi_reduction <maximumf>, %79, %cst_37 [2] : vector<2x8x8xf32> to vector<2x8xf32>
    %81 = vector.shape_cast %80 : vector<2x8xf32> to vector<2x8x1xf32>
    %82 = vector.broadcast %81 : vector<2x8x1xf32> to vector<2x8x8xf32>
    %83 = arith.subf %79, %82 : vector<2x8x8xf32>
    %84 = math.exp %83 : vector<2x8x8xf32>
    %cst_38 = arith.constant dense<0.000000e+00> : vector<2x8xf32>
    %85 = vector.multi_reduction <add>, %84, %cst_38 [2] : vector<2x8x8xf32> to vector<2x8xf32>
    %86 = vector.shape_cast %85 : vector<2x8xf32> to vector<2x8x1xf32>
    %87 = tpu.reciprocal %86 {approx = true} : vector<2x8x1xf32> -> vector<2x8x1xf32>
    %88 = vector.broadcast %87 : vector<2x8x1xf32> to vector<2x8x8xf32>
    %89 = arith.mulf %84, %88 : vector<2x8x8xf32>
    "tpu.trace_start"() <{level = 10 : i32, message = "bqj,bjv->bqv"}> : () -> ()
    %cst_39 = arith.constant dense<0.000000e+00> : vector<2x8x8xf32>
    %90 = tpu.matmul %89, %75, %cst_39 {dimension_numbers = #tpu.dot_dimension_numbers<[2], [1], [1], [2], [0, 0, 0, 1, 1, 2], [0], [0]>} : vector<2x8x8xf32>, vector<2x8x8xf32>, vector<2x8x8xf32> -> vector<2x8x8xf32>
    "tpu.trace_stop"() : () -> ()
    %91 = vector.extract_strided_slice %31 {offsets = [16, 0], sizes = [8, 32], strides = [1, 1]} : vector<32x32xf32> to vector<8x32xf32>
    "tpu.trace_start"() <{level = 10 : i32, message = "bqv,vd->bqd"}> : () -> ()
    %cst_40 = arith.constant dense<0.000000e+00> : vector<2x8x32xf32>
    %92 = tpu.matmul %90, %91, %cst_40 {dimension_numbers = #tpu.dot_dimension_numbers<[2], [0], [0, 1], [1], [0, 0, 0, 1, 1, 1], [], []>} : vector<2x8x8xf32>, vector<8x32xf32>, vector<2x8x32xf32> -> vector<2x8x32xf32>
    "tpu.trace_stop"() : () -> ()
    %93 = arith.addf %72, %92 : vector<2x8x32xf32>
    %94 = vector.extract_strided_slice %29 {offsets = [0, 0, 24], sizes = [2, 8, 8], strides = [1, 1, 1]} : vector<2x8x96xf32> to vector<2x8x8xf32>
    %95 = vector.extract_strided_slice %29 {offsets = [0, 0, 56], sizes = [2, 8, 8], strides = [1, 1, 1]} : vector<2x8x96xf32> to vector<2x8x8xf32>
    %96 = vector.extract_strided_slice %29 {offsets = [0, 0, 88], sizes = [2, 8, 8], strides = [1, 1, 1]} : vector<2x8x96xf32> to vector<2x8x8xf32>
    "tpu.trace_start"() <{level = 10 : i32, message = "bqk,bjk->bqj"}> : () -> ()
    %cst_41 = arith.constant dense<0.000000e+00> : vector<2x8x8xf32>
    %97 = tpu.matmul %94, %95, %cst_41 {dimension_numbers = #tpu.dot_dimension_numbers<[2], [2], [1], [1], [0, 0, 0, 1, 1, 1], [0], [0]>} : vector<2x8x8xf32>, vector<2x8x8xf32>, vector<2x8x8xf32> -> vector<2x8x8xf32>
    "tpu.trace_stop"() : () -> ()
    %cst_42 = arith.constant 0.353553385 : f32
    %98 = vector.broadcast %cst_42 : f32 to vector<2x8x8xf32>
    %99 = arith.mulf %97, %98 : vector<2x8x8xf32>
    %100 = arith.addf %99, %21 : vector<2x8x8xf32>
    %cst_43 = arith.constant dense<0xFF800000> : vector<2x8xf32>
    %101 = vector.multi_reduction <maximumf>, %100, %cst_43 [2] : vector<2x8x8xf32> to vector<2x8xf32>
    %102 = vector.shape_cast %101 : vector<2x8xf32> to vector<2x8x1xf32>
    %103 = vector.broadcast %102 : vector<2x8x1xf32> to vector<2x8x8xf32>
    %104 = arith.subf %100, %103 : vector<2x8x8xf32>
    %105 = math.exp %104 : vector<2x8x8xf32>
    %cst_44 = arith.constant dense<0.000000e+00> : vector<2x8xf32>
    %106 = vector.multi_reduction <add>, %105, %cst_44 [2] : vector<2x8x8xf32> to vector<2x8xf32>
    %107 = vector.shape_cast %106 : vector<2x8xf32> to vector<2x8x1xf32>
    %108 = tpu.reciprocal %107 {approx = true} : vector<2x8x1xf32> -> vector<2x8x1xf32>
    %109 = vector.broadcast %108 : vector<2x8x1xf32> to vector<2x8x8xf32>
    %110 = arith.mulf %105, %109 : vector<2x8x8xf32>
    "tpu.trace_start"() <{level = 10 : i32, message = "bqj,bjv->bqv"}> : () -> ()
    %cst_45 = arith.constant dense<0.000000e+00> : vector<2x8x8xf32>
    %111 = tpu.matmul %110, %96, %cst_45 {dimension_numbers = #tpu.dot_dimension_numbers<[2], [1], [1], [2], [0, 0, 0, 1, 1, 2], [0], [0]>} : vector<2x8x8xf32>, vector<2x8x8xf32>, vector<2x8x8xf32> -> vector<2x8x8xf32>
    "tpu.trace_stop"() : () -> ()
    %112 = vector.extract_strided_slice %31 {offsets = [24, 0], sizes = [8, 32], strides = [1, 1]} : vector<32x32xf32> to vector<8x32xf32>
    "tpu.trace_start"() <{level = 10 : i32, message = "bqv,vd->bqd"}> : () -> ()
    %cst_46 = arith.constant dense<0.000000e+00> : vector<2x8x32xf32>
    %113 = tpu.matmul %111, %112, %cst_46 {dimension_numbers = #tpu.dot_dimension_numbers<[2], [0], [0, 1], [1], [0, 0, 0, 1, 1, 1], [], []>} : vector<2x8x8xf32>, vector<8x32xf32>, vector<2x8x32xf32> -> vector<2x8x32xf32>
    "tpu.trace_stop"() : () -> ()
    %114 = arith.addf %93, %113 : vector<2x8x32xf32>
    %c0_47 = arith.constant 0 : index
    %c0_48 = arith.constant 0 : index
    %c0_49 = arith.constant 0 : index
    %115 = vector.load %arg9[%c0_47, %c0_48, %c0_49] : memref<2x1x32xf32, #tpu.memory_space<vmem>>, vector<1x1x32xf32>
    %116 = vector.shape_cast %115 : vector<1x1x32xf32> to vector<1x32xf32>
    %117 = vector.shape_cast %116 : vector<1x32xf32> to vector<1x1x32xf32>
    %118 = vector.broadcast %117 : vector<1x1x32xf32> to vector<2x8x32xf32>
    %119 = arith.addf %114, %118 : vector<2x8x32xf32>
    %120 = vector.shape_cast %18 : vector<16x32xf32> to vector<2x8x32xf32>
    %121 = arith.addf %119, %120 : vector<2x8x32xf32>
    %cst_50 = arith.constant dense<0.000000e+00> : vector<2x8xf32>
    %122 = vector.multi_reduction <add>, %121, %cst_50 [2] : vector<2x8x32xf32> to vector<2x8xf32>
    %123 = vector.shape_cast %122 : vector<2x8xf32> to vector<2x8x1xf32>
    %cst_51 = arith.constant dense<0.000000e+00> : vector<2x1xf32>
    %124 = vector.multi_reduction <add>, %123, %cst_51 [1] : vector<2x8x1xf32> to vector<2x1xf32>
    %125 = vector.shape_cast %124 : vector<2x1xf32> to vector<2x1x1xf32>
    %cst_52 = arith.constant 3.906250e-03 : f32
    %126 = vector.broadcast %cst_52 : f32 to vector<2x1x1xf32>
    %127 = arith.mulf %125, %126 : vector<2x1x1xf32>
    %128 = vector.broadcast %127 : vector<2x1x1xf32> to vector<2x8x32xf32>
    %129 = arith.subf %121, %128 : vector<2x8x32xf32>
    %130 = arith.mulf %129, %129 : vector<2x8x32xf32>
    %cst_53 = arith.constant dense<0.000000e+00> : vector<2x8xf32>
    %131 = vector.multi_reduction <add>, %130, %cst_53 [2] : vector<2x8x32xf32> to vector<2x8xf32>
    %132 = vector.shape_cast %131 : vector<2x8xf32> to vector<2x8x1xf32>
    %cst_54 = arith.constant dense<0.000000e+00> : vector<2x1xf32>
    %133 = vector.multi_reduction <add>, %132, %cst_54 [1] : vector<2x8x1xf32> to vector<2x1xf32>
    %134 = vector.shape_cast %133 : vector<2x1xf32> to vector<2x1x1xf32>
    %cst_55 = arith.constant 3.906250e-03 : f32
    %135 = vector.broadcast %cst_55 : f32 to vector<2x1x1xf32>
    %136 = arith.mulf %134, %135 : vector<2x1x1xf32>
    %cst_56 = arith.constant 9.99999974E-6 : f32
    %137 = vector.broadcast %cst_56 : f32 to vector<2x1x1xf32>
    %138 = arith.addf %136, %137 : vector<2x1x1xf32>
    %139 = math.rsqrt %138 : vector<2x1x1xf32>
    %140 = vector.broadcast %139 : vector<2x1x1xf32> to vector<2x8x32xf32>
    %141 = arith.mulf %129, %140 : vector<2x8x32xf32>
    %c0_57 = arith.constant 0 : index
    %c0_58 = arith.constant 0 : index
    %c0_59 = arith.constant 0 : index
    %142 = vector.load %arg10[%c0_57, %c0_58, %c0_59] : memref<2x8x32xf32, #tpu.memory_space<vmem>>, vector<1x8x32xf32>
    %143 = vector.shape_cast %142 : vector<1x8x32xf32> to vector<8x32xf32>
    %144 = vector.shape_cast %143 : vector<8x32xf32> to vector<1x8x32xf32>
    %145 = vector.broadcast %144 : vector<1x8x32xf32> to vector<2x8x32xf32>
    %146 = arith.mulf %141, %145 : vector<2x8x32xf32>
    %c0_60 = arith.constant 0 : index
    %c0_61 = arith.constant 0 : index
    %c0_62 = arith.constant 0 : index
    %147 = vector.load %arg11[%c0_60, %c0_61, %c0_62] : memref<2x8x32xf32, #tpu.memory_space<vmem>>, vector<1x8x32xf32>
    %148 = vector.shape_cast %147 : vector<1x8x32xf32> to vector<8x32xf32>
    %149 = vector.shape_cast %148 : vector<8x32xf32> to vector<1x8x32xf32>
    %150 = vector.broadcast %149 : vector<1x8x32xf32> to vector<2x8x32xf32>
    %151 = arith.addf %146, %150 : vector<2x8x32xf32>
    %152 = vector.shape_cast %151 : vector<2x8x32xf32> to vector<16x32xf32>
    %c0_63 = arith.constant 0 : index
    %c0_64 = arith.constant 0 : index
    %c0_65 = arith.constant 0 : index
    %153 = vector.load %arg12[%c0_63, %c0_64, %c0_65] : memref<2x32x64xf32, #tpu.memory_space<vmem>>, vector<1x32x64xf32>
    %154 = vector.shape_cast %153 : vector<1x32x64xf32> to vector<32x64xf32>
    %cst_66 = arith.constant dense<0.000000e+00> : vector<16x64xf32>
    %155 = tpu.matmul %152, %154, %cst_66 {dimension_numbers = #tpu.dot_dimension_numbers<[1], [0], [0], [1], [0, 0, 1, 1], [], []>} : vector<16x32xf32>, vector<32x64xf32>, vector<16x64xf32> -> vector<16x64xf32>
    %c0_67 = arith.constant 0 : index
    %c0_68 = arith.constant 0 : index
    %c0_69 = arith.constant 0 : index
    %156 = vector.load %arg13[%c0_67, %c0_68, %c0_69] : memref<2x1x64xf32, #tpu.memory_space<vmem>>, vector<1x1x64xf32>
    %157 = vector.shape_cast %156 : vector<1x1x64xf32> to vector<1x64xf32>
    %158 = vector.broadcast %157 : vector<1x64xf32> to vector<16x64xf32>
    %159 = arith.addf %155, %158 : vector<16x64xf32>
    %cst_70 = arith.constant 0.000000e+00 : f32
    %160 = vector.broadcast %cst_70 : f32 to vector<16x64xf32>
    %161 = arith.maximumf %159, %160 : vector<16x64xf32>
    %c0_71 = arith.constant 0 : index
    %c0_72 = arith.constant 0 : index
    %c0_73 = arith.constant 0 : index
    %162 = vector.load %arg14[%c0_71, %c0_72, %c0_73] : memref<2x64x32xf32, #tpu.memory_space<vmem>>, vector<1x64x32xf32>
    %163 = vector.shape_cast %162 : vector<1x64x32xf32> to vector<64x32xf32>
    %cst_74 = arith.constant dense<0.000000e+00> : vector<16x32xf32>
    %164 = tpu.matmul %161, %163, %cst_74 {dimension_numbers = #tpu.dot_dimension_numbers<[1], [0], [0], [1], [0, 0, 1, 1], [], []>} : vector<16x64xf32>, vector<64x32xf32>, vector<16x32xf32> -> vector<16x32xf32>
    %c0_75 = arith.constant 0 : index
    %c0_76 = arith.constant 0 : index
    %c0_77 = arith.constant 0 : index
    %165 = vector.load %arg15[%c0_75, %c0_76, %c0_77] : memref<2x1x32xf32, #tpu.memory_space<vmem>>, vector<1x1x32xf32>
    %166 = vector.shape_cast %165 : vector<1x1x32xf32> to vector<1x32xf32>
    %167 = vector.broadcast %166 : vector<1x32xf32> to vector<16x32xf32>
    %168 = arith.addf %164, %167 : vector<16x32xf32>
    %169 = arith.addf %168, %152 : vector<16x32xf32>
    %cst_78 = arith.constant dense<0.000000e+00> : vector<16xf32>
    %170 = vector.multi_reduction <add>, %169, %cst_78 [1] : vector<16x32xf32> to vector<16xf32>
    %171 = vector.shape_cast %170 : vector<16xf32> to vector<16x1xf32>
    %cst_79 = arith.constant 3.200000e+01 : f32
    %172 = vector.broadcast %cst_79 : f32 to vector<16x1xf32>
    %173 = arith.divf %171, %172 : vector<16x1xf32>
    %174 = vector.broadcast %173 : vector<16x1xf32> to vector<16x32xf32>
    %175 = arith.subf %169, %174 : vector<16x32xf32>
    %176 = arith.mulf %175, %175 : vector<16x32xf32>
    %cst_80 = arith.constant dense<0.000000e+00> : vector<16xf32>
    %177 = vector.multi_reduction <add>, %176, %cst_80 [1] : vector<16x32xf32> to vector<16xf32>
    %178 = vector.shape_cast %177 : vector<16xf32> to vector<16x1xf32>
    %cst_81 = arith.constant 3.200000e+01 : f32
    %179 = vector.broadcast %cst_81 : f32 to vector<16x1xf32>
    %180 = arith.divf %178, %179 : vector<16x1xf32>
    %cst_82 = arith.constant 9.99999974E-6 : f32
    %181 = vector.broadcast %cst_82 : f32 to vector<16x1xf32>
    %182 = arith.addf %180, %181 : vector<16x1xf32>
    %183 = math.rsqrt %182 : vector<16x1xf32>
    %184 = vector.broadcast %183 : vector<16x1xf32> to vector<16x32xf32>
    %185 = arith.mulf %175, %184 : vector<16x32xf32>
    %c0_83 = arith.constant 0 : index
    %c0_84 = arith.constant 0 : index
    %c0_85 = arith.constant 0 : index
    %186 = vector.load %arg16[%c0_83, %c0_84, %c0_85] : memref<2x1x32xf32, #tpu.memory_space<vmem>>, vector<1x1x32xf32>
    %187 = vector.shape_cast %186 : vector<1x1x32xf32> to vector<1x32xf32>
    %188 = vector.broadcast %187 : vector<1x32xf32> to vector<16x32xf32>
    %189 = arith.mulf %185, %188 : vector<16x32xf32>
    %c0_86 = arith.constant 0 : index
    %c0_87 = arith.constant 0 : index
    %c0_88 = arith.constant 0 : index
    %190 = vector.load %arg17[%c0_86, %c0_87, %c0_88] : memref<2x1x32xf32, #tpu.memory_space<vmem>>, vector<1x1x32xf32>
    %191 = vector.shape_cast %190 : vector<1x1x32xf32> to vector<1x32xf32>
    %192 = vector.broadcast %191 : vector<1x32xf32> to vector<16x32xf32>
    %193 = arith.addf %189, %192 : vector<16x32xf32>
    %c1 = arith.constant 1 : index
    %c0_89 = arith.constant 0 : index
    %c0_90 = arith.constant 0 : index
    %194 = vector.load %arg6[%c1, %c0_89, %c0_90] : memref<2x32x96xf32, #tpu.memory_space<vmem>>, vector<1x32x96xf32>
    %195 = vector.shape_cast %194 : vector<1x32x96xf32> to vector<32x96xf32>
    %cst_91 = arith.constant dense<0.000000e+00> : vector<16x96xf32>
    %196 = tpu.matmul %193, %195, %cst_91 {dimension_numbers = #tpu.dot_dimension_numbers<[1], [0], [0], [1], [0, 0, 1, 1], [], []>} : vector<16x32xf32>, vector<32x96xf32>, vector<16x96xf32> -> vector<16x96xf32>
    %c1_92 = arith.constant 1 : index
    %c0_93 = arith.constant 0 : index
    %c0_94 = arith.constant 0 : index
    %197 = vector.load %arg7[%c1_92, %c0_93, %c0_94] : memref<2x1x96xf32, #tpu.memory_space<vmem>>, vector<1x1x96xf32>
    %198 = vector.shape_cast %197 : vector<1x1x96xf32> to vector<1x96xf32>
    %199 = vector.broadcast %198 : vector<1x96xf32> to vector<16x96xf32>
    %200 = arith.addf %196, %199 : vector<16x96xf32>
    %201 = vector.shape_cast %200 : vector<16x96xf32> to vector<2x8x96xf32>
    %c1_95 = arith.constant 1 : index
    %c0_96 = arith.constant 0 : index
    %c0_97 = arith.constant 0 : index
    %202 = vector.load %arg8[%c1_95, %c0_96, %c0_97] : memref<2x32x32xf32, #tpu.memory_space<vmem>>, vector<1x32x32xf32>
    %203 = vector.shape_cast %202 : vector<1x32x32xf32> to vector<32x32xf32>
    %204 = vector.extract_strided_slice %201 {offsets = [0, 0, 0], sizes = [2, 8, 8], strides = [1, 1, 1]} : vector<2x8x96xf32> to vector<2x8x8xf32>
    %205 = vector.extract_strided_slice %201 {offsets = [0, 0, 32], sizes = [2, 8, 8], strides = [1, 1, 1]} : vector<2x8x96xf32> to vector<2x8x8xf32>
    %206 = vector.extract_strided_slice %201 {offsets = [0, 0, 64], sizes = [2, 8, 8], strides = [1, 1, 1]} : vector<2x8x96xf32> to vector<2x8x8xf32>
    "tpu.trace_start"() <{level = 10 : i32, message = "bqk,bjk->bqj"}> : () -> ()
    %cst_98 = arith.constant dense<0.000000e+00> : vector<2x8x8xf32>
    %207 = tpu.matmul %204, %205, %cst_98 {dimension_numbers = #tpu.dot_dimension_numbers<[2], [2], [1], [1], [0, 0, 0, 1, 1, 1], [0], [0]>} : vector<2x8x8xf32>, vector<2x8x8xf32>, vector<2x8x8xf32> -> vector<2x8x8xf32>
    "tpu.trace_stop"() : () -> ()
    %cst_99 = arith.constant 0.353553385 : f32
    %208 = vector.broadcast %cst_99 : f32 to vector<2x8x8xf32>
    %209 = arith.mulf %207, %208 : vector<2x8x8xf32>
    %210 = arith.addf %209, %21 : vector<2x8x8xf32>
    %cst_100 = arith.constant dense<0xFF800000> : vector<2x8xf32>
    %211 = vector.multi_reduction <maximumf>, %210, %cst_100 [2] : vector<2x8x8xf32> to vector<2x8xf32>
    %212 = vector.shape_cast %211 : vector<2x8xf32> to vector<2x8x1xf32>
    %213 = vector.broadcast %212 : vector<2x8x1xf32> to vector<2x8x8xf32>
    %214 = arith.subf %210, %213 : vector<2x8x8xf32>
    %215 = math.exp %214 : vector<2x8x8xf32>
    %cst_101 = arith.constant dense<0.000000e+00> : vector<2x8xf32>
    %216 = vector.multi_reduction <add>, %215, %cst_101 [2] : vector<2x8x8xf32> to vector<2x8xf32>
    %217 = vector.shape_cast %216 : vector<2x8xf32> to vector<2x8x1xf32>
    %218 = tpu.reciprocal %217 {approx = true} : vector<2x8x1xf32> -> vector<2x8x1xf32>
    %219 = vector.broadcast %218 : vector<2x8x1xf32> to vector<2x8x8xf32>
    %220 = arith.mulf %215, %219 : vector<2x8x8xf32>
    "tpu.trace_start"() <{level = 10 : i32, message = "bqj,bjv->bqv"}> : () -> ()
    %cst_102 = arith.constant dense<0.000000e+00> : vector<2x8x8xf32>
    %221 = tpu.matmul %220, %206, %cst_102 {dimension_numbers = #tpu.dot_dimension_numbers<[2], [1], [1], [2], [0, 0, 0, 1, 1, 2], [0], [0]>} : vector<2x8x8xf32>, vector<2x8x8xf32>, vector<2x8x8xf32> -> vector<2x8x8xf32>
    "tpu.trace_stop"() : () -> ()
    %222 = vector.extract_strided_slice %203 {offsets = [0, 0], sizes = [8, 32], strides = [1, 1]} : vector<32x32xf32> to vector<8x32xf32>
    "tpu.trace_start"() <{level = 10 : i32, message = "bqv,vd->bqd"}> : () -> ()
    %cst_103 = arith.constant dense<0.000000e+00> : vector<2x8x32xf32>
    %223 = tpu.matmul %221, %222, %cst_103 {dimension_numbers = #tpu.dot_dimension_numbers<[2], [0], [0, 1], [1], [0, 0, 0, 1, 1, 1], [], []>} : vector<2x8x8xf32>, vector<8x32xf32>, vector<2x8x32xf32> -> vector<2x8x32xf32>
    "tpu.trace_stop"() : () -> ()
    %224 = vector.extract_strided_slice %201 {offsets = [0, 0, 8], sizes = [2, 8, 8], strides = [1, 1, 1]} : vector<2x8x96xf32> to vector<2x8x8xf32>
    %225 = vector.extract_strided_slice %201 {offsets = [0, 0, 40], sizes = [2, 8, 8], strides = [1, 1, 1]} : vector<2x8x96xf32> to vector<2x8x8xf32>
    %226 = vector.extract_strided_slice %201 {offsets = [0, 0, 72], sizes = [2, 8, 8], strides = [1, 1, 1]} : vector<2x8x96xf32> to vector<2x8x8xf32>
    "tpu.trace_start"() <{level = 10 : i32, message = "bqk,bjk->bqj"}> : () -> ()
    %cst_104 = arith.constant dense<0.000000e+00> : vector<2x8x8xf32>
    %227 = tpu.matmul %224, %225, %cst_104 {dimension_numbers = #tpu.dot_dimension_numbers<[2], [2], [1], [1], [0, 0, 0, 1, 1, 1], [0], [0]>} : vector<2x8x8xf32>, vector<2x8x8xf32>, vector<2x8x8xf32> -> vector<2x8x8xf32>
    "tpu.trace_stop"() : () -> ()
    %cst_105 = arith.constant 0.353553385 : f32
    %228 = vector.broadcast %cst_105 : f32 to vector<2x8x8xf32>
    %229 = arith.mulf %227, %228 : vector<2x8x8xf32>
    %230 = arith.addf %229, %21 : vector<2x8x8xf32>
    %cst_106 = arith.constant dense<0xFF800000> : vector<2x8xf32>
    %231 = vector.multi_reduction <maximumf>, %230, %cst_106 [2] : vector<2x8x8xf32> to vector<2x8xf32>
    %232 = vector.shape_cast %231 : vector<2x8xf32> to vector<2x8x1xf32>
    %233 = vector.broadcast %232 : vector<2x8x1xf32> to vector<2x8x8xf32>
    %234 = arith.subf %230, %233 : vector<2x8x8xf32>
    %235 = math.exp %234 : vector<2x8x8xf32>
    %cst_107 = arith.constant dense<0.000000e+00> : vector<2x8xf32>
    %236 = vector.multi_reduction <add>, %235, %cst_107 [2] : vector<2x8x8xf32> to vector<2x8xf32>
    %237 = vector.shape_cast %236 : vector<2x8xf32> to vector<2x8x1xf32>
    %238 = tpu.reciprocal %237 {approx = true} : vector<2x8x1xf32> -> vector<2x8x1xf32>
    %239 = vector.broadcast %238 : vector<2x8x1xf32> to vector<2x8x8xf32>
    %240 = arith.mulf %235, %239 : vector<2x8x8xf32>
    "tpu.trace_start"() <{level = 10 : i32, message = "bqj,bjv->bqv"}> : () -> ()
    %cst_108 = arith.constant dense<0.000000e+00> : vector<2x8x8xf32>
    %241 = tpu.matmul %240, %226, %cst_108 {dimension_numbers = #tpu.dot_dimension_numbers<[2], [1], [1], [2], [0, 0, 0, 1, 1, 2], [0], [0]>} : vector<2x8x8xf32>, vector<2x8x8xf32>, vector<2x8x8xf32> -> vector<2x8x8xf32>
    "tpu.trace_stop"() : () -> ()
    %242 = vector.extract_strided_slice %203 {offsets = [8, 0], sizes = [8, 32], strides = [1, 1]} : vector<32x32xf32> to vector<8x32xf32>
    "tpu.trace_start"() <{level = 10 : i32, message = "bqv,vd->bqd"}> : () -> ()
    %cst_109 = arith.constant dense<0.000000e+00> : vector<2x8x32xf32>
    %243 = tpu.matmul %241, %242, %cst_109 {dimension_numbers = #tpu.dot_dimension_numbers<[2], [0], [0, 1], [1], [0, 0, 0, 1, 1, 1], [], []>} : vector<2x8x8xf32>, vector<8x32xf32>, vector<2x8x32xf32> -> vector<2x8x32xf32>
    "tpu.trace_stop"() : () -> ()
    %244 = arith.addf %223, %243 : vector<2x8x32xf32>
    %245 = vector.extract_strided_slice %201 {offsets = [0, 0, 16], sizes = [2, 8, 8], strides = [1, 1, 1]} : vector<2x8x96xf32> to vector<2x8x8xf32>
    %246 = vector.extract_strided_slice %201 {offsets = [0, 0, 48], sizes = [2, 8, 8], strides = [1, 1, 1]} : vector<2x8x96xf32> to vector<2x8x8xf32>
    %247 = vector.extract_strided_slice %201 {offsets = [0, 0, 80], sizes = [2, 8, 8], strides = [1, 1, 1]} : vector<2x8x96xf32> to vector<2x8x8xf32>
    "tpu.trace_start"() <{level = 10 : i32, message = "bqk,bjk->bqj"}> : () -> ()
    %cst_110 = arith.constant dense<0.000000e+00> : vector<2x8x8xf32>
    %248 = tpu.matmul %245, %246, %cst_110 {dimension_numbers = #tpu.dot_dimension_numbers<[2], [2], [1], [1], [0, 0, 0, 1, 1, 1], [0], [0]>} : vector<2x8x8xf32>, vector<2x8x8xf32>, vector<2x8x8xf32> -> vector<2x8x8xf32>
    "tpu.trace_stop"() : () -> ()
    %cst_111 = arith.constant 0.353553385 : f32
    %249 = vector.broadcast %cst_111 : f32 to vector<2x8x8xf32>
    %250 = arith.mulf %248, %249 : vector<2x8x8xf32>
    %251 = arith.addf %250, %21 : vector<2x8x8xf32>
    %cst_112 = arith.constant dense<0xFF800000> : vector<2x8xf32>
    %252 = vector.multi_reduction <maximumf>, %251, %cst_112 [2] : vector<2x8x8xf32> to vector<2x8xf32>
    %253 = vector.shape_cast %252 : vector<2x8xf32> to vector<2x8x1xf32>
    %254 = vector.broadcast %253 : vector<2x8x1xf32> to vector<2x8x8xf32>
    %255 = arith.subf %251, %254 : vector<2x8x8xf32>
    %256 = math.exp %255 : vector<2x8x8xf32>
    %cst_113 = arith.constant dense<0.000000e+00> : vector<2x8xf32>
    %257 = vector.multi_reduction <add>, %256, %cst_113 [2] : vector<2x8x8xf32> to vector<2x8xf32>
    %258 = vector.shape_cast %257 : vector<2x8xf32> to vector<2x8x1xf32>
    %259 = tpu.reciprocal %258 {approx = true} : vector<2x8x1xf32> -> vector<2x8x1xf32>
    %260 = vector.broadcast %259 : vector<2x8x1xf32> to vector<2x8x8xf32>
    %261 = arith.mulf %256, %260 : vector<2x8x8xf32>
    "tpu.trace_start"() <{level = 10 : i32, message = "bqj,bjv->bqv"}> : () -> ()
    %cst_114 = arith.constant dense<0.000000e+00> : vector<2x8x8xf32>
    %262 = tpu.matmul %261, %247, %cst_114 {dimension_numbers = #tpu.dot_dimension_numbers<[2], [1], [1], [2], [0, 0, 0, 1, 1, 2], [0], [0]>} : vector<2x8x8xf32>, vector<2x8x8xf32>, vector<2x8x8xf32> -> vector<2x8x8xf32>
    "tpu.trace_stop"() : () -> ()
    %263 = vector.extract_strided_slice %203 {offsets = [16, 0], sizes = [8, 32], strides = [1, 1]} : vector<32x32xf32> to vector<8x32xf32>
    "tpu.trace_start"() <{level = 10 : i32, message = "bqv,vd->bqd"}> : () -> ()
    %cst_115 = arith.constant dense<0.000000e+00> : vector<2x8x32xf32>
    %264 = tpu.matmul %262, %263, %cst_115 {dimension_numbers = #tpu.dot_dimension_numbers<[2], [0], [0, 1], [1], [0, 0, 0, 1, 1, 1], [], []>} : vector<2x8x8xf32>, vector<8x32xf32>, vector<2x8x32xf32> -> vector<2x8x32xf32>
    "tpu.trace_stop"() : () -> ()
    %265 = arith.addf %244, %264 : vector<2x8x32xf32>
    %266 = vector.extract_strided_slice %201 {offsets = [0, 0, 24], sizes = [2, 8, 8], strides = [1, 1, 1]} : vector<2x8x96xf32> to vector<2x8x8xf32>
    %267 = vector.extract_strided_slice %201 {offsets = [0, 0, 56], sizes = [2, 8, 8], strides = [1, 1, 1]} : vector<2x8x96xf32> to vector<2x8x8xf32>
    %268 = vector.extract_strided_slice %201 {offsets = [0, 0, 88], sizes = [2, 8, 8], strides = [1, 1, 1]} : vector<2x8x96xf32> to vector<2x8x8xf32>
    "tpu.trace_start"() <{level = 10 : i32, message = "bqk,bjk->bqj"}> : () -> ()
    %cst_116 = arith.constant dense<0.000000e+00> : vector<2x8x8xf32>
    %269 = tpu.matmul %266, %267, %cst_116 {dimension_numbers = #tpu.dot_dimension_numbers<[2], [2], [1], [1], [0, 0, 0, 1, 1, 1], [0], [0]>} : vector<2x8x8xf32>, vector<2x8x8xf32>, vector<2x8x8xf32> -> vector<2x8x8xf32>
    "tpu.trace_stop"() : () -> ()
    %cst_117 = arith.constant 0.353553385 : f32
    %270 = vector.broadcast %cst_117 : f32 to vector<2x8x8xf32>
    %271 = arith.mulf %269, %270 : vector<2x8x8xf32>
    %272 = arith.addf %271, %21 : vector<2x8x8xf32>
    %cst_118 = arith.constant dense<0xFF800000> : vector<2x8xf32>
    %273 = vector.multi_reduction <maximumf>, %272, %cst_118 [2] : vector<2x8x8xf32> to vector<2x8xf32>
    %274 = vector.shape_cast %273 : vector<2x8xf32> to vector<2x8x1xf32>
    %275 = vector.broadcast %274 : vector<2x8x1xf32> to vector<2x8x8xf32>
    %276 = arith.subf %272, %275 : vector<2x8x8xf32>
    %277 = math.exp %276 : vector<2x8x8xf32>
    %cst_119 = arith.constant dense<0.000000e+00> : vector<2x8xf32>
    %278 = vector.multi_reduction <add>, %277, %cst_119 [2] : vector<2x8x8xf32> to vector<2x8xf32>
    %279 = vector.shape_cast %278 : vector<2x8xf32> to vector<2x8x1xf32>
    %280 = tpu.reciprocal %279 {approx = true} : vector<2x8x1xf32> -> vector<2x8x1xf32>
    %281 = vector.broadcast %280 : vector<2x8x1xf32> to vector<2x8x8xf32>
    %282 = arith.mulf %277, %281 : vector<2x8x8xf32>
    "tpu.trace_start"() <{level = 10 : i32, message = "bqj,bjv->bqv"}> : () -> ()
    %cst_120 = arith.constant dense<0.000000e+00> : vector<2x8x8xf32>
    %283 = tpu.matmul %282, %268, %cst_120 {dimension_numbers = #tpu.dot_dimension_numbers<[2], [1], [1], [2], [0, 0, 0, 1, 1, 2], [0], [0]>} : vector<2x8x8xf32>, vector<2x8x8xf32>, vector<2x8x8xf32> -> vector<2x8x8xf32>
    "tpu.trace_stop"() : () -> ()
    %284 = vector.extract_strided_slice %203 {offsets = [24, 0], sizes = [8, 32], strides = [1, 1]} : vector<32x32xf32> to vector<8x32xf32>
    "tpu.trace_start"() <{level = 10 : i32, message = "bqv,vd->bqd"}> : () -> ()
    %cst_121 = arith.constant dense<0.000000e+00> : vector<2x8x32xf32>
    %285 = tpu.matmul %283, %284, %cst_121 {dimension_numbers = #tpu.dot_dimension_numbers<[2], [0], [0, 1], [1], [0, 0, 0, 1, 1, 1], [], []>} : vector<2x8x8xf32>, vector<8x32xf32>, vector<2x8x32xf32> -> vector<2x8x32xf32>
    "tpu.trace_stop"() : () -> ()
    %286 = arith.addf %265, %285 : vector<2x8x32xf32>
    %c1_122 = arith.constant 1 : index
    %c0_123 = arith.constant 0 : index
    %c0_124 = arith.constant 0 : index
    %287 = vector.load %arg9[%c1_122, %c0_123, %c0_124] : memref<2x1x32xf32, #tpu.memory_space<vmem>>, vector<1x1x32xf32>
    %288 = vector.shape_cast %287 : vector<1x1x32xf32> to vector<1x32xf32>
    %289 = vector.shape_cast %288 : vector<1x32xf32> to vector<1x1x32xf32>
    %290 = vector.broadcast %289 : vector<1x1x32xf32> to vector<2x8x32xf32>
    %291 = arith.addf %286, %290 : vector<2x8x32xf32>
    %292 = vector.shape_cast %193 : vector<16x32xf32> to vector<2x8x32xf32>
    %293 = arith.addf %291, %292 : vector<2x8x32xf32>
    %cst_125 = arith.constant dense<0.000000e+00> : vector<2x8xf32>
    %294 = vector.multi_reduction <add>, %293, %cst_125 [2] : vector<2x8x32xf32> to vector<2x8xf32>
    %295 = vector.shape_cast %294 : vector<2x8xf32> to vector<2x8x1xf32>
    %cst_126 = arith.constant dense<0.000000e+00> : vector<2x1xf32>
    %296 = vector.multi_reduction <add>, %295, %cst_126 [1] : vector<2x8x1xf32> to vector<2x1xf32>
    %297 = vector.shape_cast %296 : vector<2x1xf32> to vector<2x1x1xf32>
    %cst_127 = arith.constant 3.906250e-03 : f32
    %298 = vector.broadcast %cst_127 : f32 to vector<2x1x1xf32>
    %299 = arith.mulf %297, %298 : vector<2x1x1xf32>
    %300 = vector.broadcast %299 : vector<2x1x1xf32> to vector<2x8x32xf32>
    %301 = arith.subf %293, %300 : vector<2x8x32xf32>
    %302 = arith.mulf %301, %301 : vector<2x8x32xf32>
    %cst_128 = arith.constant dense<0.000000e+00> : vector<2x8xf32>
    %303 = vector.multi_reduction <add>, %302, %cst_128 [2] : vector<2x8x32xf32> to vector<2x8xf32>
    %304 = vector.shape_cast %303 : vector<2x8xf32> to vector<2x8x1xf32>
    %cst_129 = arith.constant dense<0.000000e+00> : vector<2x1xf32>
    %305 = vector.multi_reduction <add>, %304, %cst_129 [1] : vector<2x8x1xf32> to vector<2x1xf32>
    %306 = vector.shape_cast %305 : vector<2x1xf32> to vector<2x1x1xf32>
    %cst_130 = arith.constant 3.906250e-03 : f32
    %307 = vector.broadcast %cst_130 : f32 to vector<2x1x1xf32>
    %308 = arith.mulf %306, %307 : vector<2x1x1xf32>
    %cst_131 = arith.constant 9.99999974E-6 : f32
    %309 = vector.broadcast %cst_131 : f32 to vector<2x1x1xf32>
    %310 = arith.addf %308, %309 : vector<2x1x1xf32>
    %311 = math.rsqrt %310 : vector<2x1x1xf32>
    %312 = vector.broadcast %311 : vector<2x1x1xf32> to vector<2x8x32xf32>
    %313 = arith.mulf %301, %312 : vector<2x8x32xf32>
    %c1_132 = arith.constant 1 : index
    %c0_133 = arith.constant 0 : index
    %c0_134 = arith.constant 0 : index
    %314 = vector.load %arg10[%c1_132, %c0_133, %c0_134] : memref<2x8x32xf32, #tpu.memory_space<vmem>>, vector<1x8x32xf32>
    %315 = vector.shape_cast %314 : vector<1x8x32xf32> to vector<8x32xf32>
    %316 = vector.shape_cast %315 : vector<8x32xf32> to vector<1x8x32xf32>
    %317 = vector.broadcast %316 : vector<1x8x32xf32> to vector<2x8x32xf32>
    %318 = arith.mulf %313, %317 : vector<2x8x32xf32>
    %c1_135 = arith.constant 1 : index
    %c0_136 = arith.constant 0 : index
    %c0_137 = arith.constant 0 : index
    %319 = vector.load %arg11[%c1_135, %c0_136, %c0_137] : memref<2x8x32xf32, #tpu.memory_space<vmem>>, vector<1x8x32xf32>
    %320 = vector.shape_cast %319 : vector<1x8x32xf32> to vector<8x32xf32>
    %321 = vector.shape_cast %320 : vector<8x32xf32> to vector<1x8x32xf32>
    %322 = vector.broadcast %321 : vector<1x8x32xf32> to vector<2x8x32xf32>
    %323 = arith.addf %318, %322 : vector<2x8x32xf32>
    %324 = vector.shape_cast %323 : vector<2x8x32xf32> to vector<16x32xf32>
    %c1_138 = arith.constant 1 : index
    %c0_139 = arith.constant 0 : index
    %c0_140 = arith.constant 0 : index
    %325 = vector.load %arg12[%c1_138, %c0_139, %c0_140] : memref<2x32x64xf32, #tpu.memory_space<vmem>>, vector<1x32x64xf32>
    %326 = vector.shape_cast %325 : vector<1x32x64xf32> to vector<32x64xf32>
    %cst_141 = arith.constant dense<0.000000e+00> : vector<16x64xf32>
    %327 = tpu.matmul %324, %326, %cst_141 {dimension_numbers = #tpu.dot_dimension_numbers<[1], [0], [0], [1], [0, 0, 1, 1], [], []>} : vector<16x32xf32>, vector<32x64xf32>, vector<16x64xf32> -> vector<16x64xf32>
    %c1_142 = arith.constant 1 : index
    %c0_143 = arith.constant 0 : index
    %c0_144 = arith.constant 0 : index
    %328 = vector.load %arg13[%c1_142, %c0_143, %c0_144] : memref<2x1x64xf32, #tpu.memory_space<vmem>>, vector<1x1x64xf32>
    %329 = vector.shape_cast %328 : vector<1x1x64xf32> to vector<1x64xf32>
    %330 = vector.broadcast %329 : vector<1x64xf32> to vector<16x64xf32>
    %331 = arith.addf %327, %330 : vector<16x64xf32>
    %cst_145 = arith.constant 0.000000e+00 : f32
    %332 = vector.broadcast %cst_145 : f32 to vector<16x64xf32>
    %333 = arith.maximumf %331, %332 : vector<16x64xf32>
    %c1_146 = arith.constant 1 : index
    %c0_147 = arith.constant 0 : index
    %c0_148 = arith.constant 0 : index
    %334 = vector.load %arg14[%c1_146, %c0_147, %c0_148] : memref<2x64x32xf32, #tpu.memory_space<vmem>>, vector<1x64x32xf32>
    %335 = vector.shape_cast %334 : vector<1x64x32xf32> to vector<64x32xf32>
    %cst_149 = arith.constant dense<0.000000e+00> : vector<16x32xf32>
    %336 = tpu.matmul %333, %335, %cst_149 {dimension_numbers = #tpu.dot_dimension_numbers<[1], [0], [0], [1], [0, 0, 1, 1], [], []>} : vector<16x64xf32>, vector<64x32xf32>, vector<16x32xf32> -> vector<16x32xf32>
    %c1_150 = arith.constant 1 : index
    %c0_151 = arith.constant 0 : index
    %c0_152 = arith.constant 0 : index
    %337 = vector.load %arg15[%c1_150, %c0_151, %c0_152] : memref<2x1x32xf32, #tpu.memory_space<vmem>>, vector<1x1x32xf32>
    %338 = vector.shape_cast %337 : vector<1x1x32xf32> to vector<1x32xf32>
    %339 = vector.broadcast %338 : vector<1x32xf32> to vector<16x32xf32>
    %340 = arith.addf %336, %339 : vector<16x32xf32>
    %341 = arith.addf %340, %324 : vector<16x32xf32>
    %cst_153 = arith.constant dense<0.000000e+00> : vector<16xf32>
    %342 = vector.multi_reduction <add>, %341, %cst_153 [1] : vector<16x32xf32> to vector<16xf32>
    %343 = vector.shape_cast %342 : vector<16xf32> to vector<16x1xf32>
    %cst_154 = arith.constant 3.200000e+01 : f32
    %344 = vector.broadcast %cst_154 : f32 to vector<16x1xf32>
    %345 = arith.divf %343, %344 : vector<16x1xf32>
    %346 = vector.broadcast %345 : vector<16x1xf32> to vector<16x32xf32>
    %347 = arith.subf %341, %346 : vector<16x32xf32>
    %348 = arith.mulf %347, %347 : vector<16x32xf32>
    %cst_155 = arith.constant dense<0.000000e+00> : vector<16xf32>
    %349 = vector.multi_reduction <add>, %348, %cst_155 [1] : vector<16x32xf32> to vector<16xf32>
    %350 = vector.shape_cast %349 : vector<16xf32> to vector<16x1xf32>
    %cst_156 = arith.constant 3.200000e+01 : f32
    %351 = vector.broadcast %cst_156 : f32 to vector<16x1xf32>
    %352 = arith.divf %350, %351 : vector<16x1xf32>
    %cst_157 = arith.constant 9.99999974E-6 : f32
    %353 = vector.broadcast %cst_157 : f32 to vector<16x1xf32>
    %354 = arith.addf %352, %353 : vector<16x1xf32>
    %355 = math.rsqrt %354 : vector<16x1xf32>
    %356 = vector.broadcast %355 : vector<16x1xf32> to vector<16x32xf32>
    %357 = arith.mulf %347, %356 : vector<16x32xf32>
    %c1_158 = arith.constant 1 : index
    %c0_159 = arith.constant 0 : index
    %c0_160 = arith.constant 0 : index
    %358 = vector.load %arg16[%c1_158, %c0_159, %c0_160] : memref<2x1x32xf32, #tpu.memory_space<vmem>>, vector<1x1x32xf32>
    %359 = vector.shape_cast %358 : vector<1x1x32xf32> to vector<1x32xf32>
    %360 = vector.broadcast %359 : vector<1x32xf32> to vector<16x32xf32>
    %361 = arith.mulf %357, %360 : vector<16x32xf32>
    %c1_161 = arith.constant 1 : index
    %c0_162 = arith.constant 0 : index
    %c0_163 = arith.constant 0 : index
    %362 = vector.load %arg17[%c1_161, %c0_162, %c0_163] : memref<2x1x32xf32, #tpu.memory_space<vmem>>, vector<1x1x32xf32>
    %363 = vector.shape_cast %362 : vector<1x1x32xf32> to vector<1x32xf32>
    %364 = vector.broadcast %363 : vector<1x32xf32> to vector<16x32xf32>
    %365 = arith.addf %361, %364 : vector<16x32xf32>
    %c0_164 = arith.constant 0 : index
    %c0_165 = arith.constant 0 : index
    %366 = vector.load %arg18[%c0_164, %c0_165] : memref<32x32xf32, #tpu.memory_space<vmem>>, vector<32x32xf32>
    %cst_166 = arith.constant dense<0.000000e+00> : vector<16x32xf32>
    %367 = tpu.matmul %365, %366, %cst_166 {dimension_numbers = #tpu.dot_dimension_numbers<[1], [0], [0], [1], [0, 0, 1, 1], [], []>} : vector<16x32xf32>, vector<32x32xf32>, vector<16x32xf32> -> vector<16x32xf32>
    %c0_167 = arith.constant 0 : index
    %c0_168 = arith.constant 0 : index
    %368 = vector.load %arg19[%c0_167, %c0_168] : memref<1x32xf32, #tpu.memory_space<vmem>>, vector<1x32xf32>
    %369 = vector.broadcast %368 : vector<1x32xf32> to vector<16x32xf32>
    %370 = arith.addf %367, %369 : vector<16x32xf32>
    %c0_169 = arith.constant 0 : index
    %c0_170 = arith.constant 0 : index
    %371 = vector.load %arg20[%c0_169, %c0_170] : memref<16x32xf32, #tpu.memory_space<vmem>>, vector<16x32xf32>
    tpu.vector_store %arg20[%c0_169, %c0_170], %370 {strides = array<i32>} : memref<16x32xf32, #tpu.memory_space<vmem>>, vector<16x32xf32>,
    return
  }
}

</mosaic_0001>

<llo_original>
// kernel: encoder_transformer_forward.1
$region0: #{encoder_transformer_forward.1}
  #allocation0 [shape = 'u32[]', space=smem, size = 0x4, offset = 0x4, fixed_abs, tag = 'smem constant byte address 0x4 - core index']
  #allocation1 [shape = 'u32[144,128]{1,0:T(1,128)}', space=vmem, size = 0x12000, scoped, tag = 'internal scratch']
  %s0 = inlined_call_operand.vmem [shape: s32[16,1], index: 0, kind: input, shape index: {}]
  %s1 = inlined_call_operand.vmem [shape: f32[2,1,8], index: 1, kind: input, shape index: {}]
  %s2 = inlined_call_operand.vmem [shape: f32[32,16], index: 2, kind: input, shape index: {}]
  %s3 = inlined_call_operand.vmem [shape: f32[8,16], index: 3, kind: input, shape index: {}]
  %s4 = inlined_call_operand.vmem [shape: f32[16,32], index: 4, kind: input, shape index: {}]
  %s5 = inlined_call_operand.hbm [shape: f32[1,32], index: 5, kind: input, shape index: {}]
  %s6 = inlined_call_operand.vmem [shape: f32[2,32,96], index: 6, kind: input, shape index: {}]
  %s7 = inlined_call_operand.vmem [shape: f32[2,1,96], index: 7, kind: input, shape index: {}]
  %s8 = inlined_call_operand.vmem [shape: f32[2,32,32], index: 8, kind: input, shape index: {}]
  %s9 = inlined_call_operand.vmem [shape: f32[2,1,32], index: 9, kind: input, shape index: {}]
  %s10 = inlined_call_operand.hbm [shape: f32[2,8,32], index: 10, kind: input, shape index: {}]
  %s11 = inlined_call_operand.hbm [shape: f32[2,8,32], index: 11, kind: input, shape index: {}]
  %s12 = inlined_call_operand.vmem [shape: f32[2,32,64], index: 12, kind: input, shape index: {}]
  %s13 = inlined_call_operand.vmem [shape: f32[2,1,64], index: 13, kind: input, shape index: {}]
  %s14 = inlined_call_operand.vmem [shape: f32[2,64,32], index: 14, kind: input, shape index: {}]
  %s15 = inlined_call_operand.hbm [shape: f32[2,1,32], index: 15, kind: input, shape index: {}]
  %s16 = inlined_call_operand.hbm [shape: f32[2,1,32], index: 16, kind: input, shape index: {}]
  %s17 = inlined_call_operand.hbm [shape: f32[2,1,32], index: 17, kind: input, shape index: {}]
  %s18 = inlined_call_operand.vmem [shape: f32[32,32], index: 18, kind: input, shape index: {}]
  %s19 = inlined_call_operand.hbm [shape: f32[1,32], index: 19, kind: input, shape index: {}]
  %s20 = inlined_call_operand.hbm [shape: f32[16,32], index: 20, kind: output, shape index: {}]
  %s21 = sld [smem:[#allocation0]]
  $region118: #{encoder_transformer_forward.1} parent=0
    _
  %s23 = ssub.s32 1, %s21
  %s24 = scalar_select 0, %s23, %s21
  $region1: #{encoder_transformer_forward.1} parent=0
    #allocation2 [shape = 'u8[512]{0}', space=vmem, size = 0x400, scoped, tag = 'input window, operand 5, single buffered']
    #allocation3 [shape = 's32[1]{0}', space=sflag, size = 0x4, scoped, tag = 'scoped memory for encoder_transformer_forward.1']
    #allocation4 [shape = 's32[1]{0}', space=sflag, size = 0x4, scoped, tag = 'scoped memory for encoder_transformer_forward.1']
    #allocation5 [shape = 'u8[8192]{0}', space=vmem, size = 0x2000, scoped, tag = 'input window, operand 10, single buffered']
    #allocation6 [shape = 's32[1]{0}', space=sflag, size = 0x4, scoped, tag = 'scoped memory for encoder_transformer_forward.1']
    #allocation7 [shape = 'u8[8192]{0}', space=vmem, size = 0x2000, scoped, tag = 'input window, operand 11, single buffered']
    #allocation8 [shape = 'u8[1024]{0}', space=vmem, size = 0x400, scoped, tag = 'input window, operand 15, single buffered']
    #allocation9 [shape = 's32[1]{0}', space=sflag, size = 0x4, scoped, tag = 'scoped memory for encoder_transformer_forward.1']
    #allocation10 [shape = 'u8[1024]{0}', space=vmem, size = 0x400, scoped, tag = 'input window, operand 16, single buffered']
    #allocation11 [shape = 'u8[1024]{0}', space=vmem, size = 0x400, scoped, tag = 'input window, operand 17, single buffered']
    #allocation12 [shape = 's32[1]{0}', space=sflag, size = 0x4, scoped, tag = 'scoped memory for encoder_transformer_forward.1']
    #allocation13 [shape = 'u8[512]{0}', space=vmem, size = 0x400, scoped, tag = 'input window, operand 19, single buffered']
    #allocation14 [shape = 'u8[8192]{0}', space=vmem, size = 0x2000, scoped, tag = 'output window, operand 0, single buffered']
    %25 = vsyncpa [#allocation3], 0
    %26 = vsyncpa [#allocation6], 0
    %27 = vsyncpa [#allocation9], 0
    %28 = vsyncpa [#allocation12], 0
    %29 = vsyncpa [#allocation4], 0
    // Predicated region
    $region2: #{encoder_transformer_forward.1} parent=1 // pred_check
      _
    $region3: #{encoder_transformer_forward.1} parent=1 // pred_check_branch
      %31 = sbr.rel (0) target = $region5
    $region4: #{encoder_transformer_forward.1} parent=1 // pred_region
      _
    $region5: #{encoder_transformer_forward.1} parent=1 // pred_fallthru
      _
    // Predicated region
    $region6: #{encoder_transformer_forward.1} parent=1 // pred_check
      _
    $region7: #{encoder_transformer_forward.1} parent=1 // pred_check_branch
      %33 = sbr.rel (0) target = $region9
    $region8: #{encoder_transformer_forward.1} parent=1 // pred_region
      _
    $region9: #{encoder_transformer_forward.1} parent=1 // pred_fallthru
      _
    // Predicated region
    $region10: #{encoder_transformer_forward.1} parent=1 // pred_check
      _
    $region11: #{encoder_transformer_forward.1} parent=1 // pred_check_branch
      %35 = sbr.rel (0) target = $region13
    $region12: #{encoder_transformer_forward.1} parent=1 // pred_region
      _
    $region13: #{encoder_transformer_forward.1} parent=1 // pred_fallthru
      _
    // Predicated region
    $region14: #{encoder_transformer_forward.1} parent=1 // pred_check
      _
    $region15: #{encoder_transformer_forward.1} parent=1 // pred_check_branch
      %37 = sbr.rel (0) target = $region17
    $region16: #{encoder_transformer_forward.1} parent=1 // pred_region
      _
    $region17: #{encoder_transformer_forward.1} parent=1 // pred_fallthru
      _
    // Predicated region
    $region18: #{encoder_transformer_forward.1} parent=1 // pred_check
      _
    $region19: #{encoder_transformer_forward.1} parent=1 // pred_check_branch
      %39 = sbr.rel (0) target = $region21
    $region20: #{encoder_transformer_forward.1} parent=1 // pred_region
      _
    $region21: #{encoder_transformer_forward.1} parent=1 // pred_fallthru
      _
    // Predicated region
    $region22: #{encoder_transformer_forward.1} parent=1 // pred_check
      _
    $region23: #{encoder_transformer_forward.1} parent=1 // pred_check_branch
      %41 = sbr.rel (0) target = $region25
    $region24: #{encoder_transformer_forward.1} parent=1 // pred_region
      %s43 = ssub.s32 16, 16
      %44 = vsyncadd [#allocation3], %s43
      %s46 = sshll.u32 [#allocation2], 4
      %s47 = int_to_ptr.vmem [resolvable:$true] %s46
      %49 = dma.hbm_to_vmem [thread:$0]  %s5, 16, %s47, [#allocation3]
    $region25: #{encoder_transformer_forward.1} parent=1 // pred_fallthru
      _
    // Predicated region
    $region26: #{encoder_transformer_forward.1} parent=1 // pred_check
      _
    $region27: #{encoder_transformer_forward.1} parent=1 // pred_check_branch
      %51 = sbr.rel (0) target = $region29
    $region28: #{encoder_transformer_forward.1} parent=1 // pred_region
      _
    $region29: #{encoder_transformer_forward.1} parent=1 // pred_fallthru
      _
    // Predicated region
    $region30: #{encoder_transformer_forward.1} parent=1 // pred_check
      _
    $region31: #{encoder_transformer_forward.1} parent=1 // pred_check_branch
      %53 = sbr.rel (0) target = $region33
    $region32: #{encoder_transformer_forward.1} parent=1 // pred_region
      _
    $region33: #{encoder_transformer_forward.1} parent=1 // pred_fallthru
      _
    // Predicated region
    $region34: #{encoder_transformer_forward.1} parent=1 // pred_check
      _
    $region35: #{encoder_transformer_forward.1} parent=1 // pred_check_branch
      %55 = sbr.rel (0) target = $region37
    $region36: #{encoder_transformer_forward.1} parent=1 // pred_region
      _
    $region37: #{encoder_transformer_forward.1} parent=1 // pred_fallthru
      _
    // Predicated region
    $region38: #{encoder_transformer_forward.1} parent=1 // pred_check
      _
    $region39: #{encoder_transformer_forward.1} parent=1 // pred_check_branch
      %57 = sbr.rel (0) target = $region41
    $region40: #{encoder_transformer_forward.1} parent=1 // pred_region
      _
    $region41: #{encoder_transformer_forward.1} parent=1 // pred_fallthru
      _
    // Predicated region
    $region42: #{encoder_transformer_forward.1} parent=1 // pred_check
      _
    $region43: #{encoder_transformer_forward.1} parent=1 // pred_check_branch
      %59 = sbr.rel (0) target = $region45
    $region44: #{encoder_transformer_forward.1} parent=1 // pred_region
      %s61 = ssub.s32 256, 256
      %62 = vsyncadd [#allocation6], %s61
      %s63 = sshll.u32 [#allocation5], 4
      %s64 = int_to_ptr.vmem [resolvable:$true] %s63
      %69 = dma.hbm_to_vmem [thread:$0]  %s10, 256, %s64, [#allocation6], 128, 128, 8
    $region45: #{encoder_transformer_forward.1} parent=1 // pred_fallthru
      _
    // Predicated region
    $region46: #{encoder_transformer_forward.1} parent=1 // pred_check
      _
    $region47: #{encoder_transformer_forward.1} parent=1 // pred_check_branch
      %71 = sbr.rel (0) target = $region49
    $region48: #{encoder_transformer_forward.1} parent=1 // pred_region
      %s73 = ssub.s32 256, 256
      %74 = vsyncadd [#allocation6], %s73
      %s75 = sshll.u32 [#allocation7], 4
      %s76 = int_to_ptr.vmem [resolvable:$true] %s75
      %81 = dma.hbm_to_vmem [thread:$0]  %s11, 256, %s76, [#allocation6], 128, 128, 8
    $region49: #{encoder_transformer_forward.1} parent=1 // pred_fallthru
      _
    // Predicated region
    $region50: #{encoder_transformer_forward.1} parent=1 // pred_check
      _
    $region51: #{encoder_transformer_forward.1} parent=1 // pred_check_branch
      %83 = sbr.rel (0) target = $region53
    $region52: #{encoder_transformer_forward.1} parent=1 // pred_region
      _
    $region53: #{encoder_transformer_forward.1} parent=1 // pred_fallthru
      _
    // Predicated region
    $region54: #{encoder_transformer_forward.1} parent=1 // pred_check
      _
    $region55: #{encoder_transformer_forward.1} parent=1 // pred_check_branch
      %85 = sbr.rel (0) target = $region57
    $region56: #{encoder_transformer_forward.1} parent=1 // pred_region
      _
    $region57: #{encoder_transformer_forward.1} parent=1 // pred_fallthru
      _
    // Predicated region
    $region58: #{encoder_transformer_forward.1} parent=1 // pred_check
      _
    $region59: #{encoder_transformer_forward.1} parent=1 // pred_check_branch
      %87 = sbr.rel (0) target = $region61
    $region60: #{encoder_transformer_forward.1} parent=1 // pred_region
      _
    $region61: #{encoder_transformer_forward.1} parent=1 // pred_fallthru
      _
    // Predicated region
    $region62: #{encoder_transformer_forward.1} parent=1 // pred_check
      _
    $region63: #{encoder_transformer_forward.1} parent=1 // pred_check_branch
      %89 = sbr.rel (0) target = $region65
    $region64: #{encoder_transformer_forward.1} parent=1 // pred_region
      %s91 = ssub.s32 32, 32
      %92 = vsyncadd [#allocation9], %s91
      %s93 = sshll.u32 [#allocation8], 4
      %s94 = int_to_ptr.vmem [resolvable:$true] %s93
      %99 = dma.hbm_to_vmem [thread:$0]  %s15, 32, %s94, [#allocation9], 16, 16, 1
    $region65: #{encoder_transformer_forward.1} parent=1 // pred_fallthru
      _
    // Predicated region
    $region66: #{encoder_transformer_forward.1} parent=1 // pred_check
      _
    $region67: #{encoder_transformer_forward.1} parent=1 // pred_check_branch
      %101 = sbr.rel (0) target = $region69
    $region68: #{encoder_transformer_forward.1} parent=1 // pred_region
      %s103 = ssub.s32 32, 32
      %104 = vsyncadd [#allocation9], %s103
      %s105 = sshll.u32 [#allocation10], 4
      %s106 = int_to_ptr.vmem [resolvable:$true] %s105
      %111 = dma.hbm_to_vmem [thread:$0]  %s16, 32, %s106, [#allocation9], 16, 16, 1
    $region69: #{encoder_transformer_forward.1} parent=1 // pred_fallthru
      _
    // Predicated region
    $region70: #{encoder_transformer_forward.1} parent=1 // pred_check
      _
    $region71: #{encoder_transformer_forward.1} parent=1 // pred_check_branch
      %113 = sbr.rel (0) target = $region73
    $region72: #{encoder_transformer_forward.1} parent=1 // pred_region
      %s115 = ssub.s32 32, 32
      %116 = vsyncadd [#allocation12], %s115
      %s117 = sshll.u32 [#allocation11], 4
      %s118 = int_to_ptr.vmem [resolvable:$true] %s117
      %123 = dma.hbm_to_vmem [thread:$0]  %s17, 32, %s118, [#allocation12], 16, 16, 1
    $region73: #{encoder_transformer_forward.1} parent=1 // pred_fallthru
      _
    // Predicated region
    $region74: #{encoder_transformer_forward.1} parent=1 // pred_check
      _
    $region75: #{encoder_transformer_forward.1} parent=1 // pred_check_branch
      %125 = sbr.rel (0) target = $region77
    $region76: #{encoder_transformer_forward.1} parent=1 // pred_region
      _
    $region77: #{encoder_transformer_forward.1} parent=1 // pred_fallthru
      _
    // Predicated region
    $region78: #{encoder_transformer_forward.1} parent=1 // pred_check
      _
    $region79: #{encoder_transformer_forward.1} parent=1 // pred_check_branch
      %127 = sbr.rel (0) target = $region81
    $region80: #{encoder_transformer_forward.1} parent=1 // pred_region
      %s129 = ssub.s32 16, 16
      %130 = vsyncadd [#allocation12], %s129
      %s132 = sshll.u32 [#allocation13], 4
      %s133 = int_to_ptr.vmem [resolvable:$true] %s132
      %135 = dma.hbm_to_vmem [thread:$0]  %s19, 16, %s133, [#allocation12]
    $region81: #{encoder_transformer_forward.1} parent=1 // pred_fallthru
      _
    // Predicated region
    $region82: #{encoder_transformer_forward.1} parent=1 // pred_check
      _
    $region83: #{encoder_transformer_forward.1} parent=1 // pred_check_branch
      %137 = sbr.rel (0) target = $region85
    $region84: #{encoder_transformer_forward.1} parent=1 // pred_region
      %138 = dma.done [#allocation3], 16
    $region85: #{encoder_transformer_forward.1} parent=1 // pred_fallthru
      _
    // Predicated region
    $region86: #{encoder_transformer_forward.1} parent=1 // pred_check
      _
    $region87: #{encoder_transformer_forward.1} parent=1 // pred_check_branch
      %140 = sbr.rel (0) target = $region89
    $region88: #{encoder_transformer_forward.1} parent=1 // pred_region
      %141 = dma.done [#allocation6], 256
    $region89: #{encoder_transformer_forward.1} parent=1 // pred_fallthru
      _
    // Predicated region
    $region90: #{encoder_transformer_forward.1} parent=1 // pred_check
      _
    $region91: #{encoder_transformer_forward.1} parent=1 // pred_check_branch
      %143 = sbr.rel (0) target = $region93
    $region92: #{encoder_transformer_forward.1} parent=1 // pred_region
      %144 = dma.done [#allocation6], 256
    $region93: #{encoder_transformer_forward.1} parent=1 // pred_fallthru
      _
    // Predicated region
    $region94: #{encoder_transformer_forward.1} parent=1 // pred_check
      _
    $region95: #{encoder_transformer_forward.1} parent=1 // pred_check_branch
      %146 = sbr.rel (0) target = $region97
    $region96: #{encoder_transformer_forward.1} parent=1 // pred_region
      %147 = dma.done [#allocation9], 32
    $region97: #{encoder_transformer_forward.1} parent=1 // pred_fallthru
      _
    // Predicated region
    $region98: #{encoder_transformer_forward.1} parent=1 // pred_check
      _
    $region99: #{encoder_transformer_forward.1} parent=1 // pred_check_branch
      %149 = sbr.rel (0) target = $region101
    $region100: #{encoder_transformer_forward.1} parent=1 // pred_region
      %150 = dma.done [#allocation9], 32
    $region101: #{encoder_transformer_forward.1} parent=1 // pred_fallthru
      _
    // Predicated region
    $region102: #{encoder_transformer_forward.1} parent=1 // pred_check
      _
    $region103: #{encoder_transformer_forward.1} parent=1 // pred_check_branch
      %152 = sbr.rel (0) target = $region105
    $region104: #{encoder_transformer_forward.1} parent=1 // pred_region
      %153 = dma.done [#allocation12], 32
    $region105: #{encoder_transformer_forward.1} parent=1 // pred_fallthru
      _
    // Predicated region
    $region106: #{encoder_transformer_forward.1} parent=1 // pred_check
      _
    $region107: #{encoder_transformer_forward.1} parent=1 // pred_check_branch
      %155 = sbr.rel (0) target = $region109
    $region108: #{encoder_transformer_forward.1} parent=1 // pred_region
      %156 = dma.done [#allocation12], 16
    $region109: #{encoder_transformer_forward.1} parent=1 // pred_fallthru
      _
    %v157 = vld [vmem:[%s0] sm:$0xff]
    %v158 = vld [vmem:[%s0 + $0x8] sm:$0xff]
    %v159 = vlaneseq
    %v160 = vand.u32 %v159, 127
    %161 = vset.pattern.permute.xlu0 0
    %162 = vperm.xlu0 %161, %v157
    %v163 = vpop.permute.xlu0 %162
    %164 = vset.pattern.permute.xlu0 0
    %165 = vperm.xlu0 %164, %v158
    %v166 = vpop.permute.xlu0 %165
    %vm167 = vcmp.eq.s32.totalorder %v163, %v160
    %vm168 = vcmp.eq.s32.totalorder %v166, %v160
    %v169 = vsel %vm167, 1, 0
    %v170 = vsel %vm168, 1, 0
    %v171 = vcvt.s32.f32 %v169
    %v172 = vcvt.s32.f32 %v170
    %v173 = vld [vmem:[%s2] sm:$0xff]
    %v174 = vld [vmem:[%s2 + $0x8] sm:$0xff]
    %v175 = vld [vmem:[%s2 + $0x10] sm:$0xff]
    %v176 = vld [vmem:[%s2 + $0x18] sm:$0xff]
    %vm177 = vcmask 261120
    %v179 = vsel %vm177, %v171, 0
    %v182 = vsel %vm177, %v172, 0
    %184 = vmatprep.subr.mxu0 0.0
    %185 = vmatpush1.msra.mxu0 %v173
    %186 = vmatprep.subr.mxu0 0.0
    %187 = vmatpush1.msra.mxu0 %v174
    %188 = vmatprep.subr.mxu0 0.0
    %189 = vmatpush1.msra.mxu0 %v175
    %190 = vmatprep.subr.mxu0 0.0
    %191 = vmatpush1.msra.mxu0 %v176
    %192 = vmatprep.subr.mxu0 0.0
    %193 = vmatpush1.msra.mxu0 0.0
    %194 = vmatprep.subr.mxu0 0.0
    %195 = vmatpush1.msra.mxu0 0.0
    %196 = vmatprep.subr.mxu0 0.0
    %197 = vmatpush1.msra.mxu0 0.0
    %198 = vmatprep.subr.mxu0 0.0
    %199 = vmatpush1.msra.mxu0 0.0
    %200 = vmatprep.subr.mxu0 0.0
    %201 = vmatpush1.msra.mxu0 0.0
    %202 = vmatprep.subr.mxu0 0.0
    %203 = vmatpush1.msra.mxu0 0.0
    %204 = vmatprep.subr.mxu0 0.0
    %205 = vmatpush1.msra.mxu0 0.0
    %206 = vmatprep.subr.mxu0 0.0
    %207 = vmatpush1.msra.mxu0 0.0
    %208 = vmatprep.subr.mxu0 0.0
    %209 = vmatpush1.msra.mxu0 0.0
    %210 = vmatprep.subr.mxu0 0.0
    %211 = vmatpush1.msra.mxu0 0.0
    %212 = vmatprep.subr.mxu0 0.0
    %213 = vmatpush1.msra.mxu0 0.0
    %214 = vmatprep.subr.mxu0 0.0
    %215 = vmatpush1.msra.mxu0 0.0
    %216 = vmatprep.subr.mxu0 0.0
    %217 = vmatpush1.msra.mxu0 0.0
    %218 = vmatprep.subr.mxu0 0.0
    %219 = vmatpush1.msra.mxu0 0.0
    %220 = vmatprep.subr.mxu0 0.0
    %221 = vmatpush1.msra.mxu0 0.0
    %222 = vmatprep.subr.mxu0 0.0
    %223 = vmatpush1.msra.mxu0 0.0
    %224 = vmatprep.subr.mxu0 0.0
    %225 = vmatpush1.msra.mxu0 0.0
    %226 = vmatprep.subr.mxu0 0.0
    %227 = vmatpush1.msra.mxu0 0.0
    %228 = vmatprep.subr.mxu0 0.0
    %229 = vmatpush1.msra.mxu0 0.0
    %230 = vmatprep.subr.mxu0 0.0
    %231 = vmatpush1.msra.mxu0 0.0
    %232 = vmatprep.subr.mxu0 0.0
    %233 = vmatpush1.msra.mxu0 0.0
    %234 = vmatprep.subr.mxu0 0.0
    %235 = vmatpush1.msra.mxu0 0.0
    %236 = vmatprep.subr.mxu0 0.0
    %237 = vmatpush1.msra.mxu0 0.0
    %238 = vmatprep.subr.mxu0 0.0
    %239 = vmatpush1.msra.mxu0 0.0
    %240 = vmatprep.subr.mxu0 0.0
    %241 = vmatpush1.msra.mxu0 0.0
    %242 = vmatprep.subr.mxu0 0.0
    %243 = vmatpush1.msra.mxu0 0.0
    %244 = vmatprep.subr.mxu0 0.0
    %245 = vmatpush1.msra.mxu0 0.0
    %246 = vmatprep.subr.mxu0 0.0
    %247 = vmatpush1.msra.mxu0 0.0
    %248 = vmatprep.mubr.f32.mxu0 0.0
    %249 = vmatmul.mubr.f32.gmra.mrb[0].mxu0 %v179
    %v250 = vpop.f32.mrb[0].mxu0
    %v251 = vadd.f32 0.0, %v250
    %v252 = vpop.f32.mrb[0].mxu0
    %253 = vmatprep.mubr.f32.mxu0 0.0
    %254 = vmatmul.mubr.f32.gmra.mrb[0].mxu0 %v182
    %v255 = vpop.f32.mrb[0].mxu0
    %v256 = vadd.f32 0.0, %v255
    %v257 = vpop.f32.mrb[0].mxu0
    %258 = vdwg.mxu0
    %v259 = vld [vmem:[%s3] sm:$0xff]
    %v260 = vadd.f32 %v251, %v259
    %v261 = vadd.f32 %v256, %v259
    %v262 = vld [vmem:[%s4] sm:$0xff]
    %v263 = vld [vmem:[%s4 + $0x8] sm:$0xff]
    %v264 = vld [vmem:[#allocation2] sm:$0x1]
    %v266 = vlaneseq
    %v267 = vshrl.u32 %v266, 7
    %v268 = vsub.s32 0, %v267
    %v269 = vrot.slane %v264, %v268
    %vm271 = vcmask 130048
    %v273 = vsel %vm271, %v260, 0
    %v276 = vsel %vm271, %v261, 0
    %278 = vmatprep.subr.mxu0 0.0
    %279 = vmatpush1.msra.mxu0 %v262
    %280 = vmatprep.subr.mxu0 0.0
    %281 = vmatpush1.msra.mxu0 %v263
    %282 = vmatprep.subr.mxu0 0.0
    %283 = vmatpush1.msra.mxu0 0.0
    %284 = vmatprep.subr.mxu0 0.0
    %285 = vmatpush1.msra.mxu0 0.0
    %286 = vmatprep.subr.mxu0 0.0
    %287 = vmatpush1.msra.mxu0 0.0
    %288 = vmatprep.subr.mxu0 0.0
    %289 = vmatpush1.msra.mxu0 0.0
    %290 = vmatprep.subr.mxu0 0.0
    %291 = vmatpush1.msra.mxu0 0.0
    %292 = vmatprep.subr.mxu0 0.0
    %293 = vmatpush1.msra.mxu0 0.0
    %294 = vmatprep.subr.mxu0 0.0
    %295 = vmatpush1.msra.mxu0 0.0
    %296 = vmatprep.subr.mxu0 0.0
    %297 = vmatpush1.msra.mxu0 0.0
    %298 = vmatprep.subr.mxu0 0.0
    %299 = vmatpush1.msra.mxu0 0.0
    %300 = vmatprep.subr.mxu0 0.0
    %301 = vmatpush1.msra.mxu0 0.0
    %302 = vmatprep.subr.mxu0 0.0
    %303 = vmatpush1.msra.mxu0 0.0
    %304 = vmatprep.subr.mxu0 0.0
    %305 = vmatpush1.msra.mxu0 0.0
    %306 = vmatprep.subr.mxu0 0.0
    %307 = vmatpush1.msra.mxu0 0.0
    %308 = vmatprep.subr.mxu0 0.0
    %309 = vmatpush1.msra.mxu0 0.0
    %310 = vmatprep.subr.mxu0 0.0
    %311 = vmatpush1.msra.mxu0 0.0
    %312 = vmatprep.subr.mxu0 0.0
    %313 = vmatpush1.msra.mxu0 0.0
    %314 = vmatprep.subr.mxu0 0.0
    %315 = vmatpush1.msra.mxu0 0.0
    %316 = vmatprep.subr.mxu0 0.0
    %317 = vmatpush1.msra.mxu0 0.0
    %318 = vmatprep.subr.mxu0 0.0
    %319 = vmatpush1.msra.mxu0 0.0
    %320 = vmatprep.subr.mxu0 0.0
    %321 = vmatpush1.msra.mxu0 0.0
    %322 = vmatprep.subr.mxu0 0.0
    %323 = vmatpush1.msra.mxu0 0.0
    %324 = vmatprep.subr.mxu0 0.0
    %325 = vmatpush1.msra.mxu0 0.0
    %326 = vmatprep.subr.mxu0 0.0
    %327 = vmatpush1.msra.mxu0 0.0
    %328 = vmatprep.subr.mxu0 0.0
    %329 = vmatpush1.msra.mxu0 0.0
    %330 = vmatprep.subr.mxu0 0.0
    %331 = vmatpush1.msra.mxu0 0.0
    %332 = vmatprep.subr.mxu0 0.0
    %333 = vmatpush1.msra.mxu0 0.0
    %334 = vmatprep.subr.mxu0 0.0
    %335 = vmatpush1.msra.mxu0 0.0
    %336 = vmatprep.subr.mxu0 0.0
    %337 = vmatpush1.msra.mxu0 0.0
    %338 = vmatprep.subr.mxu0 0.0
    %339 = vmatpush1.msra.mxu0 0.0
    %340 = vmatprep.subr.mxu0 0.0
    %341 = vmatpush1.msra.mxu0 0.0
    %342 = vmatprep.mubr.f32.mxu0 0.0
    %343 = vmatmul.mubr.f32.gmra.mrb[0].mxu0 %v273
    %v344 = vpop.f32.mrb[0].mxu0
    %v345 = vadd.f32 %v269, %v344
    %v346 = vpop.f32.mrb[0].mxu0
    %347 = vmatprep.mubr.f32.mxu0 0.0
    %348 = vmatmul.mubr.f32.gmra.mrb[0].mxu0 %v276
    %v349 = vpop.f32.mrb[0].mxu0
    %v350 = vadd.f32 %v269, %v349
    %v351 = vpop.f32.mrb[0].mxu0
    %352 = vdwg.mxu0
    %v353 = vld [vmem:[%s1] sm:$0x1]
    %v354 = vld [vmem:[%s1 + $0x1] sm:$0x1]
    %v357 = vlaneseq
    %v358 = vshrl.u32 %v357, 7
    %v359 = vsub.s32 0, %v358
    %v360 = vrot.slane %v353, %v359
    %v361 = vlaneseq
    %v362 = vshrl.u32 %v361, 7
    %v363 = vsub.s32 0, %v362
    %v364 = vrot.slane %v354, %v363
    %v367 = vld [vmem:[%s6] sm:$0xff]
    %v368 = vld [vmem:[%s6 + $0x8] sm:$0xff]
    %v369 = vld [vmem:[%s6 + $0x10] sm:$0xff]
    %v370 = vld [vmem:[%s6 + $0x18] sm:$0xff]
    %v371 = vld [vmem:[%s7] sm:$0x1]
    %v373 = vlaneseq
    %v374 = vshrl.u32 %v373, 7
    %v375 = vsub.s32 0, %v374
    %v376 = vrot.slane %v371, %v375
    %v379 = vsel %vm177, %v345, 0
    %v382 = vsel %vm177, %v350, 0
    %384 = vmatprep.subr.mxu0 0.0
    %385 = vmatpush1.msra.mxu0 %v367
    %386 = vmatprep.subr.mxu0 0.0
    %387 = vmatpush1.msra.mxu0 %v368
    %388 = vmatprep.subr.mxu0 0.0
    %389 = vmatpush1.msra.mxu0 %v369
    %390 = vmatprep.subr.mxu0 0.0
    %391 = vmatpush1.msra.mxu0 %v370
    %392 = vmatprep.subr.mxu0 0.0
    %393 = vmatpush1.msra.mxu0 0.0
    %394 = vmatprep.subr.mxu0 0.0
    %395 = vmatpush1.msra.mxu0 0.0
    %396 = vmatprep.subr.mxu0 0.0
    %397 = vmatpush1.msra.mxu0 0.0
    %398 = vmatprep.subr.mxu0 0.0
    %399 = vmatpush1.msra.mxu0 0.0
    %400 = vmatprep.subr.mxu0 0.0
    %401 = vmatpush1.msra.mxu0 0.0
    %402 = vmatprep.subr.mxu0 0.0
    %403 = vmatpush1.msra.mxu0 0.0
    %404 = vmatprep.subr.mxu0 0.0
    %405 = vmatpush1.msra.mxu0 0.0
    %406 = vmatprep.subr.mxu0 0.0
    %407 = vmatpush1.msra.mxu0 0.0
    %408 = vmatprep.subr.mxu0 0.0
    %409 = vmatpush1.msra.mxu0 0.0
    %410 = vmatprep.subr.mxu0 0.0
    %411 = vmatpush1.msra.mxu0 0.0
    %412 = vmatprep.subr.mxu0 0.0
    %413 = vmatpush1.msra.mxu0 0.0
    %414 = vmatprep.subr.mxu0 0.0
    %415 = vmatpush1.msra.mxu0 0.0
    %416 = vmatprep.subr.mxu0 0.0
    %417 = vmatpush1.msra.mxu0 0.0
    %418 = vmatprep.subr.mxu0 0.0
    %419 = vmatpush1.msra.mxu0 0.0
    %420 = vmatprep.subr.mxu0 0.0
    %421 = vmatpush1.msra.mxu0 0.0
    %422 = vmatprep.subr.mxu0 0.0
    %423 = vmatpush1.msra.mxu0 0.0
    %424 = vmatprep.subr.mxu0 0.0
    %425 = vmatpush1.msra.mxu0 0.0
    %426 = vmatprep.subr.mxu0 0.0
    %427 = vmatpush1.msra.mxu0 0.0
    %428 = vmatprep.subr.mxu0 0.0
    %429 = vmatpush1.msra.mxu0 0.0
    %430 = vmatprep.subr.mxu0 0.0
    %431 = vmatpush1.msra.mxu0 0.0
    %432 = vmatprep.subr.mxu0 0.0
    %433 = vmatpush1.msra.mxu0 0.0
    %434 = vmatprep.subr.mxu0 0.0
    %435 = vmatpush1.msra.mxu0 0.0
    %436 = vmatprep.subr.mxu0 0.0
    %437 = vmatpush1.msra.mxu0 0.0
    %438 = vmatprep.subr.mxu0 0.0
    %439 = vmatpush1.msra.mxu0 0.0
    %440 = vmatprep.subr.mxu0 0.0
    %441 = vmatpush1.msra.mxu0 0.0
    %442 = vmatprep.subr.mxu0 0.0
    %443 = vmatpush1.msra.mxu0 0.0
    %444 = vmatprep.subr.mxu0 0.0
    %445 = vmatpush1.msra.mxu0 0.0
    %446 = vmatprep.subr.mxu0 0.0
    %447 = vmatpush1.msra.mxu0 0.0
    %448 = vmatprep.mubr.f32.mxu0 0.0
    %449 = vmatmul.mubr.f32.gmra.mrb[0].mxu0 %v379
    %v450 = vpop.f32.mrb[0].mxu0
    %v451 = vadd.f32 %v376, %v450
    %v452 = vpop.f32.mrb[0].mxu0
    %453 = vmatprep.mubr.f32.mxu0 0.0
    %454 = vmatmul.mubr.f32.gmra.mrb[0].mxu0 %v382
    %v455 = vpop.f32.mrb[0].mxu0
    %v456 = vadd.f32 %v376, %v455
    %v457 = vpop.f32.mrb[0].mxu0
    %458 = vdwg.mxu0
    %v459 = vld [vmem:[%s8] sm:$0xff]
    %v460 = vld [vmem:[%s8 + $0x8] sm:$0xff]
    %v461 = vld [vmem:[%s8 + $0x10] sm:$0xff]
    %v462 = vld [vmem:[%s8 + $0x18] sm:$0xff]
    %464 = vrot.lane.b32.xlu0 %v451, 96
    %v465 = vpop.permute.xlu0 %464
    %vm466 = vcmask 64512
    %v467 = vsel %vm466, %v451, 0
    %v469 = vsel %vm466, %v465, 0
    %471 = vmatprep.subr.mxu0 0.0
    %472 = vmatpush1.xpose.msra.mxu0 %v469
    %473 = vmatprep.subr.mxu0 0.0
    %474 = vmatpush1.xpose.msra.mxu0 0.0
    %475 = vmatprep.subr.mxu0 0.0
    %476 = vmatpush1.xpose.msra.mxu0 0.0
    %477 = vmatprep.subr.mxu0 0.0
    %478 = vmatpush1.xpose.msra.mxu0 0.0
    %479 = vmatprep.subr.mxu0 0.0
    %480 = vmatpush1.xpose.msra.mxu0 0.0
    %481 = vmatprep.subr.mxu0 0.0
    %482 = vmatpush1.xpose.msra.mxu0 0.0
    %483 = vmatprep.subr.mxu0 0.0
    %484 = vmatpush1.xpose.msra.mxu0 0.0
    %485 = vmatprep.subr.mxu0 0.0
    %486 = vmatpush1.xpose.msra.mxu0 0.0
    %487 = vmatprep.subr.mxu0 0.0
    %488 = vmatpush1.xpose.msra.mxu0 0.0
    %489 = vmatprep.subr.mxu0 0.0
    %490 = vmatpush1.xpose.msra.mxu0 0.0
    %491 = vmatprep.subr.mxu0 0.0
    %492 = vmatpush1.xpose.msra.mxu0 0.0
    %493 = vmatprep.subr.mxu0 0.0
    %494 = vmatpush1.xpose.msra.mxu0 0.0
    %495 = vmatprep.subr.mxu0 0.0
    %496 = vmatpush1.xpose.msra.mxu0 0.0
    %497 = vmatprep.subr.mxu0 0.0
    %498 = vmatpush1.xpose.msra.mxu0 0.0
    %499 = vmatprep.subr.mxu0 0.0
    %500 = vmatpush1.xpose.msra.mxu0 0.0
    %501 = vmatprep.subr.mxu0 0.0
    %502 = vmatpush1.xpose.msra.mxu0 0.0
    %503 = vmatprep.subr.mxu0 0.0
    %504 = vmatpush1.xpose.msra.mxu0 0.0
    %505 = vmatprep.subr.mxu0 0.0
    %506 = vmatpush1.xpose.msra.mxu0 0.0
    %507 = vmatprep.subr.mxu0 0.0
    %508 = vmatpush1.xpose.msra.mxu0 0.0
    %509 = vmatprep.subr.mxu0 0.0
    %510 = vmatpush1.xpose.msra.mxu0 0.0
    %511 = vmatprep.subr.mxu0 0.0
    %512 = vmatpush1.xpose.msra.mxu0 0.0
    %513 = vmatprep.subr.mxu0 0.0
    %514 = vmatpush1.xpose.msra.mxu0 0.0
    %515 = vmatprep.subr.mxu0 0.0
    %516 = vmatpush1.xpose.msra.mxu0 0.0
    %517 = vmatprep.subr.mxu0 0.0
    %518 = vmatpush1.xpose.msra.mxu0 0.0
    %519 = vmatprep.subr.mxu0 0.0
    %520 = vmatpush1.xpose.msra.mxu0 0.0
    %521 = vmatprep.subr.mxu0 0.0
    %522 = vmatpush1.xpose.msra.mxu0 0.0
    %523 = vmatprep.subr.mxu0 0.0
    %524 = vmatpush1.xpose.msra.mxu0 0.0
    %525 = vmatprep.subr.mxu0 0.0
    %526 = vmatpush1.xpose.msra.mxu0 0.0
    %527 = vmatprep.subr.mxu0 0.0
    %528 = vmatpush1.xpose.msra.mxu0 0.0
    %529 = vmatprep.subr.mxu0 0.0
    %530 = vmatpush1.xpose.msra.mxu0 0.0
    %531 = vmatprep.subr.mxu0 0.0
    %532 = vmatpush1.xpose.msra.mxu0 0.0
    %533 = vmatprep.subr.mxu0 0.0
    %534 = vmatpush1.xpose.msra.mxu0 0.0
    %535 = vmatprep.mubr.f32.mxu0 0.0
    %536 = vmatmul.mubr.f32.gmra.mrb[0].mxu0 %v467
    %v537 = vpop.f32.mrb[0].mxu0
    %v538 = vadd.f32 0.0, %v537
    %v539 = vpop.f32.mrb[0].mxu0
    %540 = vdwg.mxu0
    %542 = vrot.lane.b32.xlu0 %v456, 96
    %v543 = vpop.permute.xlu0 %542
    %v544 = vsel %vm466, %v456, 0
    %v546 = vsel %vm466, %v543, 0
    %548 = vmatprep.subr.mxu0 0.0
    %549 = vmatpush1.xpose.msra.mxu0 %v546
    %550 = vmatprep.subr.mxu0 0.0
    %551 = vmatpush1.xpose.msra.mxu0 0.0
    %552 = vmatprep.subr.mxu0 0.0
    %553 = vmatpush1.xpose.msra.mxu0 0.0
    %554 = vmatprep.subr.mxu0 0.0
    %555 = vmatpush1.xpose.msra.mxu0 0.0
    %556 = vmatprep.subr.mxu0 0.0
    %557 = vmatpush1.xpose.msra.mxu0 0.0
    %558 = vmatprep.subr.mxu0 0.0
    %559 = vmatpush1.xpose.msra.mxu0 0.0
    %560 = vmatprep.subr.mxu0 0.0
    %561 = vmatpush1.xpose.msra.mxu0 0.0
    %562 = vmatprep.subr.mxu0 0.0
    %563 = vmatpush1.xpose.msra.mxu0 0.0
    %564 = vmatprep.subr.mxu0 0.0
    %565 = vmatpush1.xpose.msra.mxu0 0.0
    %566 = vmatprep.subr.mxu0 0.0
    %567 = vmatpush1.xpose.msra.mxu0 0.0
    %568 = vmatprep.subr.mxu0 0.0
    %569 = vmatpush1.xpose.msra.mxu0 0.0
    %570 = vmatprep.subr.mxu0 0.0
    %571 = vmatpush1.xpose.msra.mxu0 0.0
    %572 = vmatprep.subr.mxu0 0.0
    %573 = vmatpush1.xpose.msra.mxu0 0.0
    %574 = vmatprep.subr.mxu0 0.0
    %575 = vmatpush1.xpose.msra.mxu0 0.0
    %576 = vmatprep.subr.mxu0 0.0
    %577 = vmatpush1.xpose.msra.mxu0 0.0
    %578 = vmatprep.subr.mxu0 0.0
    %579 = vmatpush1.xpose.msra.mxu0 0.0
    %580 = vmatprep.subr.mxu0 0.0
    %581 = vmatpush1.xpose.msra.mxu0 0.0
    %582 = vmatprep.subr.mxu0 0.0
    %583 = vmatpush1.xpose.msra.mxu0 0.0
    %584 = vmatprep.subr.mxu0 0.0
    %585 = vmatpush1.xpose.msra.mxu0 0.0
    %586 = vmatprep.subr.mxu0 0.0
    %587 = vmatpush1.xpose.msra.mxu0 0.0
    %588 = vmatprep.subr.mxu0 0.0
    %589 = vmatpush1.xpose.msra.mxu0 0.0
    %590 = vmatprep.subr.mxu0 0.0
    %591 = vmatpush1.xpose.msra.mxu0 0.0
    %592 = vmatprep.subr.mxu0 0.0
    %593 = vmatpush1.xpose.msra.mxu0 0.0
    %594 = vmatprep.subr.mxu0 0.0
    %595 = vmatpush1.xpose.msra.mxu0 0.0
    %596 = vmatprep.subr.mxu0 0.0
    %597 = vmatpush1.xpose.msra.mxu0 0.0
    %598 = vmatprep.subr.mxu0 0.0
    %599 = vmatpush1.xpose.msra.mxu0 0.0
    %600 = vmatprep.subr.mxu0 0.0
    %601 = vmatpush1.xpose.msra.mxu0 0.0
    %602 = vmatprep.subr.mxu0 0.0
    %603 = vmatpush1.xpose.msra.mxu0 0.0
    %604 = vmatprep.subr.mxu0 0.0
    %605 = vmatpush1.xpose.msra.mxu0 0.0
    %606 = vmatprep.subr.mxu0 0.0
    %607 = vmatpush1.xpose.msra.mxu0 0.0
    %608 = vmatprep.subr.mxu0 0.0
    %609 = vmatpush1.xpose.msra.mxu0 0.0
    %610 = vmatprep.subr.mxu0 0.0
    %611 = vmatpush1.xpose.msra.mxu0 0.0
    %612 = vmatprep.mubr.f32.mxu0 0.0
    %613 = vmatmul.mubr.f32.gmra.mrb[0].mxu0 %v544
    %v614 = vpop.f32.mrb[0].mxu0
    %v615 = vadd.f32 0.0, %v614
    %v616 = vpop.f32.mrb[0].mxu0
    %617 = vdwg.mxu0
    %v618 = vmul.f32 %v538, 0.35355338
    %v619 = vmul.f32 %v615, 0.35355338
    %v620 = vadd.f32 %v618, %v360
    %v621 = vadd.f32 %v619, %v364
    %v622 = vsel %vm466, %v620, -inf
    %623 = vmax.xlane.f32.xlu0 %v622
    %v624 = vpop.xlane.xlu0 %623
    %v625 = vsel %vm466, %v621, -inf
    %626 = vmax.xlane.f32.xlu0 %v625
    %v627 = vpop.xlane.xlu0 %626
    %v628 = vsub.f32 %v620, %v624
    %v629 = vsub.f32 %v621, %v627
    %v630 = vmul.f32 %v628, 1.442695
    %v631 = vpow.pop %v630
    %v632 = vmul.f32 %v629, 1.442695
    %v633 = vpow.pop %v632
    %v634 = vsel %vm466, %v631, 0.0
    %635 = vadd.xlane.f32.xlu0 %v634
    %v636 = vpop.xlane.xlu0 %635
    %v637 = vsel %vm466, %v633, 0.0
    %638 = vadd.xlane.f32.xlu0 %v637
    %v639 = vpop.xlane.xlu0 %638
    %v640 = vrcp.pop %v636
    %v641 = vrcp.pop %v639
    %v642 = vmul.f32 %v631, %v640
    %v643 = vmul.f32 %v633, %v641
    %644 = vrot.lane.b32.xlu0 %v451, 64
    %v645 = vpop.permute.xlu0 %644
    %v648 = vsel %vm466, %v642, 0
    %650 = vmatprep.subr.mxu0 0.0
    %651 = vmatpush1.msra.mxu0 %v645
    %652 = vmatprep.subr.mxu0 0.0
    %653 = vmatpush1.msra.mxu0 0.0
    %654 = vmatprep.subr.mxu0 0.0
    %655 = vmatpush1.msra.mxu0 0.0
    %656 = vmatprep.subr.mxu0 0.0
    %657 = vmatpush1.msra.mxu0 0.0
    %658 = vmatprep.subr.mxu0 0.0
    %659 = vmatpush1.msra.mxu0 0.0
    %660 = vmatprep.subr.mxu0 0.0
    %661 = vmatpush1.msra.mxu0 0.0
    %662 = vmatprep.subr.mxu0 0.0
    %663 = vmatpush1.msra.mxu0 0.0
    %664 = vmatprep.subr.mxu0 0.0
    %665 = vmatpush1.msra.mxu0 0.0
    %666 = vmatprep.subr.mxu0 0.0
    %667 = vmatpush1.msra.mxu0 0.0
    %668 = vmatprep.subr.mxu0 0.0
    %669 = vmatpush1.msra.mxu0 0.0
    %670 = vmatprep.subr.mxu0 0.0
    %671 = vmatpush1.msra.mxu0 0.0
    %672 = vmatprep.subr.mxu0 0.0
    %673 = vmatpush1.msra.mxu0 0.0
    %674 = vmatprep.subr.mxu0 0.0
    %675 = vmatpush1.msra.mxu0 0.0
    %676 = vmatprep.subr.mxu0 0.0
    %677 = vmatpush1.msra.mxu0 0.0
    %678 = vmatprep.subr.mxu0 0.0
    %679 = vmatpush1.msra.mxu0 0.0
    %680 = vmatprep.subr.mxu0 0.0
    %681 = vmatpush1.msra.mxu0 0.0
    %682 = vmatprep.subr.mxu0 0.0
    %683 = vmatpush1.msra.mxu0 0.0
    %684 = vmatprep.subr.mxu0 0.0
    %685 = vmatpush1.msra.mxu0 0.0
    %686 = vmatprep.subr.mxu0 0.0
    %687 = vmatpush1.msra.mxu0 0.0
    %688 = vmatprep.subr.mxu0 0.0
    %689 = vmatpush1.msra.mxu0 0.0
    %690 = vmatprep.subr.mxu0 0.0
    %691 = vmatpush1.msra.mxu0 0.0
    %692 = vmatprep.subr.mxu0 0.0
    %693 = vmatpush1.msra.mxu0 0.0
    %694 = vmatprep.subr.mxu0 0.0
    %695 = vmatpush1.msra.mxu0 0.0
    %696 = vmatprep.subr.mxu0 0.0
    %697 = vmatpush1.msra.mxu0 0.0
    %698 = vmatprep.subr.mxu0 0.0
    %699 = vmatpush1.msra.mxu0 0.0
    %700 = vmatprep.subr.mxu0 0.0
    %701 = vmatpush1.msra.mxu0 0.0
    %702 = vmatprep.subr.mxu0 0.0
    %703 = vmatpush1.msra.mxu0 0.0
    %704 = vmatprep.subr.mxu0 0.0
    %705 = vmatpush1.msra.mxu0 0.0
    %706 = vmatprep.subr.mxu0 0.0
    %707 = vmatpush1.msra.mxu0 0.0
    %708 = vmatprep.subr.mxu0 0.0
    %709 = vmatpush1.msra.mxu0 0.0
    %710 = vmatprep.subr.mxu0 0.0
    %711 = vmatpush1.msra.mxu0 0.0
    %712 = vmatprep.subr.mxu0 0.0
    %713 = vmatpush1.msra.mxu0 0.0
    %714 = vmatprep.mubr.f32.mxu0 0.0
    %715 = vmatmul.mubr.f32.gmra.mrb[0].mxu0 %v648
    %v716 = vpop.f32.mrb[0].mxu0
    %v717 = vadd.f32 0.0, %v716
    %v718 = vpop.f32.mrb[0].mxu0
    %719 = vdwg.mxu0
    %720 = vrot.lane.b32.xlu0 %v456, 64
    %v721 = vpop.permute.xlu0 %720
    %v724 = vsel %vm466, %v643, 0
    %726 = vmatprep.subr.mxu0 0.0
    %727 = vmatpush1.msra.mxu0 %v721
    %728 = vmatprep.subr.mxu0 0.0
    %729 = vmatpush1.msra.mxu0 0.0
    %730 = vmatprep.subr.mxu0 0.0
    %731 = vmatpush1.msra.mxu0 0.0
    %732 = vmatprep.subr.mxu0 0.0
    %733 = vmatpush1.msra.mxu0 0.0
    %734 = vmatprep.subr.mxu0 0.0
    %735 = vmatpush1.msra.mxu0 0.0
    %736 = vmatprep.subr.mxu0 0.0
    %737 = vmatpush1.msra.mxu0 0.0
    %738 = vmatprep.subr.mxu0 0.0
    %739 = vmatpush1.msra.mxu0 0.0
    %740 = vmatprep.subr.mxu0 0.0
    %741 = vmatpush1.msra.mxu0 0.0
    %742 = vmatprep.subr.mxu0 0.0
    %743 = vmatpush1.msra.mxu0 0.0
    %744 = vmatprep.subr.mxu0 0.0
    %745 = vmatpush1.msra.mxu0 0.0
    %746 = vmatprep.subr.mxu0 0.0
    %747 = vmatpush1.msra.mxu0 0.0
    %748 = vmatprep.subr.mxu0 0.0
    %749 = vmatpush1.msra.mxu0 0.0
    %750 = vmatprep.subr.mxu0 0.0
    %751 = vmatpush1.msra.mxu0 0.0
    %752 = vmatprep.subr.mxu0 0.0
    %753 = vmatpush1.msra.mxu0 0.0
    %754 = vmatprep.subr.mxu0 0.0
    %755 = vmatpush1.msra.mxu0 0.0
    %756 = vmatprep.subr.mxu0 0.0
    %757 = vmatpush1.msra.mxu0 0.0
    %758 = vmatprep.subr.mxu0 0.0
    %759 = vmatpush1.msra.mxu0 0.0
    %760 = vmatprep.subr.mxu0 0.0
    %761 = vmatpush1.msra.mxu0 0.0
    %762 = vmatprep.subr.mxu0 0.0
    %763 = vmatpush1.msra.mxu0 0.0
    %764 = vmatprep.subr.mxu0 0.0
    %765 = vmatpush1.msra.mxu0 0.0
    %766 = vmatprep.subr.mxu0 0.0
    %767 = vmatpush1.msra.mxu0 0.0
    %768 = vmatprep.subr.mxu0 0.0
    %769 = vmatpush1.msra.mxu0 0.0
    %770 = vmatprep.subr.mxu0 0.0
    %771 = vmatpush1.msra.mxu0 0.0
    %772 = vmatprep.subr.mxu0 0.0
    %773 = vmatpush1.msra.mxu0 0.0
    %774 = vmatprep.subr.mxu0 0.0
    %775 = vmatpush1.msra.mxu0 0.0
    %776 = vmatprep.subr.mxu0 0.0
    %777 = vmatpush1.msra.mxu0 0.0
    %778 = vmatprep.subr.mxu0 0.0
    %779 = vmatpush1.msra.mxu0 0.0
    %780 = vmatprep.subr.mxu0 0.0
    %781 = vmatpush1.msra.mxu0 0.0
    %782 = vmatprep.subr.mxu0 0.0
    %783 = vmatpush1.msra.mxu0 0.0
    %784 = vmatprep.subr.mxu0 0.0
    %785 = vmatpush1.msra.mxu0 0.0
    %786 = vmatprep.subr.mxu0 0.0
    %787 = vmatpush1.msra.mxu0 0.0
    %788 = vmatprep.subr.mxu0 0.0
    %789 = vmatpush1.msra.mxu0 0.0
    %790 = vmatprep.mubr.f32.mxu0 0.0
    %791 = vmatmul.mubr.f32.gmra.mrb[0].mxu0 %v724
    %v792 = vpop.f32.mrb[0].mxu0
    %v793 = vadd.f32 0.0, %v792
    %v794 = vpop.f32.mrb[0].mxu0
    %795 = vdwg.mxu0
    %796 = vrot.lane.b32.xlu0 %v451, 120
    %v797 = vpop.permute.xlu0 %796
    %798 = vrot.lane.b32.xlu0 %v451, 88
    %v799 = vpop.permute.xlu0 %798
    %v800 = vsel %vm466, %v797, 0
    %v802 = vsel %vm466, %v799, 0
    %804 = vmatprep.subr.mxu0 0.0
    %805 = vmatpush1.xpose.msra.mxu0 %v802
    %806 = vmatprep.subr.mxu0 0.0
    %807 = vmatpush1.xpose.msra.mxu0 0.0
    %808 = vmatprep.subr.mxu0 0.0
    %809 = vmatpush1.xpose.msra.mxu0 0.0
    %810 = vmatprep.subr.mxu0 0.0
    %811 = vmatpush1.xpose.msra.mxu0 0.0
    %812 = vmatprep.subr.mxu0 0.0
    %813 = vmatpush1.xpose.msra.mxu0 0.0
    %814 = vmatprep.subr.mxu0 0.0
    %815 = vmatpush1.xpose.msra.mxu0 0.0
    %816 = vmatprep.subr.mxu0 0.0
    %817 = vmatpush1.xpose.msra.mxu0 0.0
    %818 = vmatprep.subr.mxu0 0.0
    %819 = vmatpush1.xpose.msra.mxu0 0.0
    %820 = vmatprep.subr.mxu0 0.0
    %821 = vmatpush1.xpose.msra.mxu0 0.0
    %822 = vmatprep.subr.mxu0 0.0
    %823 = vmatpush1.xpose.msra.mxu0 0.0
    %824 = vmatprep.subr.mxu0 0.0
    %825 = vmatpush1.xpose.msra.mxu0 0.0
    %826 = vmatprep.subr.mxu0 0.0
    %827 = vmatpush1.xpose.msra.mxu0 0.0
    %828 = vmatprep.subr.mxu0 0.0
    %829 = vmatpush1.xpose.msra.mxu0 0.0
    %830 = vmatprep.subr.mxu0 0.0
    %831 = vmatpush1.xpose.msra.mxu0 0.0
    %832 = vmatprep.subr.mxu0 0.0
    %833 = vmatpush1.xpose.msra.mxu0 0.0
    %834 = vmatprep.subr.mxu0 0.0
    %835 = vmatpush1.xpose.msra.mxu0 0.0
    %836 = vmatprep.subr.mxu0 0.0
    %837 = vmatpush1.xpose.msra.mxu0 0.0
    %838 = vmatprep.subr.mxu0 0.0
    %839 = vmatpush1.xpose.msra.mxu0 0.0
    %840 = vmatprep.subr.mxu0 0.0
    %841 = vmatpush1.xpose.msra.mxu0 0.0
    %842 = vmatprep.subr.mxu0 0.0
    %843 = vmatpush1.xpose.msra.mxu0 0.0
    %844 = vmatprep.subr.mxu0 0.0
    %845 = vmatpush1.xpose.msra.mxu0 0.0
    %846 = vmatprep.subr.mxu0 0.0
    %847 = vmatpush1.xpose.msra.mxu0 0.0
    %848 = vmatprep.subr.mxu0 0.0
    %849 = vmatpush1.xpose.msra.mxu0 0.0
    %850 = vmatprep.subr.mxu0 0.0
    %851 = vmatpush1.xpose.msra.mxu0 0.0
    %852 = vmatprep.subr.mxu0 0.0
    %853 = vmatpush1.xpose.msra.mxu0 0.0
    %854 = vmatprep.subr.mxu0 0.0
    %855 = vmatpush1.xpose.msra.mxu0 0.0
    %856 = vmatprep.subr.mxu0 0.0
    %857 = vmatpush1.xpose.msra.mxu0 0.0
    %858 = vmatprep.subr.mxu0 0.0
    %859 = vmatpush1.xpose.msra.mxu0 0.0
    %860 = vmatprep.subr.mxu0 0.0
    %861 = vmatpush1.xpose.msra.mxu0 0.0
    %862 = vmatprep.subr.mxu0 0.0
    %863 = vmatpush1.xpose.msra.mxu0 0.0
    %864 = vmatprep.subr.mxu0 0.0
    %865 = vmatpush1.xpose.msra.mxu0 0.0
    %866 = vmatprep.subr.mxu0 0.0
    %867 = vmatpush1.xpose.msra.mxu0 0.0
    %868 = vmatprep.mubr.f32.mxu0 0.0
    %869 = vmatmul.mubr.f32.gmra.mrb[0].mxu0 %v800
    %v870 = vpop.f32.mrb[0].mxu0
    %v871 = vadd.f32 0.0, %v870
    %v872 = vpop.f32.mrb[0].mxu0
    %873 = vdwg.mxu0
    %874 = vrot.lane.b32.xlu0 %v456, 120
    %v875 = vpop.permute.xlu0 %874
    %876 = vrot.lane.b32.xlu0 %v456, 88
    %v877 = vpop.permute.xlu0 %876
    %v878 = vsel %vm466, %v875, 0
    %v880 = vsel %vm466, %v877, 0
    %882 = vmatprep.subr.mxu0 0.0
    %883 = vmatpush1.xpose.msra.mxu0 %v880
    %884 = vmatprep.subr.mxu0 0.0
    %885 = vmatpush1.xpose.msra.mxu0 0.0
    %886 = vmatprep.subr.mxu0 0.0
    %887 = vmatpush1.xpose.msra.mxu0 0.0
    %888 = vmatprep.subr.mxu0 0.0
    %889 = vmatpush1.xpose.msra.mxu0 0.0
    %890 = vmatprep.subr.mxu0 0.0
    %891 = vmatpush1.xpose.msra.mxu0 0.0
    %892 = vmatprep.subr.mxu0 0.0
    %893 = vmatpush1.xpose.msra.mxu0 0.0
    %894 = vmatprep.subr.mxu0 0.0
    %895 = vmatpush1.xpose.msra.mxu0 0.0
    %896 = vmatprep.subr.mxu0 0.0
    %897 = vmatpush1.xpose.msra.mxu0 0.0
    %898 = vmatprep.subr.mxu0 0.0
    %899 = vmatpush1.xpose.msra.mxu0 0.0
    %900 = vmatprep.subr.mxu0 0.0
    %901 = vmatpush1.xpose.msra.mxu0 0.0
    %902 = vmatprep.subr.mxu0 0.0
    %903 = vmatpush1.xpose.msra.mxu0 0.0
    %904 = vmatprep.subr.mxu0 0.0
    %905 = vmatpush1.xpose.msra.mxu0 0.0
    %906 = vmatprep.subr.mxu0 0.0
    %907 = vmatpush1.xpose.msra.mxu0 0.0
    %908 = vmatprep.subr.mxu0 0.0
    %909 = vmatpush1.xpose.msra.mxu0 0.0
    %910 = vmatprep.subr.mxu0 0.0
    %911 = vmatpush1.xpose.msra.mxu0 0.0
    %912 = vmatprep.subr.mxu0 0.0
    %913 = vmatpush1.xpose.msra.mxu0 0.0
    %914 = vmatprep.subr.mxu0 0.0
    %915 = vmatpush1.xpose.msra.mxu0 0.0
    %916 = vmatprep.subr.mxu0 0.0
    %917 = vmatpush1.xpose.msra.mxu0 0.0
    %918 = vmatprep.subr.mxu0 0.0
    %919 = vmatpush1.xpose.msra.mxu0 0.0
    %920 = vmatprep.subr.mxu0 0.0
    %921 = vmatpush1.xpose.msra.mxu0 0.0
    %922 = vmatprep.subr.mxu0 0.0
    %923 = vmatpush1.xpose.msra.mxu0 0.0
    %924 = vmatprep.subr.mxu0 0.0
    %925 = vmatpush1.xpose.msra.mxu0 0.0
    %926 = vmatprep.subr.mxu0 0.0
    %927 = vmatpush1.xpose.msra.mxu0 0.0
    %928 = vmatprep.subr.mxu0 0.0
    %929 = vmatpush1.xpose.msra.mxu0 0.0
    %930 = vmatprep.subr.mxu0 0.0
    %931 = vmatpush1.xpose.msra.mxu0 0.0
    %932 = vmatprep.subr.mxu0 0.0
    %933 = vmatpush1.xpose.msra.mxu0 0.0
    %934 = vmatprep.subr.mxu0 0.0
    %935 = vmatpush1.xpose.msra.mxu0 0.0
    %936 = vmatprep.subr.mxu0 0.0
    %937 = vmatpush1.xpose.msra.mxu0 0.0
    %938 = vmatprep.subr.mxu0 0.0
    %939 = vmatpush1.xpose.msra.mxu0 0.0
    %940 = vmatprep.subr.mxu0 0.0
    %941 = vmatpush1.xpose.msra.mxu0 0.0
    %942 = vmatprep.subr.mxu0 0.0
    %943 = vmatpush1.xpose.msra.mxu0 0.0
    %944 = vmatprep.subr.mxu0 0.0
    %945 = vmatpush1.xpose.msra.mxu0 0.0
    %946 = vmatprep.mubr.f32.mxu0 0.0
    %947 = vmatmul.mubr.f32.gmra.mrb[0].mxu0 %v878
    %v948 = vpop.f32.mrb[0].mxu0
    %v949 = vadd.f32 0.0, %v948
    %v950 = vpop.f32.mrb[0].mxu0
    %951 = vdwg.mxu0
    %v952 = vmul.f32 %v871, 0.35355338
    %v953 = vmul.f32 %v949, 0.35355338
    %v954 = vadd.f32 %v952, %v360
    %v955 = vadd.f32 %v953, %v364
    %v956 = vsel %vm466, %v954, -inf
    %957 = vmax.xlane.f32.xlu0 %v956
    %v958 = vpop.xlane.xlu0 %957
    %v959 = vsel %vm466, %v955, -inf
    %960 = vmax.xlane.f32.xlu0 %v959
    %v961 = vpop.xlane.xlu0 %960
    %v962 = vsub.f32 %v954, %v958
    %v963 = vsub.f32 %v955, %v961
    %v964 = vmul.f32 %v962, 1.442695
    %v965 = vpow.pop %v964
    %v966 = vmul.f32 %v963, 1.442695
    %v967 = vpow.pop %v966
    %v968 = vsel %vm466, %v965, 0.0
    %969 = vadd.xlane.f32.xlu0 %v968
    %v970 = vpop.xlane.xlu0 %969
    %v971 = vsel %vm466, %v967, 0.0
    %972 = vadd.xlane.f32.xlu0 %v971
    %v973 = vpop.xlane.xlu0 %972
    %v974 = vrcp.pop %v970
    %v975 = vrcp.pop %v973
    %v976 = vmul.f32 %v965, %v974
    %v977 = vmul.f32 %v967, %v975
    %978 = vrot.lane.b32.xlu0 %v451, 56
    %v979 = vpop.permute.xlu0 %978
    %v982 = vsel %vm466, %v976, 0
    %984 = vmatprep.subr.mxu0 0.0
    %985 = vmatpush1.msra.mxu0 %v979
    %986 = vmatprep.subr.mxu0 0.0
    %987 = vmatpush1.msra.mxu0 0.0
    %988 = vmatprep.subr.mxu0 0.0
    %989 = vmatpush1.msra.mxu0 0.0
    %990 = vmatprep.subr.mxu0 0.0
    %991 = vmatpush1.msra.mxu0 0.0
    %992 = vmatprep.subr.mxu0 0.0
    %993 = vmatpush1.msra.mxu0 0.0
    %994 = vmatprep.subr.mxu0 0.0
    %995 = vmatpush1.msra.mxu0 0.0
    %996 = vmatprep.subr.mxu0 0.0
    %997 = vmatpush1.msra.mxu0 0.0
    %998 = vmatprep.subr.mxu0 0.0
    %999 = vmatpush1.msra.mxu0 0.0
    %1000 = vmatprep.subr.mxu0 0.0
    %1001 = vmatpush1.msra.mxu0 0.0
    %1002 = vmatprep.subr.mxu0 0.0
    %1003 = vmatpush1.msra.mxu0 0.0
    %1004 = vmatprep.subr.mxu0 0.0
    %1005 = vmatpush1.msra.mxu0 0.0
    %1006 = vmatprep.subr.mxu0 0.0
    %1007 = vmatpush1.msra.mxu0 0.0
    %1008 = vmatprep.subr.mxu0 0.0
    %1009 = vmatpush1.msra.mxu0 0.0
    %1010 = vmatprep.subr.mxu0 0.0
    %1011 = vmatpush1.msra.mxu0 0.0
    %1012 = vmatprep.subr.mxu0 0.0
    %1013 = vmatpush1.msra.mxu0 0.0
    %1014 = vmatprep.subr.mxu0 0.0
    %1015 = vmatpush1.msra.mxu0 0.0
    %1016 = vmatprep.subr.mxu0 0.0
    %1017 = vmatpush1.msra.mxu0 0.0
    %1018 = vmatprep.subr.mxu0 0.0
    %1019 = vmatpush1.msra.mxu0 0.0
    %1020 = vmatprep.subr.mxu0 0.0
    %1021 = vmatpush1.msra.mxu0 0.0
    %1022 = vmatprep.subr.mxu0 0.0
    %1023 = vmatpush1.msra.mxu0 0.0
    %1024 = vmatprep.subr.mxu0 0.0
    %1025 = vmatpush1.msra.mxu0 0.0
    %1026 = vmatprep.subr.mxu0 0.0
    %1027 = vmatpush1.msra.mxu0 0.0
    %1028 = vmatprep.subr.mxu0 0.0
    %1029 = vmatpush1.msra.mxu0 0.0
    %1030 = vmatprep.subr.mxu0 0.0
    %1031 = vmatpush1.msra.mxu0 0.0
    %1032 = vmatprep.subr.mxu0 0.0
    %1033 = vmatpush1.msra.mxu0 0.0
    %1034 = vmatprep.subr.mxu0 0.0
    %1035 = vmatpush1.msra.mxu0 0.0
    %1036 = vmatprep.subr.mxu0 0.0
    %1037 = vmatpush1.msra.mxu0 0.0
    %1038 = vmatprep.subr.mxu0 0.0
    %1039 = vmatpush1.msra.mxu0 0.0
    %1040 = vmatprep.subr.mxu0 0.0
    %1041 = vmatpush1.msra.mxu0 0.0
    %1042 = vmatprep.subr.mxu0 0.0
    %1043 = vmatpush1.msra.mxu0 0.0
    %1044 = vmatprep.subr.mxu0 0.0
    %1045 = vmatpush1.msra.mxu0 0.0
    %1046 = vmatprep.subr.mxu0 0.0
    %1047 = vmatpush1.msra.mxu0 0.0
    %1048 = vmatprep.mubr.f32.mxu0 0.0
    %1049 = vmatmul.mubr.f32.gmra.mrb[0].mxu0 %v982
    %v1050 = vpop.f32.mrb[0].mxu0
    %v1051 = vadd.f32 0.0, %v1050
    %v1052 = vpop.f32.mrb[0].mxu0
    %1053 = vdwg.mxu0
    %1054 = vrot.lane.b32.xlu0 %v456, 56
    %v1055 = vpop.permute.xlu0 %1054
    %v1058 = vsel %vm466, %v977, 0
    %1060 = vmatprep.subr.mxu0 0.0
    %1061 = vmatpush1.msra.mxu0 %v1055
    %1062 = vmatprep.subr.mxu0 0.0
    %1063 = vmatpush1.msra.mxu0 0.0
    %1064 = vmatprep.subr.mxu0 0.0
    %1065 = vmatpush1.msra.mxu0 0.0
    %1066 = vmatprep.subr.mxu0 0.0
    %1067 = vmatpush1.msra.mxu0 0.0
    %1068 = vmatprep.subr.mxu0 0.0
    %1069 = vmatpush1.msra.mxu0 0.0
    %1070 = vmatprep.subr.mxu0 0.0
    %1071 = vmatpush1.msra.mxu0 0.0
    %1072 = vmatprep.subr.mxu0 0.0
    %1073 = vmatpush1.msra.mxu0 0.0
    %1074 = vmatprep.subr.mxu0 0.0
    %1075 = vmatpush1.msra.mxu0 0.0
    %1076 = vmatprep.subr.mxu0 0.0
    %1077 = vmatpush1.msra.mxu0 0.0
    %1078 = vmatprep.subr.mxu0 0.0
    %1079 = vmatpush1.msra.mxu0 0.0
    %1080 = vmatprep.subr.mxu0 0.0
    %1081 = vmatpush1.msra.mxu0 0.0
    %1082 = vmatprep.subr.mxu0 0.0
    %1083 = vmatpush1.msra.mxu0 0.0
    %1084 = vmatprep.subr.mxu0 0.0
    %1085 = vmatpush1.msra.mxu0 0.0
    %1086 = vmatprep.subr.mxu0 0.0
    %1087 = vmatpush1.msra.mxu0 0.0
    %1088 = vmatprep.subr.mxu0 0.0
    %1089 = vmatpush1.msra.mxu0 0.0
    %1090 = vmatprep.subr.mxu0 0.0
    %1091 = vmatpush1.msra.mxu0 0.0
    %1092 = vmatprep.subr.mxu0 0.0
    %1093 = vmatpush1.msra.mxu0 0.0
    %1094 = vmatprep.subr.mxu0 0.0
    %1095 = vmatpush1.msra.mxu0 0.0
    %1096 = vmatprep.subr.mxu0 0.0
    %1097 = vmatpush1.msra.mxu0 0.0
    %1098 = vmatprep.subr.mxu0 0.0
    %1099 = vmatpush1.msra.mxu0 0.0
    %1100 = vmatprep.subr.mxu0 0.0
    %1101 = vmatpush1.msra.mxu0 0.0
    %1102 = vmatprep.subr.mxu0 0.0
    %1103 = vmatpush1.msra.mxu0 0.0
    %1104 = vmatprep.subr.mxu0 0.0
    %1105 = vmatpush1.msra.mxu0 0.0
    %1106 = vmatprep.subr.mxu0 0.0
    %1107 = vmatpush1.msra.mxu0 0.0
    %1108 = vmatprep.subr.mxu0 0.0
    %1109 = vmatpush1.msra.mxu0 0.0
    %1110 = vmatprep.subr.mxu0 0.0
    %1111 = vmatpush1.msra.mxu0 0.0
    %1112 = vmatprep.subr.mxu0 0.0
    %1113 = vmatpush1.msra.mxu0 0.0
    %1114 = vmatprep.subr.mxu0 0.0
    %1115 = vmatpush1.msra.mxu0 0.0
    %1116 = vmatprep.subr.mxu0 0.0
    %1117 = vmatpush1.msra.mxu0 0.0
    %1118 = vmatprep.subr.mxu0 0.0
    %1119 = vmatpush1.msra.mxu0 0.0
    %1120 = vmatprep.subr.mxu0 0.0
    %1121 = vmatpush1.msra.mxu0 0.0
    %1122 = vmatprep.subr.mxu0 0.0
    %1123 = vmatpush1.msra.mxu0 0.0
    %1124 = vmatprep.mubr.f32.mxu0 0.0
    %1125 = vmatmul.mubr.f32.gmra.mrb[0].mxu0 %v1058
    %v1126 = vpop.f32.mrb[0].mxu0
    %v1127 = vadd.f32 0.0, %v1126
    %v1128 = vpop.f32.mrb[0].mxu0
    %1129 = vdwg.mxu0
    %v1131 = vsel %vm466, %v1051, 0
    %v1134 = vsel %vm466, %v1127, 0
    %1136 = vmatprep.subr.mxu0 0.0
    %1137 = vmatpush1.msra.mxu0 %v460
    %1138 = vmatprep.subr.mxu0 0.0
    %1139 = vmatpush1.msra.mxu0 0.0
    %1140 = vmatprep.subr.mxu0 0.0
    %1141 = vmatpush1.msra.mxu0 0.0
    %1142 = vmatprep.subr.mxu0 0.0
    %1143 = vmatpush1.msra.mxu0 0.0
    %1144 = vmatprep.subr.mxu0 0.0
    %1145 = vmatpush1.msra.mxu0 0.0
    %1146 = vmatprep.subr.mxu0 0.0
    %1147 = vmatpush1.msra.mxu0 0.0
    %1148 = vmatprep.subr.mxu0 0.0
    %1149 = vmatpush1.msra.mxu0 0.0
    %1150 = vmatprep.subr.mxu0 0.0
    %1151 = vmatpush1.msra.mxu0 0.0
    %1152 = vmatprep.subr.mxu0 0.0
    %1153 = vmatpush1.msra.mxu0 0.0
    %1154 = vmatprep.subr.mxu0 0.0
    %1155 = vmatpush1.msra.mxu0 0.0
    %1156 = vmatprep.subr.mxu0 0.0
    %1157 = vmatpush1.msra.mxu0 0.0
    %1158 = vmatprep.subr.mxu0 0.0
    %1159 = vmatpush1.msra.mxu0 0.0
    %1160 = vmatprep.subr.mxu0 0.0
    %1161 = vmatpush1.msra.mxu0 0.0
    %1162 = vmatprep.subr.mxu0 0.0
    %1163 = vmatpush1.msra.mxu0 0.0
    %1164 = vmatprep.subr.mxu0 0.0
    %1165 = vmatpush1.msra.mxu0 0.0
    %1166 = vmatprep.subr.mxu0 0.0
    %1167 = vmatpush1.msra.mxu0 0.0
    %1168 = vmatprep.subr.mxu0 0.0
    %1169 = vmatpush1.msra.mxu0 0.0
    %1170 = vmatprep.subr.mxu0 0.0
    %1171 = vmatpush1.msra.mxu0 0.0
    %1172 = vmatprep.subr.mxu0 0.0
    %1173 = vmatpush1.msra.mxu0 0.0
    %1174 = vmatprep.subr.mxu0 0.0
    %1175 = vmatpush1.msra.mxu0 0.0
    %1176 = vmatprep.subr.mxu0 0.0
    %1177 = vmatpush1.msra.mxu0 0.0
    %1178 = vmatprep.subr.mxu0 0.0
    %1179 = vmatpush1.msra.mxu0 0.0
    %1180 = vmatprep.subr.mxu0 0.0
    %1181 = vmatpush1.msra.mxu0 0.0
    %1182 = vmatprep.subr.mxu0 0.0
    %1183 = vmatpush1.msra.mxu0 0.0
    %1184 = vmatprep.subr.mxu0 0.0
    %1185 = vmatpush1.msra.mxu0 0.0
    %1186 = vmatprep.subr.mxu0 0.0
    %1187 = vmatpush1.msra.mxu0 0.0
    %1188 = vmatprep.subr.mxu0 0.0
    %1189 = vmatpush1.msra.mxu0 0.0
    %1190 = vmatprep.subr.mxu0 0.0
    %1191 = vmatpush1.msra.mxu0 0.0
    %1192 = vmatprep.subr.mxu0 0.0
    %1193 = vmatpush1.msra.mxu0 0.0
    %1194 = vmatprep.subr.mxu0 0.0
    %1195 = vmatpush1.msra.mxu0 0.0
    %1196 = vmatprep.subr.mxu0 0.0
    %1197 = vmatpush1.msra.mxu0 0.0
    %1198 = vmatprep.subr.mxu0 0.0
    %1199 = vmatpush1.msra.mxu0 0.0
    %1200 = vmatprep.mubr.f32.mxu0 0.0
    %1201 = vmatmul.mubr.f32.gmra.mrb[0].mxu0 %v1131
    %v1202 = vpop.f32.mrb[0].mxu0
    %v1203 = vadd.f32 0.0, %v1202
    %v1204 = vpop.f32.mrb[0].mxu0
    %1205 = vmatprep.mubr.f32.mxu0 0.0
    %1206 = vmatmul.mubr.f32.gmra.mrb[0].mxu0 %v1134
    %v1207 = vpop.f32.mrb[0].mxu0
    %v1208 = vadd.f32 0.0, %v1207
    %v1209 = vpop.f32.mrb[0].mxu0
    %1210 = vdwg.mxu0
    %v1212 = vsel %vm466, %v717, 0
    %v1215 = vsel %vm466, %v793, 0
    %1217 = vmatprep.subr.mxu0 0.0
    %1218 = vmatpush1.msra.mxu0 %v459
    %1219 = vmatprep.subr.mxu0 0.0
    %1220 = vmatpush1.msra.mxu0 0.0
    %1221 = vmatprep.subr.mxu0 0.0
    %1222 = vmatpush1.msra.mxu0 0.0
    %1223 = vmatprep.subr.mxu0 0.0
    %1224 = vmatpush1.msra.mxu0 0.0
    %1225 = vmatprep.subr.mxu0 0.0
    %1226 = vmatpush1.msra.mxu0 0.0
    %1227 = vmatprep.subr.mxu0 0.0
    %1228 = vmatpush1.msra.mxu0 0.0
    %1229 = vmatprep.subr.mxu0 0.0
    %1230 = vmatpush1.msra.mxu0 0.0
    %1231 = vmatprep.subr.mxu0 0.0
    %1232 = vmatpush1.msra.mxu0 0.0
    %1233 = vmatprep.subr.mxu0 0.0
    %1234 = vmatpush1.msra.mxu0 0.0
    %1235 = vmatprep.subr.mxu0 0.0
    %1236 = vmatpush1.msra.mxu0 0.0
    %1237 = vmatprep.subr.mxu0 0.0
    %1238 = vmatpush1.msra.mxu0 0.0
    %1239 = vmatprep.subr.mxu0 0.0
    %1240 = vmatpush1.msra.mxu0 0.0
    %1241 = vmatprep.subr.mxu0 0.0
    %1242 = vmatpush1.msra.mxu0 0.0
    %1243 = vmatprep.subr.mxu0 0.0
    %1244 = vmatpush1.msra.mxu0 0.0
    %1245 = vmatprep.subr.mxu0 0.0
    %1246 = vmatpush1.msra.mxu0 0.0
    %1247 = vmatprep.subr.mxu0 0.0
    %1248 = vmatpush1.msra.mxu0 0.0
    %1249 = vmatprep.subr.mxu0 0.0
    %1250 = vmatpush1.msra.mxu0 0.0
    %1251 = vmatprep.subr.mxu0 0.0
    %1252 = vmatpush1.msra.mxu0 0.0
    %1253 = vmatprep.subr.mxu0 0.0
    %1254 = vmatpush1.msra.mxu0 0.0
    %1255 = vmatprep.subr.mxu0 0.0
    %1256 = vmatpush1.msra.mxu0 0.0
    %1257 = vmatprep.subr.mxu0 0.0
    %1258 = vmatpush1.msra.mxu0 0.0
    %1259 = vmatprep.subr.mxu0 0.0
    %1260 = vmatpush1.msra.mxu0 0.0
    %1261 = vmatprep.subr.mxu0 0.0
    %1262 = vmatpush1.msra.mxu0 0.0
    %1263 = vmatprep.subr.mxu0 0.0
    %1264 = vmatpush1.msra.mxu0 0.0
    %1265 = vmatprep.subr.mxu0 0.0
    %1266 = vmatpush1.msra.mxu0 0.0
    %1267 = vmatprep.subr.mxu0 0.0
    %1268 = vmatpush1.msra.mxu0 0.0
    %1269 = vmatprep.subr.mxu0 0.0
    %1270 = vmatpush1.msra.mxu0 0.0
    %1271 = vmatprep.subr.mxu0 0.0
    %1272 = vmatpush1.msra.mxu0 0.0
    %1273 = vmatprep.subr.mxu0 0.0
    %1274 = vmatpush1.msra.mxu0 0.0
    %1275 = vmatprep.subr.mxu0 0.0
    %1276 = vmatpush1.msra.mxu0 0.0
    %1277 = vmatprep.subr.mxu0 0.0
    %1278 = vmatpush1.msra.mxu0 0.0
    %1279 = vmatprep.subr.mxu0 0.0
    %1280 = vmatpush1.msra.mxu0 0.0
    %1281 = vmatprep.mubr.f32.mxu0 0.0
    %1282 = vmatmul.mubr.f32.gmra.mrb[0].mxu0 %v1212
    %v1283 = vpop.f32.mrb[0].mxu0
    %v1284 = vadd.f32 %v1203, %v1283
    %v1285 = vpop.f32.mrb[0].mxu0
    %1286 = vmatprep.mubr.f32.mxu0 0.0
    %1287 = vmatmul.mubr.f32.gmra.mrb[0].mxu0 %v1215
    %v1288 = vpop.f32.mrb[0].mxu0
    %v1289 = vadd.f32 %v1208, %v1288
    %v1290 = vpop.f32.mrb[0].mxu0
    %1291 = vdwg.mxu0
    %1292 = vrot.lane.b32.xlu0 %v451, 112
    %v1293 = vpop.permute.xlu0 %1292
    %1294 = vrot.lane.b32.xlu0 %v451, 80
    %v1295 = vpop.permute.xlu0 %1294
    %v1296 = vsel %vm466, %v1293, 0
    %v1298 = vsel %vm466, %v1295, 0
    %1300 = vmatprep.subr.mxu0 0.0
    %1301 = vmatpush1.xpose.msra.mxu0 %v1298
    %1302 = vmatprep.subr.mxu0 0.0
    %1303 = vmatpush1.xpose.msra.mxu0 0.0
    %1304 = vmatprep.subr.mxu0 0.0
    %1305 = vmatpush1.xpose.msra.mxu0 0.0
    %1306 = vmatprep.subr.mxu0 0.0
    %1307 = vmatpush1.xpose.msra.mxu0 0.0
    %1308 = vmatprep.subr.mxu0 0.0
    %1309 = vmatpush1.xpose.msra.mxu0 0.0
    %1310 = vmatprep.subr.mxu0 0.0
    %1311 = vmatpush1.xpose.msra.mxu0 0.0
    %1312 = vmatprep.subr.mxu0 0.0
    %1313 = vmatpush1.xpose.msra.mxu0 0.0
    %1314 = vmatprep.subr.mxu0 0.0
    %1315 = vmatpush1.xpose.msra.mxu0 0.0
    %1316 = vmatprep.subr.mxu0 0.0
    %1317 = vmatpush1.xpose.msra.mxu0 0.0
    %1318 = vmatprep.subr.mxu0 0.0
    %1319 = vmatpush1.xpose.msra.mxu0 0.0
    %1320 = vmatprep.subr.mxu0 0.0
    %1321 = vmatpush1.xpose.msra.mxu0 0.0
    %1322 = vmatprep.subr.mxu0 0.0
    %1323 = vmatpush1.xpose.msra.mxu0 0.0
    %1324 = vmatprep.subr.mxu0 0.0
    %1325 = vmatpush1.xpose.msra.mxu0 0.0
    %1326 = vmatprep.subr.mxu0 0.0
    %1327 = vmatpush1.xpose.msra.mxu0 0.0
    %1328 = vmatprep.subr.mxu0 0.0
    %1329 = vmatpush1.xpose.msra.mxu0 0.0
    %1330 = vmatprep.subr.mxu0 0.0
    %1331 = vmatpush1.xpose.msra.mxu0 0.0
    %1332 = vmatprep.subr.mxu0 0.0
    %1333 = vmatpush1.xpose.msra.mxu0 0.0
    %1334 = vmatprep.subr.mxu0 0.0
    %1335 = vmatpush1.xpose.msra.mxu0 0.0
    %1336 = vmatprep.subr.mxu0 0.0
    %1337 = vmatpush1.xpose.msra.mxu0 0.0
    %1338 = vmatprep.subr.mxu0 0.0
    %1339 = vmatpush1.xpose.msra.mxu0 0.0
    %1340 = vmatprep.subr.mxu0 0.0
    %1341 = vmatpush1.xpose.msra.mxu0 0.0
    %1342 = vmatprep.subr.mxu0 0.0
    %1343 = vmatpush1.xpose.msra.mxu0 0.0
    %1344 = vmatprep.subr.mxu0 0.0
    %1345 = vmatpush1.xpose.msra.mxu0 0.0
    %1346 = vmatprep.subr.mxu0 0.0
    %1347 = vmatpush1.xpose.msra.mxu0 0.0
    %1348 = vmatprep.subr.mxu0 0.0
    %1349 = vmatpush1.xpose.msra.mxu0 0.0
    %1350 = vmatprep.subr.mxu0 0.0
    %1351 = vmatpush1.xpose.msra.mxu0 0.0
    %1352 = vmatprep.subr.mxu0 0.0
    %1353 = vmatpush1.xpose.msra.mxu0 0.0
    %1354 = vmatprep.subr.mxu0 0.0
    %1355 = vmatpush1.xpose.msra.mxu0 0.0
    %1356 = vmatprep.subr.mxu0 0.0
    %1357 = vmatpush1.xpose.msra.mxu0 0.0
    %1358 = vmatprep.subr.mxu0 0.0
    %1359 = vmatpush1.xpose.msra.mxu0 0.0
    %1360 = vmatprep.subr.mxu0 0.0
    %1361 = vmatpush1.xpose.msra.mxu0 0.0
    %1362 = vmatprep.subr.mxu0 0.0
    %1363 = vmatpush1.xpose.msra.mxu0 0.0
    %1364 = vmatprep.mubr.f32.mxu0 0.0
    %1365 = vmatmul.mubr.f32.gmra.mrb[0].mxu0 %v1296
    %v1366 = vpop.f32.mrb[0].mxu0
    %v1367 = vadd.f32 0.0, %v1366
    %v1368 = vpop.f32.mrb[0].mxu0
    %1369 = vdwg.mxu0
    %1370 = vrot.lane.b32.xlu0 %v456, 112
    %v1371 = vpop.permute.xlu0 %1370
    %1372 = vrot.lane.b32.xlu0 %v456, 80
    %v1373 = vpop.permute.xlu0 %1372
    %v1374 = vsel %vm466, %v1371, 0
    %v1376 = vsel %vm466, %v1373, 0
    %1378 = vmatprep.subr.mxu0 0.0
    %1379 = vmatpush1.xpose.msra.mxu0 %v1376
    %1380 = vmatprep.subr.mxu0 0.0
    %1381 = vmatpush1.xpose.msra.mxu0 0.0
    %1382 = vmatprep.subr.mxu0 0.0
    %1383 = vmatpush1.xpose.msra.mxu0 0.0
    %1384 = vmatprep.subr.mxu0 0.0
    %1385 = vmatpush1.xpose.msra.mxu0 0.0
    %1386 = vmatprep.subr.mxu0 0.0
    %1387 = vmatpush1.xpose.msra.mxu0 0.0
    %1388 = vmatprep.subr.mxu0 0.0
    %1389 = vmatpush1.xpose.msra.mxu0 0.0
    %1390 = vmatprep.subr.mxu0 0.0
    %1391 = vmatpush1.xpose.msra.mxu0 0.0
    %1392 = vmatprep.subr.mxu0 0.0
    %1393 = vmatpush1.xpose.msra.mxu0 0.0
    %1394 = vmatprep.subr.mxu0 0.0
    %1395 = vmatpush1.xpose.msra.mxu0 0.0
    %1396 = vmatprep.subr.mxu0 0.0
    %1397 = vmatpush1.xpose.msra.mxu0 0.0
    %1398 = vmatprep.subr.mxu0 0.0
    %1399 = vmatpush1.xpose.msra.mxu0 0.0
    %1400 = vmatprep.subr.mxu0 0.0
    %1401 = vmatpush1.xpose.msra.mxu0 0.0
    %1402 = vmatprep.subr.mxu0 0.0
    %1403 = vmatpush1.xpose.msra.mxu0 0.0
    %1404 = vmatprep.subr.mxu0 0.0
    %1405 = vmatpush1.xpose.msra.mxu0 0.0
    %1406 = vmatprep.subr.mxu0 0.0
    %1407 = vmatpush1.xpose.msra.mxu0 0.0
    %1408 = vmatprep.subr.mxu0 0.0
    %1409 = vmatpush1.xpose.msra.mxu0 0.0
    %1410 = vmatprep.subr.mxu0 0.0
    %1411 = vmatpush1.xpose.msra.mxu0 0.0
    %1412 = vmatprep.subr.mxu0 0.0
    %1413 = vmatpush1.xpose.msra.mxu0 0.0
    %1414 = vmatprep.subr.mxu0 0.0
    %1415 = vmatpush1.xpose.msra.mxu0 0.0
    %1416 = vmatprep.subr.mxu0 0.0
    %1417 = vmatpush1.xpose.msra.mxu0 0.0
    %1418 = vmatprep.subr.mxu0 0.0
    %1419 = vmatpush1.xpose.msra.mxu0 0.0
    %1420 = vmatprep.subr.mxu0 0.0
    %1421 = vmatpush1.xpose.msra.mxu0 0.0
    %1422 = vmatprep.subr.mxu0 0.0
    %1423 = vmatpush1.xpose.msra.mxu0 0.0
    %1424 = vmatprep.subr.mxu0 0.0
    %1425 = vmatpush1.xpose.msra.mxu0 0.0
    %1426 = vmatprep.subr.mxu0 0.0
    %1427 = vmatpush1.xpose.msra.mxu0 0.0
    %1428 = vmatprep.subr.mxu0 0.0
    %1429 = vmatpush1.xpose.msra.mxu0 0.0
    %1430 = vmatprep.subr.mxu0 0.0
    %1431 = vmatpush1.xpose.msra.mxu0 0.0
    %1432 = vmatprep.subr.mxu0 0.0
    %1433 = vmatpush1.xpose.msra.mxu0 0.0
    %1434 = vmatprep.subr.mxu0 0.0
    %1435 = vmatpush1.xpose.msra.mxu0 0.0
    %1436 = vmatprep.subr.mxu0 0.0
    %1437 = vmatpush1.xpose.msra.mxu0 0.0
    %1438 = vmatprep.subr.mxu0 0.0
    %1439 = vmatpush1.xpose.msra.mxu0 0.0
    %1440 = vmatprep.subr.mxu0 0.0
    %1441 = vmatpush1.xpose.msra.mxu0 0.0
    %1442 = vmatprep.mubr.f32.mxu0 0.0
    %1443 = vmatmul.mubr.f32.gmra.mrb[0].mxu0 %v1374
    %v1444 = vpop.f32.mrb[0].mxu0
    %v1445 = vadd.f32 0.0, %v1444
    %v1446 = vpop.f32.mrb[0].mxu0
    %1447 = vdwg.mxu0
    %v1448 = vmul.f32 %v1367, 0.35355338
    %v1449 = vmul.f32 %v1445, 0.35355338
    %v1450 = vadd.f32 %v1448, %v360
    %v1451 = vadd.f32 %v1449, %v364
    %v1452 = vsel %vm466, %v1450, -inf
    %1453 = vmax.xlane.f32.xlu0 %v1452
    %v1454 = vpop.xlane.xlu0 %1453
    %v1455 = vsel %vm466, %v1451, -inf
    %1456 = vmax.xlane.f32.xlu0 %v1455
    %v1457 = vpop.xlane.xlu0 %1456
    %v1458 = vsub.f32 %v1450, %v1454
    %v1459 = vsub.f32 %v1451, %v1457
    %v1460 = vmul.f32 %v1458, 1.442695
    %v1461 = vpow.pop %v1460
    %v1462 = vmul.f32 %v1459, 1.442695
    %v1463 = vpow.pop %v1462
    %v1464 = vsel %vm466, %v1461, 0.0
    %1465 = vadd.xlane.f32.xlu0 %v1464
    %v1466 = vpop.xlane.xlu0 %1465
    %v1467 = vsel %vm466, %v1463, 0.0
    %1468 = vadd.xlane.f32.xlu0 %v1467
    %v1469 = vpop.xlane.xlu0 %1468
    %v1470 = vrcp.pop %v1466
    %v1471 = vrcp.pop %v1469
    %v1472 = vmul.f32 %v1461, %v1470
    %v1473 = vmul.f32 %v1463, %v1471
    %1474 = vrot.lane.b32.xlu0 %v451, 48
    %v1475 = vpop.permute.xlu0 %1474
    %v1478 = vsel %vm466, %v1472, 0
    %1480 = vmatprep.subr.mxu0 0.0
    %1481 = vmatpush1.msra.mxu0 %v1475
    %1482 = vmatprep.subr.mxu0 0.0
    %1483 = vmatpush1.msra.mxu0 0.0
    %1484 = vmatprep.subr.mxu0 0.0
    %1485 = vmatpush1.msra.mxu0 0.0
    %1486 = vmatprep.subr.mxu0 0.0
    %1487 = vmatpush1.msra.mxu0 0.0
    %1488 = vmatprep.subr.mxu0 0.0
    %1489 = vmatpush1.msra.mxu0 0.0
    %1490 = vmatprep.subr.mxu0 0.0
    %1491 = vmatpush1.msra.mxu0 0.0
    %1492 = vmatprep.subr.mxu0 0.0
    %1493 = vmatpush1.msra.mxu0 0.0
    %1494 = vmatprep.subr.mxu0 0.0
    %1495 = vmatpush1.msra.mxu0 0.0
    %1496 = vmatprep.subr.mxu0 0.0
    %1497 = vmatpush1.msra.mxu0 0.0
    %1498 = vmatprep.subr.mxu0 0.0
    %1499 = vmatpush1.msra.mxu0 0.0
    %1500 = vmatprep.subr.mxu0 0.0
    %1501 = vmatpush1.msra.mxu0 0.0
    %1502 = vmatprep.subr.mxu0 0.0
    %1503 = vmatpush1.msra.mxu0 0.0
    %1504 = vmatprep.subr.mxu0 0.0
    %1505 = vmatpush1.msra.mxu0 0.0
    %1506 = vmatprep.subr.mxu0 0.0
    %1507 = vmatpush1.msra.mxu0 0.0
    %1508 = vmatprep.subr.mxu0 0.0
    %1509 = vmatpush1.msra.mxu0 0.0
    %1510 = vmatprep.subr.mxu0 0.0
    %1511 = vmatpush1.msra.mxu0 0.0
    %1512 = vmatprep.subr.mxu0 0.0
    %1513 = vmatpush1.msra.mxu0 0.0
    %1514 = vmatprep.subr.mxu0 0.0
    %1515 = vmatpush1.msra.mxu0 0.0
    %1516 = vmatprep.subr.mxu0 0.0
    %1517 = vmatpush1.msra.mxu0 0.0
    %1518 = vmatprep.subr.mxu0 0.0
    %1519 = vmatpush1.msra.mxu0 0.0
    %1520 = vmatprep.subr.mxu0 0.0
    %1521 = vmatpush1.msra.mxu0 0.0
    %1522 = vmatprep.subr.mxu0 0.0
    %1523 = vmatpush1.msra.mxu0 0.0
    %1524 = vmatprep.subr.mxu0 0.0
    %1525 = vmatpush1.msra.mxu0 0.0
    %1526 = vmatprep.subr.mxu0 0.0
    %1527 = vmatpush1.msra.mxu0 0.0
    %1528 = vmatprep.subr.mxu0 0.0
    %1529 = vmatpush1.msra.mxu0 0.0
    %1530 = vmatprep.subr.mxu0 0.0
    %1531 = vmatpush1.msra.mxu0 0.0
    %1532 = vmatprep.subr.mxu0 0.0
    %1533 = vmatpush1.msra.mxu0 0.0
    %1534 = vmatprep.subr.mxu0 0.0
    %1535 = vmatpush1.msra.mxu0 0.0
    %1536 = vmatprep.subr.mxu0 0.0
    %1537 = vmatpush1.msra.mxu0 0.0
    %1538 = vmatprep.subr.mxu0 0.0
    %1539 = vmatpush1.msra.mxu0 0.0
    %1540 = vmatprep.subr.mxu0 0.0
    %1541 = vmatpush1.msra.mxu0 0.0
    %1542 = vmatprep.subr.mxu0 0.0
    %1543 = vmatpush1.msra.mxu0 0.0
    %1544 = vmatprep.mubr.f32.mxu0 0.0
    %1545 = vmatmul.mubr.f32.gmra.mrb[0].mxu0 %v1478
    %v1546 = vpop.f32.mrb[0].mxu0
    %v1547 = vadd.f32 0.0, %v1546
    %v1548 = vpop.f32.mrb[0].mxu0
    %1549 = vdwg.mxu0
    %1550 = vrot.lane.b32.xlu0 %v456, 48
    %v1551 = vpop.permute.xlu0 %1550
    %v1554 = vsel %vm466, %v1473, 0
    %1556 = vmatprep.subr.mxu0 0.0
    %1557 = vmatpush1.msra.mxu0 %v1551
    %1558 = vmatprep.subr.mxu0 0.0
    %1559 = vmatpush1.msra.mxu0 0.0
    %1560 = vmatprep.subr.mxu0 0.0
    %1561 = vmatpush1.msra.mxu0 0.0
    %1562 = vmatprep.subr.mxu0 0.0
    %1563 = vmatpush1.msra.mxu0 0.0
    %1564 = vmatprep.subr.mxu0 0.0
    %1565 = vmatpush1.msra.mxu0 0.0
    %1566 = vmatprep.subr.mxu0 0.0
    %1567 = vmatpush1.msra.mxu0 0.0
    %1568 = vmatprep.subr.mxu0 0.0
    %1569 = vmatpush1.msra.mxu0 0.0
    %1570 = vmatprep.subr.mxu0 0.0
    %1571 = vmatpush1.msra.mxu0 0.0
    %1572 = vmatprep.subr.mxu0 0.0
    %1573 = vmatpush1.msra.mxu0 0.0
    %1574 = vmatprep.subr.mxu0 0.0
    %1575 = vmatpush1.msra.mxu0 0.0
    %1576 = vmatprep.subr.mxu0 0.0
    %1577 = vmatpush1.msra.mxu0 0.0
    %1578 = vmatprep.subr.mxu0 0.0
    %1579 = vmatpush1.msra.mxu0 0.0
    %1580 = vmatprep.subr.mxu0 0.0
    %1581 = vmatpush1.msra.mxu0 0.0
    %1582 = vmatprep.subr.mxu0 0.0
    %1583 = vmatpush1.msra.mxu0 0.0
    %1584 = vmatprep.subr.mxu0 0.0
    %1585 = vmatpush1.msra.mxu0 0.0
    %1586 = vmatprep.subr.mxu0 0.0
    %1587 = vmatpush1.msra.mxu0 0.0
    %1588 = vmatprep.subr.mxu0 0.0
    %1589 = vmatpush1.msra.mxu0 0.0
    %1590 = vmatprep.subr.mxu0 0.0
    %1591 = vmatpush1.msra.mxu0 0.0
    %1592 = vmatprep.subr.mxu0 0.0
    %1593 = vmatpush1.msra.mxu0 0.0
    %1594 = vmatprep.subr.mxu0 0.0
    %1595 = vmatpush1.msra.mxu0 0.0
    %1596 = vmatprep.subr.mxu0 0.0
    %1597 = vmatpush1.msra.mxu0 0.0
    %1598 = vmatprep.subr.mxu0 0.0
    %1599 = vmatpush1.msra.mxu0 0.0
    %1600 = vmatprep.subr.mxu0 0.0
    %1601 = vmatpush1.msra.mxu0 0.0
    %1602 = vmatprep.subr.mxu0 0.0
    %1603 = vmatpush1.msra.mxu0 0.0
    %1604 = vmatprep.subr.mxu0 0.0
    %1605 = vmatpush1.msra.mxu0 0.0
    %1606 = vmatprep.subr.mxu0 0.0
    %1607 = vmatpush1.msra.mxu0 0.0
    %1608 = vmatprep.subr.mxu0 0.0
    %1609 = vmatpush1.msra.mxu0 0.0
    %1610 = vmatprep.subr.mxu0 0.0
    %1611 = vmatpush1.msra.mxu0 0.0
    %1612 = vmatprep.subr.mxu0 0.0
    %1613 = vmatpush1.msra.mxu0 0.0
    %1614 = vmatprep.subr.mxu0 0.0
    %1615 = vmatpush1.msra.mxu0 0.0
    %1616 = vmatprep.subr.mxu0 0.0
    %1617 = vmatpush1.msra.mxu0 0.0
    %1618 = vmatprep.subr.mxu0 0.0
    %1619 = vmatpush1.msra.mxu0 0.0
    %1620 = vmatprep.mubr.f32.mxu0 0.0
    %1621 = vmatmul.mubr.f32.gmra.mrb[0].mxu0 %v1554
    %v1622 = vpop.f32.mrb[0].mxu0
    %v1623 = vadd.f32 0.0, %v1622
    %v1624 = vpop.f32.mrb[0].mxu0
    %1625 = vdwg.mxu0
    %v1627 = vsel %vm466, %v1547, 0
    %v1630 = vsel %vm466, %v1623, 0
    %1632 = vmatprep.subr.mxu0 0.0
    %1633 = vmatpush1.msra.mxu0 %v461
    %1634 = vmatprep.subr.mxu0 0.0
    %1635 = vmatpush1.msra.mxu0 0.0
    %1636 = vmatprep.subr.mxu0 0.0
    %1637 = vmatpush1.msra.mxu0 0.0
    %1638 = vmatprep.subr.mxu0 0.0
    %1639 = vmatpush1.msra.mxu0 0.0
    %1640 = vmatprep.subr.mxu0 0.0
    %1641 = vmatpush1.msra.mxu0 0.0
    %1642 = vmatprep.subr.mxu0 0.0
    %1643 = vmatpush1.msra.mxu0 0.0
    %1644 = vmatprep.subr.mxu0 0.0
    %1645 = vmatpush1.msra.mxu0 0.0
    %1646 = vmatprep.subr.mxu0 0.0
    %1647 = vmatpush1.msra.mxu0 0.0
    %1648 = vmatprep.subr.mxu0 0.0
    %1649 = vmatpush1.msra.mxu0 0.0
    %1650 = vmatprep.subr.mxu0 0.0
    %1651 = vmatpush1.msra.mxu0 0.0
    %1652 = vmatprep.subr.mxu0 0.0
    %1653 = vmatpush1.msra.mxu0 0.0
    %1654 = vmatprep.subr.mxu0 0.0
    %1655 = vmatpush1.msra.mxu0 0.0
    %1656 = vmatprep.subr.mxu0 0.0
    %1657 = vmatpush1.msra.mxu0 0.0
    %1658 = vmatprep.subr.mxu0 0.0
    %1659 = vmatpush1.msra.mxu0 0.0
    %1660 = vmatprep.subr.mxu0 0.0
    %1661 = vmatpush1.msra.mxu0 0.0
    %1662 = vmatprep.subr.mxu0 0.0
    %1663 = vmatpush1.msra.mxu0 0.0
    %1664 = vmatprep.subr.mxu0 0.0
    %1665 = vmatpush1.msra.mxu0 0.0
    %1666 = vmatprep.subr.mxu0 0.0
    %1667 = vmatpush1.msra.mxu0 0.0
    %1668 = vmatprep.subr.mxu0 0.0
    %1669 = vmatpush1.msra.mxu0 0.0
    %1670 = vmatprep.subr.mxu0 0.0
    %1671 = vmatpush1.msra.mxu0 0.0
    %1672 = vmatprep.subr.mxu0 0.0
    %1673 = vmatpush1.msra.mxu0 0.0
    %1674 = vmatprep.subr.mxu0 0.0
    %1675 = vmatpush1.msra.mxu0 0.0
    %1676 = vmatprep.subr.mxu0 0.0
    %1677 = vmatpush1.msra.mxu0 0.0
    %1678 = vmatprep.subr.mxu0 0.0
    %1679 = vmatpush1.msra.mxu0 0.0
    %1680 = vmatprep.subr.mxu0 0.0
    %1681 = vmatpush1.msra.mxu0 0.0
    %1682 = vmatprep.subr.mxu0 0.0
    %1683 = vmatpush1.msra.mxu0 0.0
    %1684 = vmatprep.subr.mxu0 0.0
    %1685 = vmatpush1.msra.mxu0 0.0
    %1686 = vmatprep.subr.mxu0 0.0
    %1687 = vmatpush1.msra.mxu0 0.0
    %1688 = vmatprep.subr.mxu0 0.0
    %1689 = vmatpush1.msra.mxu0 0.0
    %1690 = vmatprep.subr.mxu0 0.0
    %1691 = vmatpush1.msra.mxu0 0.0
    %1692 = vmatprep.subr.mxu0 0.0
    %1693 = vmatpush1.msra.mxu0 0.0
    %1694 = vmatprep.subr.mxu0 0.0
    %1695 = vmatpush1.msra.mxu0 0.0
    %1696 = vmatprep.mubr.f32.mxu0 0.0
    %1697 = vmatmul.mubr.f32.gmra.mrb[0].mxu0 %v1627
    %v1698 = vpop.f32.mrb[0].mxu0
    %v1699 = vadd.f32 0.0, %v1698
    %v1700 = vpop.f32.mrb[0].mxu0
    %1701 = vmatprep.mubr.f32.mxu0 0.0
    %1702 = vmatmul.mubr.f32.gmra.mrb[0].mxu0 %v1630
    %v1703 = vpop.f32.mrb[0].mxu0
    %v1704 = vadd.f32 0.0, %v1703
    %v1705 = vpop.f32.mrb[0].mxu0
    %1706 = vdwg.mxu0
    %v1707 = vadd.f32 %v1284, %v1699
    %v1708 = vadd.f32 %v1289, %v1704
    %1709 = vrot.lane.b32.xlu0 %v451, 104
    %v1710 = vpop.permute.xlu0 %1709
    %1711 = vrot.lane.b32.xlu0 %v451, 72
    %v1712 = vpop.permute.xlu0 %1711
    %v1713 = vsel %vm466, %v1710, 0
    %v1715 = vsel %vm466, %v1712, 0
    %1717 = vmatprep.subr.mxu0 0.0
    %1718 = vmatpush1.xpose.msra.mxu0 %v1715
    %1719 = vmatprep.subr.mxu0 0.0
    %1720 = vmatpush1.xpose.msra.mxu0 0.0
    %1721 = vmatprep.subr.mxu0 0.0
    %1722 = vmatpush1.xpose.msra.mxu0 0.0
    %1723 = vmatprep.subr.mxu0 0.0
    %1724 = vmatpush1.xpose.msra.mxu0 0.0
    %1725 = vmatprep.subr.mxu0 0.0
    %1726 = vmatpush1.xpose.msra.mxu0 0.0
    %1727 = vmatprep.subr.mxu0 0.0
    %1728 = vmatpush1.xpose.msra.mxu0 0.0
    %1729 = vmatprep.subr.mxu0 0.0
    %1730 = vmatpush1.xpose.msra.mxu0 0.0
    %1731 = vmatprep.subr.mxu0 0.0
    %1732 = vmatpush1.xpose.msra.mxu0 0.0
    %1733 = vmatprep.subr.mxu0 0.0
    %1734 = vmatpush1.xpose.msra.mxu0 0.0
    %1735 = vmatprep.subr.mxu0 0.0
    %1736 = vmatpush1.xpose.msra.mxu0 0.0
    %1737 = vmatprep.subr.mxu0 0.0
    %1738 = vmatpush1.xpose.msra.mxu0 0.0
    %1739 = vmatprep.subr.mxu0 0.0
    %1740 = vmatpush1.xpose.msra.mxu0 0.0
    %1741 = vmatprep.subr.mxu0 0.0
    %1742 = vmatpush1.xpose.msra.mxu0 0.0
    %1743 = vmatprep.subr.mxu0 0.0
    %1744 = vmatpush1.xpose.msra.mxu0 0.0
    %1745 = vmatprep.subr.mxu0 0.0
    %1746 = vmatpush1.xpose.msra.mxu0 0.0
    %1747 = vmatprep.subr.mxu0 0.0
    %1748 = vmatpush1.xpose.msra.mxu0 0.0
    %1749 = vmatprep.subr.mxu0 0.0
    %1750 = vmatpush1.xpose.msra.mxu0 0.0
    %1751 = vmatprep.subr.mxu0 0.0
    %1752 = vmatpush1.xpose.msra.mxu0 0.0
    %1753 = vmatprep.subr.mxu0 0.0
    %1754 = vmatpush1.xpose.msra.mxu0 0.0
    %1755 = vmatprep.subr.mxu0 0.0
    %1756 = vmatpush1.xpose.msra.mxu0 0.0
    %1757 = vmatprep.subr.mxu0 0.0
    %1758 = vmatpush1.xpose.msra.mxu0 0.0
    %1759 = vmatprep.subr.mxu0 0.0
    %1760 = vmatpush1.xpose.msra.mxu0 0.0
    %1761 = vmatprep.subr.mxu0 0.0
    %1762 = vmatpush1.xpose.msra.mxu0 0.0
    %1763 = vmatprep.subr.mxu0 0.0
    %1764 = vmatpush1.xpose.msra.mxu0 0.0
    %1765 = vmatprep.subr.mxu0 0.0
    %1766 = vmatpush1.xpose.msra.mxu0 0.0
    %1767 = vmatprep.subr.mxu0 0.0
    %1768 = vmatpush1.xpose.msra.mxu0 0.0
    %1769 = vmatprep.subr.mxu0 0.0
    %1770 = vmatpush1.xpose.msra.mxu0 0.0
    %1771 = vmatprep.subr.mxu0 0.0
    %1772 = vmatpush1.xpose.msra.mxu0 0.0
    %1773 = vmatprep.subr.mxu0 0.0
    %1774 = vmatpush1.xpose.msra.mxu0 0.0
    %1775 = vmatprep.subr.mxu0 0.0
    %1776 = vmatpush1.xpose.msra.mxu0 0.0
    %1777 = vmatprep.subr.mxu0 0.0
    %1778 = vmatpush1.xpose.msra.mxu0 0.0
    %1779 = vmatprep.subr.mxu0 0.0
    %1780 = vmatpush1.xpose.msra.mxu0 0.0
    %1781 = vmatprep.mubr.f32.mxu0 0.0
    %1782 = vmatmul.mubr.f32.gmra.mrb[0].mxu0 %v1713
    %v1783 = vpop.f32.mrb[0].mxu0
    %v1784 = vadd.f32 0.0, %v1783
    %v1785 = vpop.f32.mrb[0].mxu0
    %1786 = vdwg.mxu0
    %1787 = vrot.lane.b32.xlu0 %v456, 104
    %v1788 = vpop.permute.xlu0 %1787
    %1789 = vrot.lane.b32.xlu0 %v456, 72
    %v1790 = vpop.permute.xlu0 %1789
    %v1791 = vsel %vm466, %v1788, 0
    %v1793 = vsel %vm466, %v1790, 0
    %1795 = vmatprep.subr.mxu0 0.0
    %1796 = vmatpush1.xpose.msra.mxu0 %v1793
    %1797 = vmatprep.subr.mxu0 0.0
    %1798 = vmatpush1.xpose.msra.mxu0 0.0
    %1799 = vmatprep.subr.mxu0 0.0
    %1800 = vmatpush1.xpose.msra.mxu0 0.0
    %1801 = vmatprep.subr.mxu0 0.0
    %1802 = vmatpush1.xpose.msra.mxu0 0.0
    %1803 = vmatprep.subr.mxu0 0.0
    %1804 = vmatpush1.xpose.msra.mxu0 0.0
    %1805 = vmatprep.subr.mxu0 0.0
    %1806 = vmatpush1.xpose.msra.mxu0 0.0
    %1807 = vmatprep.subr.mxu0 0.0
    %1808 = vmatpush1.xpose.msra.mxu0 0.0
    %1809 = vmatprep.subr.mxu0 0.0
    %1810 = vmatpush1.xpose.msra.mxu0 0.0
    %1811 = vmatprep.subr.mxu0 0.0
    %1812 = vmatpush1.xpose.msra.mxu0 0.0
    %1813 = vmatprep.subr.mxu0 0.0
    %1814 = vmatpush1.xpose.msra.mxu0 0.0
    %1815 = vmatprep.subr.mxu0 0.0
    %1816 = vmatpush1.xpose.msra.mxu0 0.0
    %1817 = vmatprep.subr.mxu0 0.0
    %1818 = vmatpush1.xpose.msra.mxu0 0.0
    %1819 = vmatprep.subr.mxu0 0.0
    %1820 = vmatpush1.xpose.msra.mxu0 0.0
    %1821 = vmatprep.subr.mxu0 0.0
    %1822 = vmatpush1.xpose.msra.mxu0 0.0
    %1823 = vmatprep.subr.mxu0 0.0
    %1824 = vmatpush1.xpose.msra.mxu0 0.0
    %1825 = vmatprep.subr.mxu0 0.0
    %1826 = vmatpush1.xpose.msra.mxu0 0.0
    %1827 = vmatprep.subr.mxu0 0.0
    %1828 = vmatpush1.xpose.msra.mxu0 0.0
    %1829 = vmatprep.subr.mxu0 0.0
    %1830 = vmatpush1.xpose.msra.mxu0 0.0
    %1831 = vmatprep.subr.mxu0 0.0
    %1832 = vmatpush1.xpose.msra.mxu0 0.0
    %1833 = vmatprep.subr.mxu0 0.0
    %1834 = vmatpush1.xpose.msra.mxu0 0.0
    %1835 = vmatprep.subr.mxu0 0.0
    %1836 = vmatpush1.xpose.msra.mxu0 0.0
    %1837 = vmatprep.subr.mxu0 0.0
    %1838 = vmatpush1.xpose.msra.mxu0 0.0
    %1839 = vmatprep.subr.mxu0 0.0
    %1840 = vmatpush1.xpose.msra.mxu0 0.0
    %1841 = vmatprep.subr.mxu0 0.0
    %1842 = vmatpush1.xpose.msra.mxu0 0.0
    %1843 = vmatprep.subr.mxu0 0.0
    %1844 = vmatpush1.xpose.msra.mxu0 0.0
    %1845 = vmatprep.subr.mxu0 0.0
    %1846 = vmatpush1.xpose.msra.mxu0 0.0
    %1847 = vmatprep.subr.mxu0 0.0
    %1848 = vmatpush1.xpose.msra.mxu0 0.0
    %1849 = vmatprep.subr.mxu0 0.0
    %1850 = vmatpush1.xpose.msra.mxu0 0.0
    %1851 = vmatprep.subr.mxu0 0.0
    %1852 = vmatpush1.xpose.msra.mxu0 0.0
    %1853 = vmatprep.subr.mxu0 0.0
    %1854 = vmatpush1.xpose.msra.mxu0 0.0
    %1855 = vmatprep.subr.mxu0 0.0
    %1856 = vmatpush1.xpose.msra.mxu0 0.0
    %1857 = vmatprep.subr.mxu0 0.0
    %1858 = vmatpush1.xpose.msra.mxu0 0.0
    %1859 = vmatprep.mubr.f32.mxu0 0.0
    %1860 = vmatmul.mubr.f32.gmra.mrb[0].mxu0 %v1791
    %v1861 = vpop.f32.mrb[0].mxu0
    %v1862 = vadd.f32 0.0, %v1861
    %v1863 = vpop.f32.mrb[0].mxu0
    %1864 = vdwg.mxu0
    %v1865 = vmul.f32 %v1784, 0.35355338
    %v1866 = vmul.f32 %v1862, 0.35355338
    %v1867 = vadd.f32 %v1865, %v360
    %v1868 = vadd.f32 %v1866, %v364
    %v1869 = vsel %vm466, %v1867, -inf
    %1870 = vmax.xlane.f32.xlu0 %v1869
    %v1871 = vpop.xlane.xlu0 %1870
    %v1872 = vsel %vm466, %v1868, -inf
    %1873 = vmax.xlane.f32.xlu0 %v1872
    %v1874 = vpop.xlane.xlu0 %1873
    %v1875 = vsub.f32 %v1867, %v1871
    %v1876 = vsub.f32 %v1868, %v1874
    %v1877 = vmul.f32 %v1875, 1.442695
    %v1878 = vpow.pop %v1877
    %v1879 = vmul.f32 %v1876, 1.442695
    %v1880 = vpow.pop %v1879
    %v1881 = vsel %vm466, %v1878, 0.0
    %1882 = vadd.xlane.f32.xlu0 %v1881
    %v1883 = vpop.xlane.xlu0 %1882
    %v1884 = vsel %vm466, %v1880, 0.0
    %1885 = vadd.xlane.f32.xlu0 %v1884
    %v1886 = vpop.xlane.xlu0 %1885
    %v1887 = vrcp.pop %v1883
    %v1888 = vrcp.pop %v1886
    %v1889 = vmul.f32 %v1878, %v1887
    %v1890 = vmul.f32 %v1880, %v1888
    %1891 = vrot.lane.b32.xlu0 %v451, 40
    %v1892 = vpop.permute.xlu0 %1891
    %v1895 = vsel %vm466, %v1889, 0
    %1897 = vmatprep.subr.mxu0 0.0
    %1898 = vmatpush1.msra.mxu0 %v1892
    %1899 = vmatprep.subr.mxu0 0.0
    %1900 = vmatpush1.msra.mxu0 0.0
    %1901 = vmatprep.subr.mxu0 0.0
    %1902 = vmatpush1.msra.mxu0 0.0
    %1903 = vmatprep.subr.mxu0 0.0
    %1904 = vmatpush1.msra.mxu0 0.0
    %1905 = vmatprep.subr.mxu0 0.0
    %1906 = vmatpush1.msra.mxu0 0.0
    %1907 = vmatprep.subr.mxu0 0.0
    %1908 = vmatpush1.msra.mxu0 0.0
    %1909 = vmatprep.subr.mxu0 0.0
    %1910 = vmatpush1.msra.mxu0 0.0
    %1911 = vmatprep.subr.mxu0 0.0
    %1912 = vmatpush1.msra.mxu0 0.0
    %1913 = vmatprep.subr.mxu0 0.0
    %1914 = vmatpush1.msra.mxu0 0.0
    %1915 = vmatprep.subr.mxu0 0.0
    %1916 = vmatpush1.msra.mxu0 0.0
    %1917 = vmatprep.subr.mxu0 0.0
    %1918 = vmatpush1.msra.mxu0 0.0
    %1919 = vmatprep.subr.mxu0 0.0
    %1920 = vmatpush1.msra.mxu0 0.0
    %1921 = vmatprep.subr.mxu0 0.0
    %1922 = vmatpush1.msra.mxu0 0.0
    %1923 = vmatprep.subr.mxu0 0.0
    %1924 = vmatpush1.msra.mxu0 0.0
    %1925 = vmatprep.subr.mxu0 0.0
    %1926 = vmatpush1.msra.mxu0 0.0
    %1927 = vmatprep.subr.mxu0 0.0
    %1928 = vmatpush1.msra.mxu0 0.0
    %1929 = vmatprep.subr.mxu0 0.0
    %1930 = vmatpush1.msra.mxu0 0.0
    %1931 = vmatprep.subr.mxu0 0.0
    %1932 = vmatpush1.msra.mxu0 0.0
    %1933 = vmatprep.subr.mxu0 0.0
    %1934 = vmatpush1.msra.mxu0 0.0
    %1935 = vmatprep.subr.mxu0 0.0
    %1936 = vmatpush1.msra.mxu0 0.0
    %1937 = vmatprep.subr.mxu0 0.0
    %1938 = vmatpush1.msra.mxu0 0.0
    %1939 = vmatprep.subr.mxu0 0.0
    %1940 = vmatpush1.msra.mxu0 0.0
    %1941 = vmatprep.subr.mxu0 0.0
    %1942 = vmatpush1.msra.mxu0 0.0
    %1943 = vmatprep.subr.mxu0 0.0
    %1944 = vmatpush1.msra.mxu0 0.0
    %1945 = vmatprep.subr.mxu0 0.0
    %1946 = vmatpush1.msra.mxu0 0.0
    %1947 = vmatprep.subr.mxu0 0.0
    %1948 = vmatpush1.msra.mxu0 0.0
    %1949 = vmatprep.subr.mxu0 0.0
    %1950 = vmatpush1.msra.mxu0 0.0
    %1951 = vmatprep.subr.mxu0 0.0
    %1952 = vmatpush1.msra.mxu0 0.0
    %1953 = vmatprep.subr.mxu0 0.0
    %1954 = vmatpush1.msra.mxu0 0.0
    %1955 = vmatprep.subr.mxu0 0.0
    %1956 = vmatpush1.msra.mxu0 0.0
    %1957 = vmatprep.subr.mxu0 0.0
    %1958 = vmatpush1.msra.mxu0 0.0
    %1959 = vmatprep.subr.mxu0 0.0
    %1960 = vmatpush1.msra.mxu0 0.0
    %1961 = vmatprep.mubr.f32.mxu0 0.0
    %1962 = vmatmul.mubr.f32.gmra.mrb[0].mxu0 %v1895
    %v1963 = vpop.f32.mrb[0].mxu0
    %v1964 = vadd.f32 0.0, %v1963
    %v1965 = vpop.f32.mrb[0].mxu0
    %1966 = vdwg.mxu0
    %1967 = vrot.lane.b32.xlu0 %v456, 40
    %v1968 = vpop.permute.xlu0 %1967
    %v1971 = vsel %vm466, %v1890, 0
    %1973 = vmatprep.subr.mxu0 0.0
    %1974 = vmatpush1.msra.mxu0 %v1968
    %1975 = vmatprep.subr.mxu0 0.0
    %1976 = vmatpush1.msra.mxu0 0.0
    %1977 = vmatprep.subr.mxu0 0.0
    %1978 = vmatpush1.msra.mxu0 0.0
    %1979 = vmatprep.subr.mxu0 0.0
    %1980 = vmatpush1.msra.mxu0 0.0
    %1981 = vmatprep.subr.mxu0 0.0
    %1982 = vmatpush1.msra.mxu0 0.0
    %1983 = vmatprep.subr.mxu0 0.0
    %1984 = vmatpush1.msra.mxu0 0.0
    %1985 = vmatprep.subr.mxu0 0.0
    %1986 = vmatpush1.msra.mxu0 0.0
    %1987 = vmatprep.subr.mxu0 0.0
    %1988 = vmatpush1.msra.mxu0 0.0
    %1989 = vmatprep.subr.mxu0 0.0
    %1990 = vmatpush1.msra.mxu0 0.0
    %1991 = vmatprep.subr.mxu0 0.0
    %1992 = vmatpush1.msra.mxu0 0.0
    %1993 = vmatprep.subr.mxu0 0.0
    %1994 = vmatpush1.msra.mxu0 0.0
    %1995 = vmatprep.subr.mxu0 0.0
    %1996 = vmatpush1.msra.mxu0 0.0
    %1997 = vmatprep.subr.mxu0 0.0
    %1998 = vmatpush1.msra.mxu0 0.0
    %1999 = vmatprep.subr.mxu0 0.0
    %2000 = vmatpush1.msra.mxu0 0.0
    %2001 = vmatprep.subr.mxu0 0.0
    %2002 = vmatpush1.msra.mxu0 0.0
    %2003 = vmatprep.subr.mxu0 0.0
    %2004 = vmatpush1.msra.mxu0 0.0
    %2005 = vmatprep.subr.mxu0 0.0
    %2006 = vmatpush1.msra.mxu0 0.0
    %2007 = vmatprep.subr.mxu0 0.0
    %2008 = vmatpush1.msra.mxu0 0.0
    %2009 = vmatprep.subr.mxu0 0.0
    %2010 = vmatpush1.msra.mxu0 0.0
    %2011 = vmatprep.subr.mxu0 0.0
    %2012 = vmatpush1.msra.mxu0 0.0
    %2013 = vmatprep.subr.mxu0 0.0
    %2014 = vmatpush1.msra.mxu0 0.0
    %2015 = vmatprep.subr.mxu0 0.0
    %2016 = vmatpush1.msra.mxu0 0.0
    %2017 = vmatprep.subr.mxu0 0.0
    %2018 = vmatpush1.msra.mxu0 0.0
    %2019 = vmatprep.subr.mxu0 0.0
    %2020 = vmatpush1.msra.mxu0 0.0
    %2021 = vmatprep.subr.mxu0 0.0
    %2022 = vmatpush1.msra.mxu0 0.0
    %2023 = vmatprep.subr.mxu0 0.0
    %2024 = vmatpush1.msra.mxu0 0.0
    %2025 = vmatprep.subr.mxu0 0.0
    %2026 = vmatpush1.msra.mxu0 0.0
    %2027 = vmatprep.subr.mxu0 0.0
    %2028 = vmatpush1.msra.mxu0 0.0
    %2029 = vmatprep.subr.mxu0 0.0
    %2030 = vmatpush1.msra.mxu0 0.0
    %2031 = vmatprep.subr.mxu0 0.0
    %2032 = vmatpush1.msra.mxu0 0.0
    %2033 = vmatprep.subr.mxu0 0.0
    %2034 = vmatpush1.msra.mxu0 0.0
    %2035 = vmatprep.subr.mxu0 0.0
    %2036 = vmatpush1.msra.mxu0 0.0
    %2037 = vmatprep.mubr.f32.mxu0 0.0
    %2038 = vmatmul.mubr.f32.gmra.mrb[0].mxu0 %v1971
    %v2039 = vpop.f32.mrb[0].mxu0
    %v2040 = vadd.f32 0.0, %v2039
    %v2041 = vpop.f32.mrb[0].mxu0
    %2042 = vdwg.mxu0
    %v2044 = vsel %vm466, %v1964, 0
    %v2047 = vsel %vm466, %v2040, 0
    %2049 = vmatprep.subr.mxu0 0.0
    %2050 = vmatpush1.msra.mxu0 %v462
    %2051 = vmatprep.subr.mxu0 0.0
    %2052 = vmatpush1.msra.mxu0 0.0
    %2053 = vmatprep.subr.mxu0 0.0
    %2054 = vmatpush1.msra.mxu0 0.0
    %2055 = vmatprep.subr.mxu0 0.0
    %2056 = vmatpush1.msra.mxu0 0.0
    %2057 = vmatprep.subr.mxu0 0.0
    %2058 = vmatpush1.msra.mxu0 0.0
    %2059 = vmatprep.subr.mxu0 0.0
    %2060 = vmatpush1.msra.mxu0 0.0
    %2061 = vmatprep.subr.mxu0 0.0
    %2062 = vmatpush1.msra.mxu0 0.0
    %2063 = vmatprep.subr.mxu0 0.0
    %2064 = vmatpush1.msra.mxu0 0.0
    %2065 = vmatprep.subr.mxu0 0.0
    %2066 = vmatpush1.msra.mxu0 0.0
    %2067 = vmatprep.subr.mxu0 0.0
    %2068 = vmatpush1.msra.mxu0 0.0
    %2069 = vmatprep.subr.mxu0 0.0
    %2070 = vmatpush1.msra.mxu0 0.0
    %2071 = vmatprep.subr.mxu0 0.0
    %2072 = vmatpush1.msra.mxu0 0.0
    %2073 = vmatprep.subr.mxu0 0.0
    %2074 = vmatpush1.msra.mxu0 0.0
    %2075 = vmatprep.subr.mxu0 0.0
    %2076 = vmatpush1.msra.mxu0 0.0
    %2077 = vmatprep.subr.mxu0 0.0
    %2078 = vmatpush1.msra.mxu0 0.0
    %2079 = vmatprep.subr.mxu0 0.0
    %2080 = vmatpush1.msra.mxu0 0.0
    %2081 = vmatprep.subr.mxu0 0.0
    %2082 = vmatpush1.msra.mxu0 0.0
    %2083 = vmatprep.subr.mxu0 0.0
    %2084 = vmatpush1.msra.mxu0 0.0
    %2085 = vmatprep.subr.mxu0 0.0
    %2086 = vmatpush1.msra.mxu0 0.0
    %2087 = vmatprep.subr.mxu0 0.0
    %2088 = vmatpush1.msra.mxu0 0.0
    %2089 = vmatprep.subr.mxu0 0.0
    %2090 = vmatpush1.msra.mxu0 0.0
    %2091 = vmatprep.subr.mxu0 0.0
    %2092 = vmatpush1.msra.mxu0 0.0
    %2093 = vmatprep.subr.mxu0 0.0
    %2094 = vmatpush1.msra.mxu0 0.0
    %2095 = vmatprep.subr.mxu0 0.0
    %2096 = vmatpush1.msra.mxu0 0.0
    %2097 = vmatprep.subr.mxu0 0.0
    %2098 = vmatpush1.msra.mxu0 0.0
    %2099 = vmatprep.subr.mxu0 0.0
    %2100 = vmatpush1.msra.mxu0 0.0
    %2101 = vmatprep.subr.mxu0 0.0
    %2102 = vmatpush1.msra.mxu0 0.0
    %2103 = vmatprep.subr.mxu0 0.0
    %2104 = vmatpush1.msra.mxu0 0.0
    %2105 = vmatprep.subr.mxu0 0.0
    %2106 = vmatpush1.msra.mxu0 0.0
    %2107 = vmatprep.subr.mxu0 0.0
    %2108 = vmatpush1.msra.mxu0 0.0
    %2109 = vmatprep.subr.mxu0 0.0
    %2110 = vmatpush1.msra.mxu0 0.0
    %2111 = vmatprep.subr.mxu0 0.0
    %2112 = vmatpush1.msra.mxu0 0.0
    %2113 = vmatprep.mubr.f32.mxu0 0.0
    %2114 = vmatmul.mubr.f32.gmra.mrb[0].mxu0 %v2044
    %v2115 = vpop.f32.mrb[0].mxu0
    %v2116 = vadd.f32 0.0, %v2115
    %v2117 = vpop.f32.mrb[0].mxu0
    %2118 = vmatprep.mubr.f32.mxu0 0.0
    %2119 = vmatmul.mubr.f32.gmra.mrb[0].mxu0 %v2047
    %v2120 = vpop.f32.mrb[0].mxu0
    %v2121 = vadd.f32 0.0, %v2120
    %v2122 = vpop.f32.mrb[0].mxu0
    %2123 = vdwg.mxu0
    %v2124 = vadd.f32 %v1707, %v2116
    %v2125 = vadd.f32 %v1708, %v2121
    %v2126 = vld [vmem:[%s9] sm:$0x1]
    %v2128 = vlaneseq
    %v2129 = vshrl.u32 %v2128, 7
    %v2130 = vsub.s32 0, %v2129
    %v2131 = vrot.slane %v2126, %v2130
    %v2133 = vadd.f32 %v2124, %v2131
    %v2134 = vadd.f32 %v2125, %v2131
    %v2135 = vadd.f32 %v2133, %v345
    %v2136 = vadd.f32 %v2134, %v350
    %v2137 = vsel %vm177, %v2135, 0.0
    %2138 = vadd.xlane.f32.xlu0 %v2137
    %v2139 = vpop.xlane.xlu0 %2138
    %v2140 = vsel %vm177, %v2136, 0.0
    %2141 = vadd.xlane.f32.xlu0 %v2140
    %v2142 = vpop.xlane.xlu0 %2141
    %v2143 = vrot.slane %v2139, 4
    %v2144 = vadd.f32 %v2139, %v2143
    %v2145 = vrot.slane %v2144, 2
    %v2146 = vadd.f32 %v2144, %v2145
    %v2147 = vrot.slane %v2146, 1
    %v2148 = vadd.f32 %v2146, %v2147
    %v2149 = vrot.slane %v2142, 4
    %v2150 = vadd.f32 %v2142, %v2149
    %v2151 = vrot.slane %v2150, 2
    %v2152 = vadd.f32 %v2150, %v2151
    %v2153 = vrot.slane %v2152, 1
    %v2154 = vadd.f32 %v2152, %v2153
    %v2155 = vmul.f32 %v2148, 0.00390625
    %v2156 = vmul.f32 %v2154, 0.00390625
    %v2157 = vsub.f32 %v2135, %v2155
    %v2158 = vsub.f32 %v2136, %v2156
    %v2159 = vmul.f32 %v2157, %v2157
    %v2160 = vmul.f32 %v2158, %v2158
    %v2161 = vsel %vm177, %v2159, 0.0
    %2162 = vadd.xlane.f32.xlu0 %v2161
    %v2163 = vpop.xlane.xlu0 %2162
    %v2164 = vsel %vm177, %v2160, 0.0
    %2165 = vadd.xlane.f32.xlu0 %v2164
    %v2166 = vpop.xlane.xlu0 %2165
    %v2167 = vrot.slane %v2163, 4
    %v2168 = vadd.f32 %v2163, %v2167
    %v2169 = vrot.slane %v2168, 2
    %v2170 = vadd.f32 %v2168, %v2169
    %v2171 = vrot.slane %v2170, 1
    %v2172 = vadd.f32 %v2170, %v2171
    %v2173 = vrot.slane %v2166, 4
    %v2174 = vadd.f32 %v2166, %v2173
    %v2175 = vrot.slane %v2174, 2
    %v2176 = vadd.f32 %v2174, %v2175
    %v2177 = vrot.slane %v2176, 1
    %v2178 = vadd.f32 %v2176, %v2177
    %v2179 = vmul.f32 %v2172, 0.00390625
    %v2180 = vmul.f32 %v2178, 0.00390625
    %v2181 = vadd.f32 %v2179, 1e-05
    %v2182 = vadd.f32 %v2180, 1e-05
    %v2183 = vrsqrt.pop %v2181
    %v2184 = vrsqrt.pop %v2182
    %v2185 = vmul.f32 %v2157, %v2183
    %v2186 = vmul.f32 %v2158, %v2184
    %v2187 = vld [vmem:[#allocation5] sm:$0xff]
    %v2188 = vmul.f32 %v2185, %v2187
    %v2189 = vmul.f32 %v2186, %v2187
    %v2190 = vld [vmem:[#allocation7] sm:$0xff]
    %v2191 = vadd.f32 %v2188, %v2190
    %v2192 = vadd.f32 %v2189, %v2190
    %v2193 = vld [vmem:[%s12] sm:$0xff]
    %v2194 = vld [vmem:[%s12 + $0x8] sm:$0xff]
    %v2195 = vld [vmem:[%s12 + $0x10] sm:$0xff]
    %v2196 = vld [vmem:[%s12 + $0x18] sm:$0xff]
    %v2197 = vld [vmem:[%s13] sm:$0x1]
    %v2199 = vlaneseq
    %v2200 = vshrl.u32 %v2199, 7
    %v2201 = vsub.s32 0, %v2200
    %v2202 = vrot.slane %v2197, %v2201
    %v2205 = vsel %vm177, %v2191, 0
    %v2208 = vsel %vm177, %v2192, 0
    %2210 = vmatprep.subr.mxu0 0.0
    %2211 = vmatpush1.msra.mxu0 %v2193
    %2212 = vmatprep.subr.mxu0 0.0
    %2213 = vmatpush1.msra.mxu0 %v2194
    %2214 = vmatprep.subr.mxu0 0.0
    %2215 = vmatpush1.msra.mxu0 %v2195
    %2216 = vmatprep.subr.mxu0 0.0
    %2217 = vmatpush1.msra.mxu0 %v2196
    %2218 = vmatprep.subr.mxu0 0.0
    %2219 = vmatpush1.msra.mxu0 0.0
    %2220 = vmatprep.subr.mxu0 0.0
    %2221 = vmatpush1.msra.mxu0 0.0
    %2222 = vmatprep.subr.mxu0 0.0
    %2223 = vmatpush1.msra.mxu0 0.0
    %2224 = vmatprep.subr.mxu0 0.0
    %2225 = vmatpush1.msra.mxu0 0.0
    %2226 = vmatprep.subr.mxu0 0.0
    %2227 = vmatpush1.msra.mxu0 0.0
    %2228 = vmatprep.subr.mxu0 0.0
    %2229 = vmatpush1.msra.mxu0 0.0
    %2230 = vmatprep.subr.mxu0 0.0
    %2231 = vmatpush1.msra.mxu0 0.0
    %2232 = vmatprep.subr.mxu0 0.0
    %2233 = vmatpush1.msra.mxu0 0.0
    %2234 = vmatprep.subr.mxu0 0.0
    %2235 = vmatpush1.msra.mxu0 0.0
    %2236 = vmatprep.subr.mxu0 0.0
    %2237 = vmatpush1.msra.mxu0 0.0
    %2238 = vmatprep.subr.mxu0 0.0
    %2239 = vmatpush1.msra.mxu0 0.0
    %2240 = vmatprep.subr.mxu0 0.0
    %2241 = vmatpush1.msra.mxu0 0.0
    %2242 = vmatprep.subr.mxu0 0.0
    %2243 = vmatpush1.msra.mxu0 0.0
    %2244 = vmatprep.subr.mxu0 0.0
    %2245 = vmatpush1.msra.mxu0 0.0
    %2246 = vmatprep.subr.mxu0 0.0
    %2247 = vmatpush1.msra.mxu0 0.0
    %2248 = vmatprep.subr.mxu0 0.0
    %2249 = vmatpush1.msra.mxu0 0.0
    %2250 = vmatprep.subr.mxu0 0.0
    %2251 = vmatpush1.msra.mxu0 0.0
    %2252 = vmatprep.subr.mxu0 0.0
    %2253 = vmatpush1.msra.mxu0 0.0
    %2254 = vmatprep.subr.mxu0 0.0
    %2255 = vmatpush1.msra.mxu0 0.0
    %2256 = vmatprep.subr.mxu0 0.0
    %2257 = vmatpush1.msra.mxu0 0.0
    %2258 = vmatprep.subr.mxu0 0.0
    %2259 = vmatpush1.msra.mxu0 0.0
    %2260 = vmatprep.subr.mxu0 0.0
    %2261 = vmatpush1.msra.mxu0 0.0
    %2262 = vmatprep.subr.mxu0 0.0
    %2263 = vmatpush1.msra.mxu0 0.0
    %2264 = vmatprep.subr.mxu0 0.0
    %2265 = vmatpush1.msra.mxu0 0.0
    %2266 = vmatprep.subr.mxu0 0.0
    %2267 = vmatpush1.msra.mxu0 0.0
    %2268 = vmatprep.subr.mxu0 0.0
    %2269 = vmatpush1.msra.mxu0 0.0
    %2270 = vmatprep.subr.mxu0 0.0
    %2271 = vmatpush1.msra.mxu0 0.0
    %2272 = vmatprep.subr.mxu0 0.0
    %2273 = vmatpush1.msra.mxu0 0.0
    %2274 = vmatprep.mubr.f32.mxu0 0.0
    %2275 = vmatmul.mubr.f32.gmra.mrb[0].mxu0 %v2205
    %v2276 = vpop.f32.mrb[0].mxu0
    %v2277 = vadd.f32 %v2202, %v2276
    %v2278 = vpop.f32.mrb[0].mxu0
    %2279 = vmatprep.mubr.f32.mxu0 0.0
    %2280 = vmatmul.mubr.f32.gmra.mrb[0].mxu0 %v2208
    %v2281 = vpop.f32.mrb[0].mxu0
    %v2282 = vadd.f32 %v2202, %v2281
    %v2283 = vpop.f32.mrb[0].mxu0
    %2284 = vdwg.mxu0
    %v2285 = vmax.f32 %v2277, 0.0
    %v2286 = vmax.f32 %v2282, 0.0
    %v2287 = vld [vmem:[%s14] sm:$0xff]
    %v2288 = vld [vmem:[%s14 + $0x8] sm:$0xff]
    %v2289 = vld [vmem:[%s14 + $0x10] sm:$0xff]
    %v2290 = vld [vmem:[%s14 + $0x18] sm:$0xff]
    %v2291 = vld [vmem:[%s14 + $0x20] sm:$0xff]
    %v2292 = vld [vmem:[%s14 + $0x28] sm:$0xff]
    %v2293 = vld [vmem:[%s14 + $0x30] sm:$0xff]
    %v2294 = vld [vmem:[%s14 + $0x38] sm:$0xff]
    %v2295 = vld [vmem:[#allocation8] sm:$0x1]
    %v2297 = vlaneseq
    %v2298 = vshrl.u32 %v2297, 7
    %v2299 = vsub.s32 0, %v2298
    %v2300 = vrot.slane %v2295, %v2299
    %vm2302 = vcmask 523264
    %v2304 = vsel %vm2302, %v2285, 0
    %v2307 = vsel %vm2302, %v2286, 0
    %2309 = vmatprep.subr.mxu0 0.0
    %2310 = vmatpush1.msra.mxu0 %v2287
    %2311 = vmatprep.subr.mxu0 0.0
    %2312 = vmatpush1.msra.mxu0 %v2288
    %2313 = vmatprep.subr.mxu0 0.0
    %2314 = vmatpush1.msra.mxu0 %v2289
    %2315 = vmatprep.subr.mxu0 0.0
    %2316 = vmatpush1.msra.mxu0 %v2290
    %2317 = vmatprep.subr.mxu0 0.0
    %2318 = vmatpush1.msra.mxu0 %v2291
    %2319 = vmatprep.subr.mxu0 0.0
    %2320 = vmatpush1.msra.mxu0 %v2292
    %2321 = vmatprep.subr.mxu0 0.0
    %2322 = vmatpush1.msra.mxu0 %v2293
    %2323 = vmatprep.subr.mxu0 0.0
    %2324 = vmatpush1.msra.mxu0 %v2294
    %2325 = vmatprep.subr.mxu0 0.0
    %2326 = vmatpush1.msra.mxu0 0.0
    %2327 = vmatprep.subr.mxu0 0.0
    %2328 = vmatpush1.msra.mxu0 0.0
    %2329 = vmatprep.subr.mxu0 0.0
    %2330 = vmatpush1.msra.mxu0 0.0
    %2331 = vmatprep.subr.mxu0 0.0
    %2332 = vmatpush1.msra.mxu0 0.0
    %2333 = vmatprep.subr.mxu0 0.0
    %2334 = vmatpush1.msra.mxu0 0.0
    %2335 = vmatprep.subr.mxu0 0.0
    %2336 = vmatpush1.msra.mxu0 0.0
    %2337 = vmatprep.subr.mxu0 0.0
    %2338 = vmatpush1.msra.mxu0 0.0
    %2339 = vmatprep.subr.mxu0 0.0
    %2340 = vmatpush1.msra.mxu0 0.0
    %2341 = vmatprep.subr.mxu0 0.0
    %2342 = vmatpush1.msra.mxu0 0.0
    %2343 = vmatprep.subr.mxu0 0.0
    %2344 = vmatpush1.msra.mxu0 0.0
    %2345 = vmatprep.subr.mxu0 0.0
    %2346 = vmatpush1.msra.mxu0 0.0
    %2347 = vmatprep.subr.mxu0 0.0
    %2348 = vmatpush1.msra.mxu0 0.0
    %2349 = vmatprep.subr.mxu0 0.0
    %2350 = vmatpush1.msra.mxu0 0.0
    %2351 = vmatprep.subr.mxu0 0.0
    %2352 = vmatpush1.msra.mxu0 0.0
    %2353 = vmatprep.subr.mxu0 0.0
    %2354 = vmatpush1.msra.mxu0 0.0
    %2355 = vmatprep.subr.mxu0 0.0
    %2356 = vmatpush1.msra.mxu0 0.0
    %2357 = vmatprep.subr.mxu0 0.0
    %2358 = vmatpush1.msra.mxu0 0.0
    %2359 = vmatprep.subr.mxu0 0.0
    %2360 = vmatpush1.msra.mxu0 0.0
    %2361 = vmatprep.subr.mxu0 0.0
    %2362 = vmatpush1.msra.mxu0 0.0
    %2363 = vmatprep.subr.mxu0 0.0
    %2364 = vmatpush1.msra.mxu0 0.0
    %2365 = vmatprep.subr.mxu0 0.0
    %2366 = vmatpush1.msra.mxu0 0.0
    %2367 = vmatprep.subr.mxu0 0.0
    %2368 = vmatpush1.msra.mxu0 0.0
    %2369 = vmatprep.subr.mxu0 0.0
    %2370 = vmatpush1.msra.mxu0 0.0
    %2371 = vmatprep.subr.mxu0 0.0
    %2372 = vmatpush1.msra.mxu0 0.0
    %2373 = vmatprep.mubr.f32.mxu0 0.0
    %2374 = vmatmul.mubr.f32.gmra.mrb[0].mxu0 %v2304
    %v2375 = vpop.f32.mrb[0].mxu0
    %v2376 = vadd.f32 %v2300, %v2375
    %v2377 = vpop.f32.mrb[0].mxu0
    %2378 = vmatprep.mubr.f32.mxu0 0.0
    %2379 = vmatmul.mubr.f32.gmra.mrb[0].mxu0 %v2307
    %v2380 = vpop.f32.mrb[0].mxu0
    %v2381 = vadd.f32 %v2300, %v2380
    %v2382 = vpop.f32.mrb[0].mxu0
    %2383 = vdwg.mxu0
    %v2384 = vadd.f32 %v2376, %v2191
    %v2385 = vadd.f32 %v2381, %v2192
    %v2386 = vsel %vm177, %v2384, 0.0
    %2387 = vadd.xlane.f32.xlu0 %v2386
    %v2388 = vpop.xlane.xlu0 %2387
    %v2389 = vsel %vm177, %v2385, 0.0
    %2390 = vadd.xlane.f32.xlu0 %v2389
    %v2391 = vpop.xlane.xlu0 %2390
    %v2392 = vrcp.pop 32.0
    %v2393 = vmul.f32 %v2388, %v2392
    %v2394 = vmul.f32 %v2391, %v2392
    %v2395 = vsub.f32 %v2384, %v2393
    %v2396 = vsub.f32 %v2385, %v2394
    %v2397 = vmul.f32 %v2395, %v2395
    %v2398 = vmul.f32 %v2396, %v2396
    %v2399 = vsel %vm177, %v2397, 0.0
    %2400 = vadd.xlane.f32.xlu0 %v2399
    %v2401 = vpop.xlane.xlu0 %2400
    %v2402 = vsel %vm177, %v2398, 0.0
    %2403 = vadd.xlane.f32.xlu0 %v2402
    %v2404 = vpop.xlane.xlu0 %2403
    %v2405 = vmul.f32 %v2401, %v2392
    %v2406 = vmul.f32 %v2404, %v2392
    %v2407 = vadd.f32 %v2405, 1e-05
    %v2408 = vadd.f32 %v2406, 1e-05
    %v2409 = vrsqrt.pop %v2407
    %v2410 = vrsqrt.pop %v2408
    %v2411 = vmul.f32 %v2395, %v2409
    %v2412 = vmul.f32 %v2396, %v2410
    %v2413 = vld [vmem:[#allocation10] sm:$0x1]
    %v2415 = vlaneseq
    %v2416 = vshrl.u32 %v2415, 7
    %v2417 = vsub.s32 0, %v2416
    %v2418 = vrot.slane %v2413, %v2417
    %v2420 = vmul.f32 %v2411, %v2418
    %v2421 = vmul.f32 %v2412, %v2418
    %v2422 = vld [vmem:[#allocation11] sm:$0x1]
    %v2424 = vlaneseq
    %v2425 = vshrl.u32 %v2424, 7
    %v2426 = vsub.s32 0, %v2425
    %v2427 = vrot.slane %v2422, %v2426
    %v2429 = vadd.f32 %v2420, %v2427
    %v2430 = vadd.f32 %v2421, %v2427
    %s2431 = scalar_lea.vmem %s6, 32
    %v2432 = vld [vmem:[%s2431] sm:$0xff]
    %v2433 = vld [vmem:[%s2431 + $0x8] sm:$0xff]
    %v2434 = vld [vmem:[%s2431 + $0x10] sm:$0xff]
    %v2435 = vld [vmem:[%s2431 + $0x18] sm:$0xff]
    %s2436 = scalar_lea.vmem %s7, 1
    %v2437 = vld [vmem:[%s2436] sm:$0x1]
    %v2439 = vlaneseq
    %v2440 = vshrl.u32 %v2439, 7
    %v2441 = vsub.s32 0, %v2440
    %v2442 = vrot.slane %v2437, %v2441
    %v2445 = vsel %vm177, %v2429, 0
    %v2448 = vsel %vm177, %v2430, 0
    %2450 = vmatprep.subr.mxu0 0.0
    %2451 = vmatpush1.msra.mxu0 %v2432
    %2452 = vmatprep.subr.mxu0 0.0
    %2453 = vmatpush1.msra.mxu0 %v2433
    %2454 = vmatprep.subr.mxu0 0.0
    %2455 = vmatpush1.msra.mxu0 %v2434
    %2456 = vmatprep.subr.mxu0 0.0
    %2457 = vmatpush1.msra.mxu0 %v2435
    %2458 = vmatprep.subr.mxu0 0.0
    %2459 = vmatpush1.msra.mxu0 0.0
    %2460 = vmatprep.subr.mxu0 0.0
    %2461 = vmatpush1.msra.mxu0 0.0
    %2462 = vmatprep.subr.mxu0 0.0
    %2463 = vmatpush1.msra.mxu0 0.0
    %2464 = vmatprep.subr.mxu0 0.0
    %2465 = vmatpush1.msra.mxu0 0.0
    %2466 = vmatprep.subr.mxu0 0.0
    %2467 = vmatpush1.msra.mxu0 0.0
    %2468 = vmatprep.subr.mxu0 0.0
    %2469 = vmatpush1.msra.mxu0 0.0
    %2470 = vmatprep.subr.mxu0 0.0
    %2471 = vmatpush1.msra.mxu0 0.0
    %2472 = vmatprep.subr.mxu0 0.0
    %2473 = vmatpush1.msra.mxu0 0.0
    %2474 = vmatprep.subr.mxu0 0.0
    %2475 = vmatpush1.msra.mxu0 0.0
    %2476 = vmatprep.subr.mxu0 0.0
    %2477 = vmatpush1.msra.mxu0 0.0
    %2478 = vmatprep.subr.mxu0 0.0
    %2479 = vmatpush1.msra.mxu0 0.0
    %2480 = vmatprep.subr.mxu0 0.0
    %2481 = vmatpush1.msra.mxu0 0.0
    %2482 = vmatprep.subr.mxu0 0.0
    %2483 = vmatpush1.msra.mxu0 0.0
    %2484 = vmatprep.subr.mxu0 0.0
    %2485 = vmatpush1.msra.mxu0 0.0
    %2486 = vmatprep.subr.mxu0 0.0
    %2487 = vmatpush1.msra.mxu0 0.0
    %2488 = vmatprep.subr.mxu0 0.0
    %2489 = vmatpush1.msra.mxu0 0.0
    %2490 = vmatprep.subr.mxu0 0.0
    %2491 = vmatpush1.msra.mxu0 0.0
    %2492 = vmatprep.subr.mxu0 0.0
    %2493 = vmatpush1.msra.mxu0 0.0
    %2494 = vmatprep.subr.mxu0 0.0
    %2495 = vmatpush1.msra.mxu0 0.0
    %2496 = vmatprep.subr.mxu0 0.0
    %2497 = vmatpush1.msra.mxu0 0.0
    %2498 = vmatprep.subr.mxu0 0.0
    %2499 = vmatpush1.msra.mxu0 0.0
    %2500 = vmatprep.subr.mxu0 0.0
    %2501 = vmatpush1.msra.mxu0 0.0
    %2502 = vmatprep.subr.mxu0 0.0
    %2503 = vmatpush1.msra.mxu0 0.0
    %2504 = vmatprep.subr.mxu0 0.0
    %2505 = vmatpush1.msra.mxu0 0.0
    %2506 = vmatprep.subr.mxu0 0.0
    %2507 = vmatpush1.msra.mxu0 0.0
    %2508 = vmatprep.subr.mxu0 0.0
    %2509 = vmatpush1.msra.mxu0 0.0
    %2510 = vmatprep.subr.mxu0 0.0
    %2511 = vmatpush1.msra.mxu0 0.0
    %2512 = vmatprep.subr.mxu0 0.0
    %2513 = vmatpush1.msra.mxu0 0.0
    %2514 = vmatprep.mubr.f32.mxu0 0.0
    %2515 = vmatmul.mubr.f32.gmra.mrb[0].mxu0 %v2445
    %v2516 = vpop.f32.mrb[0].mxu0
    %v2517 = vadd.f32 %v2442, %v2516
    %v2518 = vpop.f32.mrb[0].mxu0
    %2519 = vmatprep.mubr.f32.mxu0 0.0
    %2520 = vmatmul.mubr.f32.gmra.mrb[0].mxu0 %v2448
    %v2521 = vpop.f32.mrb[0].mxu0
    %v2522 = vadd.f32 %v2442, %v2521
    %v2523 = vpop.f32.mrb[0].mxu0
    %2524 = vdwg.mxu0
    %s2525 = scalar_lea.vmem %s8, 32
    %v2526 = vld [vmem:[%s2525] sm:$0xff]
    %v2527 = vld [vmem:[%s2525 + $0x8] sm:$0xff]
    %v2528 = vld [vmem:[%s2525 + $0x10] sm:$0xff]
    %v2529 = vld [vmem:[%s2525 + $0x18] sm:$0xff]
    %2531 = vrot.lane.b32.xlu0 %v2517, 96
    %v2532 = vpop.permute.xlu0 %2531
    %v2533 = vsel %vm466, %v2517, 0
    %v2535 = vsel %vm466, %v2532, 0
    %2537 = vmatprep.subr.mxu0 0.0
    %2538 = vmatpush1.xpose.msra.mxu0 %v2535
    %2539 = vmatprep.subr.mxu0 0.0
    %2540 = vmatpush1.xpose.msra.mxu0 0.0
    %2541 = vmatprep.subr.mxu0 0.0
    %2542 = vmatpush1.xpose.msra.mxu0 0.0
    %2543 = vmatprep.subr.mxu0 0.0
    %2544 = vmatpush1.xpose.msra.mxu0 0.0
    %2545 = vmatprep.subr.mxu0 0.0
    %2546 = vmatpush1.xpose.msra.mxu0 0.0
    %2547 = vmatprep.subr.mxu0 0.0
    %2548 = vmatpush1.xpose.msra.mxu0 0.0
    %2549 = vmatprep.subr.mxu0 0.0
    %2550 = vmatpush1.xpose.msra.mxu0 0.0
    %2551 = vmatprep.subr.mxu0 0.0
    %2552 = vmatpush1.xpose.msra.mxu0 0.0
    %2553 = vmatprep.subr.mxu0 0.0
    %2554 = vmatpush1.xpose.msra.mxu0 0.0
    %2555 = vmatprep.subr.mxu0 0.0
    %2556 = vmatpush1.xpose.msra.mxu0 0.0
    %2557 = vmatprep.subr.mxu0 0.0
    %2558 = vmatpush1.xpose.msra.mxu0 0.0
    %2559 = vmatprep.subr.mxu0 0.0
    %2560 = vmatpush1.xpose.msra.mxu0 0.0
    %2561 = vmatprep.subr.mxu0 0.0
    %2562 = vmatpush1.xpose.msra.mxu0 0.0
    %2563 = vmatprep.subr.mxu0 0.0
    %2564 = vmatpush1.xpose.msra.mxu0 0.0
    %2565 = vmatprep.subr.mxu0 0.0
    %2566 = vmatpush1.xpose.msra.mxu0 0.0
    %2567 = vmatprep.subr.mxu0 0.0
    %2568 = vmatpush1.xpose.msra.mxu0 0.0
    %2569 = vmatprep.subr.mxu0 0.0
    %2570 = vmatpush1.xpose.msra.mxu0 0.0
    %2571 = vmatprep.subr.mxu0 0.0
    %2572 = vmatpush1.xpose.msra.mxu0 0.0
    %2573 = vmatprep.subr.mxu0 0.0
    %2574 = vmatpush1.xpose.msra.mxu0 0.0
    %2575 = vmatprep.subr.mxu0 0.0
    %2576 = vmatpush1.xpose.msra.mxu0 0.0
    %2577 = vmatprep.subr.mxu0 0.0
    %2578 = vmatpush1.xpose.msra.mxu0 0.0
    %2579 = vmatprep.subr.mxu0 0.0
    %2580 = vmatpush1.xpose.msra.mxu0 0.0
    %2581 = vmatprep.subr.mxu0 0.0
    %2582 = vmatpush1.xpose.msra.mxu0 0.0
    %2583 = vmatprep.subr.mxu0 0.0
    %2584 = vmatpush1.xpose.msra.mxu0 0.0
    %2585 = vmatprep.subr.mxu0 0.0
    %2586 = vmatpush1.xpose.msra.mxu0 0.0
    %2587 = vmatprep.subr.mxu0 0.0
    %2588 = vmatpush1.xpose.msra.mxu0 0.0
    %2589 = vmatprep.subr.mxu0 0.0
    %2590 = vmatpush1.xpose.msra.mxu0 0.0
    %2591 = vmatprep.subr.mxu0 0.0
    %2592 = vmatpush1.xpose.msra.mxu0 0.0
    %2593 = vmatprep.subr.mxu0 0.0
    %2594 = vmatpush1.xpose.msra.mxu0 0.0
    %2595 = vmatprep.subr.mxu0 0.0
    %2596 = vmatpush1.xpose.msra.mxu0 0.0
    %2597 = vmatprep.subr.mxu0 0.0
    %2598 = vmatpush1.xpose.msra.mxu0 0.0
    %2599 = vmatprep.subr.mxu0 0.0
    %2600 = vmatpush1.xpose.msra.mxu0 0.0
    %2601 = vmatprep.mubr.f32.mxu0 0.0
    %2602 = vmatmul.mubr.f32.gmra.mrb[0].mxu0 %v2533
    %v2603 = vpop.f32.mrb[0].mxu0
    %v2604 = vadd.f32 0.0, %v2603
    %v2605 = vpop.f32.mrb[0].mxu0
    %2606 = vdwg.mxu0
    %2608 = vrot.lane.b32.xlu0 %v2522, 96
    %v2609 = vpop.permute.xlu0 %2608
    %v2610 = vsel %vm466, %v2522, 0
    %v2612 = vsel %vm466, %v2609, 0
    %2614 = vmatprep.subr.mxu0 0.0
    %2615 = vmatpush1.xpose.msra.mxu0 %v2612
    %2616 = vmatprep.subr.mxu0 0.0
    %2617 = vmatpush1.xpose.msra.mxu0 0.0
    %2618 = vmatprep.subr.mxu0 0.0
    %2619 = vmatpush1.xpose.msra.mxu0 0.0
    %2620 = vmatprep.subr.mxu0 0.0
    %2621 = vmatpush1.xpose.msra.mxu0 0.0
    %2622 = vmatprep.subr.mxu0 0.0
    %2623 = vmatpush1.xpose.msra.mxu0 0.0
    %2624 = vmatprep.subr.mxu0 0.0
    %2625 = vmatpush1.xpose.msra.mxu0 0.0
    %2626 = vmatprep.subr.mxu0 0.0
    %2627 = vmatpush1.xpose.msra.mxu0 0.0
    %2628 = vmatprep.subr.mxu0 0.0
    %2629 = vmatpush1.xpose.msra.mxu0 0.0
    %2630 = vmatprep.subr.mxu0 0.0
    %2631 = vmatpush1.xpose.msra.mxu0 0.0
    %2632 = vmatprep.subr.mxu0 0.0
    %2633 = vmatpush1.xpose.msra.mxu0 0.0
    %2634 = vmatprep.subr.mxu0 0.0
    %2635 = vmatpush1.xpose.msra.mxu0 0.0
    %2636 = vmatprep.subr.mxu0 0.0
    %2637 = vmatpush1.xpose.msra.mxu0 0.0
    %2638 = vmatprep.subr.mxu0 0.0
    %2639 = vmatpush1.xpose.msra.mxu0 0.0
    %2640 = vmatprep.subr.mxu0 0.0
    %2641 = vmatpush1.xpose.msra.mxu0 0.0
    %2642 = vmatprep.subr.mxu0 0.0
    %2643 = vmatpush1.xpose.msra.mxu0 0.0
    %2644 = vmatprep.subr.mxu0 0.0
    %2645 = vmatpush1.xpose.msra.mxu0 0.0
    %2646 = vmatprep.subr.mxu0 0.0
    %2647 = vmatpush1.xpose.msra.mxu0 0.0
    %2648 = vmatprep.subr.mxu0 0.0
    %2649 = vmatpush1.xpose.msra.mxu0 0.0
    %2650 = vmatprep.subr.mxu0 0.0
    %2651 = vmatpush1.xpose.msra.mxu0 0.0
    %2652 = vmatprep.subr.mxu0 0.0
    %2653 = vmatpush1.xpose.msra.mxu0 0.0
    %2654 = vmatprep.subr.mxu0 0.0
    %2655 = vmatpush1.xpose.msra.mxu0 0.0
    %2656 = vmatprep.subr.mxu0 0.0
    %2657 = vmatpush1.xpose.msra.mxu0 0.0
    %2658 = vmatprep.subr.mxu0 0.0
    %2659 = vmatpush1.xpose.msra.mxu0 0.0
    %2660 = vmatprep.subr.mxu0 0.0
    %2661 = vmatpush1.xpose.msra.mxu0 0.0
    %2662 = vmatprep.subr.mxu0 0.0
    %2663 = vmatpush1.xpose.msra.mxu0 0.0
    %2664 = vmatprep.subr.mxu0 0.0
    %2665 = vmatpush1.xpose.msra.mxu0 0.0
    %2666 = vmatprep.subr.mxu0 0.0
    %2667 = vmatpush1.xpose.msra.mxu0 0.0
    %2668 = vmatprep.subr.mxu0 0.0
    %2669 = vmatpush1.xpose.msra.mxu0 0.0
    %2670 = vmatprep.subr.mxu0 0.0
    %2671 = vmatpush1.xpose.msra.mxu0 0.0
    %2672 = vmatprep.subr.mxu0 0.0
    %2673 = vmatpush1.xpose.msra.mxu0 0.0
    %2674 = vmatprep.subr.mxu0 0.0
    %2675 = vmatpush1.xpose.msra.mxu0 0.0
    %2676 = vmatprep.subr.mxu0 0.0
    %2677 = vmatpush1.xpose.msra.mxu0 0.0
    %2678 = vmatprep.mubr.f32.mxu0 0.0
    %2679 = vmatmul.mubr.f32.gmra.mrb[0].mxu0 %v2610
    %v2680 = vpop.f32.mrb[0].mxu0
    %v2681 = vadd.f32 0.0, %v2680
    %v2682 = vpop.f32.mrb[0].mxu0
    %2683 = vdwg.mxu0
    %v2684 = vmul.f32 %v2604, 0.35355338
    %v2685 = vmul.f32 %v2681, 0.35355338
    %v2686 = vadd.f32 %v2684, %v360
    %v2687 = vadd.f32 %v2685, %v364
    %v2688 = vsel %vm466, %v2686, -inf
    %2689 = vmax.xlane.f32.xlu0 %v2688
    %v2690 = vpop.xlane.xlu0 %2689
    %v2691 = vsel %vm466, %v2687, -inf
    %2692 = vmax.xlane.f32.xlu0 %v2691
    %v2693 = vpop.xlane.xlu0 %2692
    %v2694 = vsub.f32 %v2686, %v2690
    %v2695 = vsub.f32 %v2687, %v2693
    %v2696 = vmul.f32 %v2694, 1.442695
    %v2697 = vpow.pop %v2696
    %v2698 = vmul.f32 %v2695, 1.442695
    %v2699 = vpow.pop %v2698
    %v2700 = vsel %vm466, %v2697, 0.0
    %2701 = vadd.xlane.f32.xlu0 %v2700
    %v2702 = vpop.xlane.xlu0 %2701
    %v2703 = vsel %vm466, %v2699, 0.0
    %2704 = vadd.xlane.f32.xlu0 %v2703
    %v2705 = vpop.xlane.xlu0 %2704
    %v2706 = vrcp.pop %v2702
    %v2707 = vrcp.pop %v2705
    %v2708 = vmul.f32 %v2697, %v2706
    %v2709 = vmul.f32 %v2699, %v2707
    %2710 = vrot.lane.b32.xlu0 %v2517, 64
    %v2711 = vpop.permute.xlu0 %2710
    %v2714 = vsel %vm466, %v2708, 0
    %2716 = vmatprep.subr.mxu0 0.0
    %2717 = vmatpush1.msra.mxu0 %v2711
    %2718 = vmatprep.subr.mxu0 0.0
    %2719 = vmatpush1.msra.mxu0 0.0
    %2720 = vmatprep.subr.mxu0 0.0
    %2721 = vmatpush1.msra.mxu0 0.0
    %2722 = vmatprep.subr.mxu0 0.0
    %2723 = vmatpush1.msra.mxu0 0.0
    %2724 = vmatprep.subr.mxu0 0.0
    %2725 = vmatpush1.msra.mxu0 0.0
    %2726 = vmatprep.subr.mxu0 0.0
    %2727 = vmatpush1.msra.mxu0 0.0
    %2728 = vmatprep.subr.mxu0 0.0
    %2729 = vmatpush1.msra.mxu0 0.0
    %2730 = vmatprep.subr.mxu0 0.0
    %2731 = vmatpush1.msra.mxu0 0.0
    %2732 = vmatprep.subr.mxu0 0.0
    %2733 = vmatpush1.msra.mxu0 0.0
    %2734 = vmatprep.subr.mxu0 0.0
    %2735 = vmatpush1.msra.mxu0 0.0
    %2736 = vmatprep.subr.mxu0 0.0
    %2737 = vmatpush1.msra.mxu0 0.0
    %2738 = vmatprep.subr.mxu0 0.0
    %2739 = vmatpush1.msra.mxu0 0.0
    %2740 = vmatprep.subr.mxu0 0.0
    %2741 = vmatpush1.msra.mxu0 0.0
    %2742 = vmatprep.subr.mxu0 0.0
    %2743 = vmatpush1.msra.mxu0 0.0
    %2744 = vmatprep.subr.mxu0 0.0
    %2745 = vmatpush1.msra.mxu0 0.0
    %2746 = vmatprep.subr.mxu0 0.0
    %2747 = vmatpush1.msra.mxu0 0.0
    %2748 = vmatprep.subr.mxu0 0.0
    %2749 = vmatpush1.msra.mxu0 0.0
    %2750 = vmatprep.subr.mxu0 0.0
    %2751 = vmatpush1.msra.mxu0 0.0
    %2752 = vmatprep.subr.mxu0 0.0
    %2753 = vmatpush1.msra.mxu0 0.0
    %2754 = vmatprep.subr.mxu0 0.0
    %2755 = vmatpush1.msra.mxu0 0.0
    %2756 = vmatprep.subr.mxu0 0.0
    %2757 = vmatpush1.msra.mxu0 0.0
    %2758 = vmatprep.subr.mxu0 0.0
    %2759 = vmatpush1.msra.mxu0 0.0
    %2760 = vmatprep.subr.mxu0 0.0
    %2761 = vmatpush1.msra.mxu0 0.0
    %2762 = vmatprep.subr.mxu0 0.0
    %2763 = vmatpush1.msra.mxu0 0.0
    %2764 = vmatprep.subr.mxu0 0.0
    %2765 = vmatpush1.msra.mxu0 0.0
    %2766 = vmatprep.subr.mxu0 0.0
    %2767 = vmatpush1.msra.mxu0 0.0
    %2768 = vmatprep.subr.mxu0 0.0
    %2769 = vmatpush1.msra.mxu0 0.0
    %2770 = vmatprep.subr.mxu0 0.0
    %2771 = vmatpush1.msra.mxu0 0.0
    %2772 = vmatprep.subr.mxu0 0.0
    %2773 = vmatpush1.msra.mxu0 0.0
    %2774 = vmatprep.subr.mxu0 0.0
    %2775 = vmatpush1.msra.mxu0 0.0
    %2776 = vmatprep.subr.mxu0 0.0
    %2777 = vmatpush1.msra.mxu0 0.0
    %2778 = vmatprep.subr.mxu0 0.0
    %2779 = vmatpush1.msra.mxu0 0.0
    %2780 = vmatprep.mubr.f32.mxu0 0.0
    %2781 = vmatmul.mubr.f32.gmra.mrb[0].mxu0 %v2714
    %v2782 = vpop.f32.mrb[0].mxu0
    %v2783 = vadd.f32 0.0, %v2782
    %v2784 = vpop.f32.mrb[0].mxu0
    %2785 = vdwg.mxu0
    %2786 = vrot.lane.b32.xlu0 %v2522, 64
    %v2787 = vpop.permute.xlu0 %2786
    %v2790 = vsel %vm466, %v2709, 0
    %2792 = vmatprep.subr.mxu0 0.0
    %2793 = vmatpush1.msra.mxu0 %v2787
    %2794 = vmatprep.subr.mxu0 0.0
    %2795 = vmatpush1.msra.mxu0 0.0
    %2796 = vmatprep.subr.mxu0 0.0
    %2797 = vmatpush1.msra.mxu0 0.0
    %2798 = vmatprep.subr.mxu0 0.0
    %2799 = vmatpush1.msra.mxu0 0.0
    %2800 = vmatprep.subr.mxu0 0.0
    %2801 = vmatpush1.msra.mxu0 0.0
    %2802 = vmatprep.subr.mxu0 0.0
    %2803 = vmatpush1.msra.mxu0 0.0
    %2804 = vmatprep.subr.mxu0 0.0
    %2805 = vmatpush1.msra.mxu0 0.0
    %2806 = vmatprep.subr.mxu0 0.0
    %2807 = vmatpush1.msra.mxu0 0.0
    %2808 = vmatprep.subr.mxu0 0.0
    %2809 = vmatpush1.msra.mxu0 0.0
    %2810 = vmatprep.subr.mxu0 0.0
    %2811 = vmatpush1.msra.mxu0 0.0
    %2812 = vmatprep.subr.mxu0 0.0
    %2813 = vmatpush1.msra.mxu0 0.0
    %2814 = vmatprep.subr.mxu0 0.0
    %2815 = vmatpush1.msra.mxu0 0.0
    %2816 = vmatprep.subr.mxu0 0.0
    %2817 = vmatpush1.msra.mxu0 0.0
    %2818 = vmatprep.subr.mxu0 0.0
    %2819 = vmatpush1.msra.mxu0 0.0
    %2820 = vmatprep.subr.mxu0 0.0
    %2821 = vmatpush1.msra.mxu0 0.0
    %2822 = vmatprep.subr.mxu0 0.0
    %2823 = vmatpush1.msra.mxu0 0.0
    %2824 = vmatprep.subr.mxu0 0.0
    %2825 = vmatpush1.msra.mxu0 0.0
    %2826 = vmatprep.subr.mxu0 0.0
    %2827 = vmatpush1.msra.mxu0 0.0
    %2828 = vmatprep.subr.mxu0 0.0
    %2829 = vmatpush1.msra.mxu0 0.0
    %2830 = vmatprep.subr.mxu0 0.0
    %2831 = vmatpush1.msra.mxu0 0.0
    %2832 = vmatprep.subr.mxu0 0.0
    %2833 = vmatpush1.msra.mxu0 0.0
    %2834 = vmatprep.subr.mxu0 0.0
    %2835 = vmatpush1.msra.mxu0 0.0
    %2836 = vmatprep.subr.mxu0 0.0
    %2837 = vmatpush1.msra.mxu0 0.0
    %2838 = vmatprep.subr.mxu0 0.0
    %2839 = vmatpush1.msra.mxu0 0.0
    %2840 = vmatprep.subr.mxu0 0.0
    %2841 = vmatpush1.msra.mxu0 0.0
    %2842 = vmatprep.subr.mxu0 0.0
    %2843 = vmatpush1.msra.mxu0 0.0
    %2844 = vmatprep.subr.mxu0 0.0
    %2845 = vmatpush1.msra.mxu0 0.0
    %2846 = vmatprep.subr.mxu0 0.0
    %2847 = vmatpush1.msra.mxu0 0.0
    %2848 = vmatprep.subr.mxu0 0.0
    %2849 = vmatpush1.msra.mxu0 0.0
    %2850 = vmatprep.subr.mxu0 0.0
    %2851 = vmatpush1.msra.mxu0 0.0
    %2852 = vmatprep.subr.mxu0 0.0
    %2853 = vmatpush1.msra.mxu0 0.0
    %2854 = vmatprep.subr.mxu0 0.0
    %2855 = vmatpush1.msra.mxu0 0.0
    %2856 = vmatprep.mubr.f32.mxu0 0.0
    %2857 = vmatmul.mubr.f32.gmra.mrb[0].mxu0 %v2790
    %v2858 = vpop.f32.mrb[0].mxu0
    %v2859 = vadd.f32 0.0, %v2858
    %v2860 = vpop.f32.mrb[0].mxu0
    %2861 = vdwg.mxu0
    %2862 = vrot.lane.b32.xlu0 %v2517, 120
    %v2863 = vpop.permute.xlu0 %2862
    %2864 = vrot.lane.b32.xlu0 %v2517, 88
    %v2865 = vpop.permute.xlu0 %2864
    %v2866 = vsel %vm466, %v2863, 0
    %v2868 = vsel %vm466, %v2865, 0
    %2870 = vmatprep.subr.mxu0 0.0
    %2871 = vmatpush1.xpose.msra.mxu0 %v2868
    %2872 = vmatprep.subr.mxu0 0.0
    %2873 = vmatpush1.xpose.msra.mxu0 0.0
    %2874 = vmatprep.subr.mxu0 0.0
    %2875 = vmatpush1.xpose.msra.mxu0 0.0
    %2876 = vmatprep.subr.mxu0 0.0
    %2877 = vmatpush1.xpose.msra.mxu0 0.0
    %2878 = vmatprep.subr.mxu0 0.0
    %2879 = vmatpush1.xpose.msra.mxu0 0.0
    %2880 = vmatprep.subr.mxu0 0.0
    %2881 = vmatpush1.xpose.msra.mxu0 0.0
    %2882 = vmatprep.subr.mxu0 0.0
    %2883 = vmatpush1.xpose.msra.mxu0 0.0
    %2884 = vmatprep.subr.mxu0 0.0
    %2885 = vmatpush1.xpose.msra.mxu0 0.0
    %2886 = vmatprep.subr.mxu0 0.0
    %2887 = vmatpush1.xpose.msra.mxu0 0.0
    %2888 = vmatprep.subr.mxu0 0.0
    %2889 = vmatpush1.xpose.msra.mxu0 0.0
    %2890 = vmatprep.subr.mxu0 0.0
    %2891 = vmatpush1.xpose.msra.mxu0 0.0
    %2892 = vmatprep.subr.mxu0 0.0
    %2893 = vmatpush1.xpose.msra.mxu0 0.0
    %2894 = vmatprep.subr.mxu0 0.0
    %2895 = vmatpush1.xpose.msra.mxu0 0.0
    %2896 = vmatprep.subr.mxu0 0.0
    %2897 = vmatpush1.xpose.msra.mxu0 0.0
    %2898 = vmatprep.subr.mxu0 0.0
    %2899 = vmatpush1.xpose.msra.mxu0 0.0
    %2900 = vmatprep.subr.mxu0 0.0
    %2901 = vmatpush1.xpose.msra.mxu0 0.0
    %2902 = vmatprep.subr.mxu0 0.0
    %2903 = vmatpush1.xpose.msra.mxu0 0.0
    %2904 = vmatprep.subr.mxu0 0.0
    %2905 = vmatpush1.xpose.msra.mxu0 0.0
    %2906 = vmatprep.subr.mxu0 0.0
    %2907 = vmatpush1.xpose.msra.mxu0 0.0
    %2908 = vmatprep.subr.mxu0 0.0
    %2909 = vmatpush1.xpose.msra.mxu0 0.0
    %2910 = vmatprep.subr.mxu0 0.0
    %2911 = vmatpush1.xpose.msra.mxu0 0.0
    %2912 = vmatprep.subr.mxu0 0.0
    %2913 = vmatpush1.xpose.msra.mxu0 0.0
    %2914 = vmatprep.subr.mxu0 0.0
    %2915 = vmatpush1.xpose.msra.mxu0 0.0
    %2916 = vmatprep.subr.mxu0 0.0
    %2917 = vmatpush1.xpose.msra.mxu0 0.0
    %2918 = vmatprep.subr.mxu0 0.0
    %2919 = vmatpush1.xpose.msra.mxu0 0.0
    %2920 = vmatprep.subr.mxu0 0.0
    %2921 = vmatpush1.xpose.msra.mxu0 0.0
    %2922 = vmatprep.subr.mxu0 0.0
    %2923 = vmatpush1.xpose.msra.mxu0 0.0
    %2924 = vmatprep.subr.mxu0 0.0
    %2925 = vmatpush1.xpose.msra.mxu0 0.0
    %2926 = vmatprep.subr.mxu0 0.0
    %2927 = vmatpush1.xpose.msra.mxu0 0.0
    %2928 = vmatprep.subr.mxu0 0.0
    %2929 = vmatpush1.xpose.msra.mxu0 0.0
    %2930 = vmatprep.subr.mxu0 0.0
    %2931 = vmatpush1.xpose.msra.mxu0 0.0
    %2932 = vmatprep.subr.mxu0 0.0
    %2933 = vmatpush1.xpose.msra.mxu0 0.0
    %2934 = vmatprep.mubr.f32.mxu0 0.0
    %2935 = vmatmul.mubr.f32.gmra.mrb[0].mxu0 %v2866
    %v2936 = vpop.f32.mrb[0].mxu0
    %v2937 = vadd.f32 0.0, %v2936
    %v2938 = vpop.f32.mrb[0].mxu0
    %2939 = vdwg.mxu0
    %2940 = vrot.lane.b32.xlu0 %v2522, 120
    %v2941 = vpop.permute.xlu0 %2940
    %2942 = vrot.lane.b32.xlu0 %v2522, 88
    %v2943 = vpop.permute.xlu0 %2942
    %v2944 = vsel %vm466, %v2941, 0
    %v2946 = vsel %vm466, %v2943, 0
    %2948 = vmatprep.subr.mxu0 0.0
    %2949 = vmatpush1.xpose.msra.mxu0 %v2946
    %2950 = vmatprep.subr.mxu0 0.0
    %2951 = vmatpush1.xpose.msra.mxu0 0.0
    %2952 = vmatprep.subr.mxu0 0.0
    %2953 = vmatpush1.xpose.msra.mxu0 0.0
    %2954 = vmatprep.subr.mxu0 0.0
    %2955 = vmatpush1.xpose.msra.mxu0 0.0
    %2956 = vmatprep.subr.mxu0 0.0
    %2957 = vmatpush1.xpose.msra.mxu0 0.0
    %2958 = vmatprep.subr.mxu0 0.0
    %2959 = vmatpush1.xpose.msra.mxu0 0.0
    %2960 = vmatprep.subr.mxu0 0.0
    %2961 = vmatpush1.xpose.msra.mxu0 0.0
    %2962 = vmatprep.subr.mxu0 0.0
    %2963 = vmatpush1.xpose.msra.mxu0 0.0
    %2964 = vmatprep.subr.mxu0 0.0
    %2965 = vmatpush1.xpose.msra.mxu0 0.0
    %2966 = vmatprep.subr.mxu0 0.0
    %2967 = vmatpush1.xpose.msra.mxu0 0.0
    %2968 = vmatprep.subr.mxu0 0.0
    %2969 = vmatpush1.xpose.msra.mxu0 0.0
    %2970 = vmatprep.subr.mxu0 0.0
    %2971 = vmatpush1.xpose.msra.mxu0 0.0
    %2972 = vmatprep.subr.mxu0 0.0
    %2973 = vmatpush1.xpose.msra.mxu0 0.0
    %2974 = vmatprep.subr.mxu0 0.0
    %2975 = vmatpush1.xpose.msra.mxu0 0.0
    %2976 = vmatprep.subr.mxu0 0.0
    %2977 = vmatpush1.xpose.msra.mxu0 0.0
    %2978 = vmatprep.subr.mxu0 0.0
    %2979 = vmatpush1.xpose.msra.mxu0 0.0
    %2980 = vmatprep.subr.mxu0 0.0
    %2981 = vmatpush1.xpose.msra.mxu0 0.0
    %2982 = vmatprep.subr.mxu0 0.0
    %2983 = vmatpush1.xpose.msra.mxu0 0.0
    %2984 = vmatprep.subr.mxu0 0.0
    %2985 = vmatpush1.xpose.msra.mxu0 0.0
    %2986 = vmatprep.subr.mxu0 0.0
    %2987 = vmatpush1.xpose.msra.mxu0 0.0
    %2988 = vmatprep.subr.mxu0 0.0
    %2989 = vmatpush1.xpose.msra.mxu0 0.0
    %2990 = vmatprep.subr.mxu0 0.0
    %2991 = vmatpush1.xpose.msra.mxu0 0.0
    %2992 = vmatprep.subr.mxu0 0.0
    %2993 = vmatpush1.xpose.msra.mxu0 0.0
    %2994 = vmatprep.subr.mxu0 0.0
    %2995 = vmatpush1.xpose.msra.mxu0 0.0
    %2996 = vmatprep.subr.mxu0 0.0
    %2997 = vmatpush1.xpose.msra.mxu0 0.0
    %2998 = vmatprep.subr.mxu0 0.0
    %2999 = vmatpush1.xpose.msra.mxu0 0.0
    %3000 = vmatprep.subr.mxu0 0.0
    %3001 = vmatpush1.xpose.msra.mxu0 0.0
    %3002 = vmatprep.subr.mxu0 0.0
    %3003 = vmatpush1.xpose.msra.mxu0 0.0
    %3004 = vmatprep.subr.mxu0 0.0
    %3005 = vmatpush1.xpose.msra.mxu0 0.0
    %3006 = vmatprep.subr.mxu0 0.0
    %3007 = vmatpush1.xpose.msra.mxu0 0.0
    %3008 = vmatprep.subr.mxu0 0.0
    %3009 = vmatpush1.xpose.msra.mxu0 0.0
    %3010 = vmatprep.subr.mxu0 0.0
    %3011 = vmatpush1.xpose.msra.mxu0 0.0
    %3012 = vmatprep.mubr.f32.mxu0 0.0
    %3013 = vmatmul.mubr.f32.gmra.mrb[0].mxu0 %v2944
    %v3014 = vpop.f32.mrb[0].mxu0
    %v3015 = vadd.f32 0.0, %v3014
    %v3016 = vpop.f32.mrb[0].mxu0
    %3017 = vdwg.mxu0
    %v3018 = vmul.f32 %v2937, 0.35355338
    %v3019 = vmul.f32 %v3015, 0.35355338
    %v3020 = vadd.f32 %v3018, %v360
    %v3021 = vadd.f32 %v3019, %v364
    %v3022 = vsel %vm466, %v3020, -inf
    %3023 = vmax.xlane.f32.xlu0 %v3022
    %v3024 = vpop.xlane.xlu0 %3023
    %v3025 = vsel %vm466, %v3021, -inf
    %3026 = vmax.xlane.f32.xlu0 %v3025
    %v3027 = vpop.xlane.xlu0 %3026
    %v3028 = vsub.f32 %v3020, %v3024
    %v3029 = vsub.f32 %v3021, %v3027
    %v3030 = vmul.f32 %v3028, 1.442695
    %v3031 = vpow.pop %v3030
    %v3032 = vmul.f32 %v3029, 1.442695
    %v3033 = vpow.pop %v3032
    %v3034 = vsel %vm466, %v3031, 0.0
    %3035 = vadd.xlane.f32.xlu0 %v3034
    %v3036 = vpop.xlane.xlu0 %3035
    %v3037 = vsel %vm466, %v3033, 0.0
    %3038 = vadd.xlane.f32.xlu0 %v3037
    %v3039 = vpop.xlane.xlu0 %3038
    %v3040 = vrcp.pop %v3036
    %v3041 = vrcp.pop %v3039
    %v3042 = vmul.f32 %v3031, %v3040
    %v3043 = vmul.f32 %v3033, %v3041
    %3044 = vrot.lane.b32.xlu0 %v2517, 56
    %v3045 = vpop.permute.xlu0 %3044
    %v3048 = vsel %vm466, %v3042, 0
    %3050 = vmatprep.subr.mxu0 0.0
    %3051 = vmatpush1.msra.mxu0 %v3045
    %3052 = vmatprep.subr.mxu0 0.0
    %3053 = vmatpush1.msra.mxu0 0.0
    %3054 = vmatprep.subr.mxu0 0.0
    %3055 = vmatpush1.msra.mxu0 0.0
    %3056 = vmatprep.subr.mxu0 0.0
    %3057 = vmatpush1.msra.mxu0 0.0
    %3058 = vmatprep.subr.mxu0 0.0
    %3059 = vmatpush1.msra.mxu0 0.0
    %3060 = vmatprep.subr.mxu0 0.0
    %3061 = vmatpush1.msra.mxu0 0.0
    %3062 = vmatprep.subr.mxu0 0.0
    %3063 = vmatpush1.msra.mxu0 0.0
    %3064 = vmatprep.subr.mxu0 0.0
    %3065 = vmatpush1.msra.mxu0 0.0
    %3066 = vmatprep.subr.mxu0 0.0
    %3067 = vmatpush1.msra.mxu0 0.0
    %3068 = vmatprep.subr.mxu0 0.0
    %3069 = vmatpush1.msra.mxu0 0.0
    %3070 = vmatprep.subr.mxu0 0.0
    %3071 = vmatpush1.msra.mxu0 0.0
    %3072 = vmatprep.subr.mxu0 0.0
    %3073 = vmatpush1.msra.mxu0 0.0
    %3074 = vmatprep.subr.mxu0 0.0
    %3075 = vmatpush1.msra.mxu0 0.0
    %3076 = vmatprep.subr.mxu0 0.0
    %3077 = vmatpush1.msra.mxu0 0.0
    %3078 = vmatprep.subr.mxu0 0.0
    %3079 = vmatpush1.msra.mxu0 0.0
    %3080 = vmatprep.subr.mxu0 0.0
    %3081 = vmatpush1.msra.mxu0 0.0
    %3082 = vmatprep.subr.mxu0 0.0
    %3083 = vmatpush1.msra.mxu0 0.0
    %3084 = vmatprep.subr.mxu0 0.0
    %3085 = vmatpush1.msra.mxu0 0.0
    %3086 = vmatprep.subr.mxu0 0.0
    %3087 = vmatpush1.msra.mxu0 0.0
    %3088 = vmatprep.subr.mxu0 0.0
    %3089 = vmatpush1.msra.mxu0 0.0
    %3090 = vmatprep.subr.mxu0 0.0
    %3091 = vmatpush1.msra.mxu0 0.0
    %3092 = vmatprep.subr.mxu0 0.0
    %3093 = vmatpush1.msra.mxu0 0.0
    %3094 = vmatprep.subr.mxu0 0.0
    %3095 = vmatpush1.msra.mxu0 0.0
    %3096 = vmatprep.subr.mxu0 0.0
    %3097 = vmatpush1.msra.mxu0 0.0
    %3098 = vmatprep.subr.mxu0 0.0
    %3099 = vmatpush1.msra.mxu0 0.0
    %3100 = vmatprep.subr.mxu0 0.0
    %3101 = vmatpush1.msra.mxu0 0.0
    %3102 = vmatprep.subr.mxu0 0.0
    %3103 = vmatpush1.msra.mxu0 0.0
    %3104 = vmatprep.subr.mxu0 0.0
    %3105 = vmatpush1.msra.mxu0 0.0
    %3106 = vmatprep.subr.mxu0 0.0
    %3107 = vmatpush1.msra.mxu0 0.0
    %3108 = vmatprep.subr.mxu0 0.0
    %3109 = vmatpush1.msra.mxu0 0.0
    %3110 = vmatprep.subr.mxu0 0.0
    %3111 = vmatpush1.msra.mxu0 0.0
    %3112 = vmatprep.subr.mxu0 0.0
    %3113 = vmatpush1.msra.mxu0 0.0
    %3114 = vmatprep.mubr.f32.mxu0 0.0
    %3115 = vmatmul.mubr.f32.gmra.mrb[0].mxu0 %v3048
    %v3116 = vpop.f32.mrb[0].mxu0
    %v3117 = vadd.f32 0.0, %v3116
    %v3118 = vpop.f32.mrb[0].mxu0
    %3119 = vdwg.mxu0
    %3120 = vrot.lane.b32.xlu0 %v2522, 56
    %v3121 = vpop.permute.xlu0 %3120
    %v3124 = vsel %vm466, %v3043, 0
    %3126 = vmatprep.subr.mxu0 0.0
    %3127 = vmatpush1.msra.mxu0 %v3121
    %3128 = vmatprep.subr.mxu0 0.0
    %3129 = vmatpush1.msra.mxu0 0.0
    %3130 = vmatprep.subr.mxu0 0.0
    %3131 = vmatpush1.msra.mxu0 0.0
    %3132 = vmatprep.subr.mxu0 0.0
    %3133 = vmatpush1.msra.mxu0 0.0
    %3134 = vmatprep.subr.mxu0 0.0
    %3135 = vmatpush1.msra.mxu0 0.0
    %3136 = vmatprep.subr.mxu0 0.0
    %3137 = vmatpush1.msra.mxu0 0.0
    %3138 = vmatprep.subr.mxu0 0.0
    %3139 = vmatpush1.msra.mxu0 0.0
    %3140 = vmatprep.subr.mxu0 0.0
    %3141 = vmatpush1.msra.mxu0 0.0
    %3142 = vmatprep.subr.mxu0 0.0
    %3143 = vmatpush1.msra.mxu0 0.0
    %3144 = vmatprep.subr.mxu0 0.0
    %3145 = vmatpush1.msra.mxu0 0.0
    %3146 = vmatprep.subr.mxu0 0.0
    %3147 = vmatpush1.msra.mxu0 0.0
    %3148 = vmatprep.subr.mxu0 0.0
    %3149 = vmatpush1.msra.mxu0 0.0
    %3150 = vmatprep.subr.mxu0 0.0
    %3151 = vmatpush1.msra.mxu0 0.0
    %3152 = vmatprep.subr.mxu0 0.0
    %3153 = vmatpush1.msra.mxu0 0.0
    %3154 = vmatprep.subr.mxu0 0.0
    %3155 = vmatpush1.msra.mxu0 0.0
    %3156 = vmatprep.subr.mxu0 0.0
    %3157 = vmatpush1.msra.mxu0 0.0
    %3158 = vmatprep.subr.mxu0 0.0
    %3159 = vmatpush1.msra.mxu0 0.0
    %3160 = vmatprep.subr.mxu0 0.0
    %3161 = vmatpush1.msra.mxu0 0.0
    %3162 = vmatprep.subr.mxu0 0.0
    %3163 = vmatpush1.msra.mxu0 0.0
    %3164 = vmatprep.subr.mxu0 0.0
    %3165 = vmatpush1.msra.mxu0 0.0
    %3166 = vmatprep.subr.mxu0 0.0
    %3167 = vmatpush1.msra.mxu0 0.0
    %3168 = vmatprep.subr.mxu0 0.0
    %3169 = vmatpush1.msra.mxu0 0.0
    %3170 = vmatprep.subr.mxu0 0.0
    %3171 = vmatpush1.msra.mxu0 0.0
    %3172 = vmatprep.subr.mxu0 0.0
    %3173 = vmatpush1.msra.mxu0 0.0
    %3174 = vmatprep.subr.mxu0 0.0
    %3175 = vmatpush1.msra.mxu0 0.0
    %3176 = vmatprep.subr.mxu0 0.0
    %3177 = vmatpush1.msra.mxu0 0.0
    %3178 = vmatprep.subr.mxu0 0.0
    %3179 = vmatpush1.msra.mxu0 0.0
    %3180 = vmatprep.subr.mxu0 0.0
    %3181 = vmatpush1.msra.mxu0 0.0
    %3182 = vmatprep.subr.mxu0 0.0
    %3183 = vmatpush1.msra.mxu0 0.0
    %3184 = vmatprep.subr.mxu0 0.0
    %3185 = vmatpush1.msra.mxu0 0.0
    %3186 = vmatprep.subr.mxu0 0.0
    %3187 = vmatpush1.msra.mxu0 0.0
    %3188 = vmatprep.subr.mxu0 0.0
    %3189 = vmatpush1.msra.mxu0 0.0
    %3190 = vmatprep.mubr.f32.mxu0 0.0
    %3191 = vmatmul.mubr.f32.gmra.mrb[0].mxu0 %v3124
    %v3192 = vpop.f32.mrb[0].mxu0
    %v3193 = vadd.f32 0.0, %v3192
    %v3194 = vpop.f32.mrb[0].mxu0
    %3195 = vdwg.mxu0
    %v3197 = vsel %vm466, %v3117, 0
    %v3200 = vsel %vm466, %v3193, 0
    %3202 = vmatprep.subr.mxu0 0.0
    %3203 = vmatpush1.msra.mxu0 %v2527
    %3204 = vmatprep.subr.mxu0 0.0
    %3205 = vmatpush1.msra.mxu0 0.0
    %3206 = vmatprep.subr.mxu0 0.0
    %3207 = vmatpush1.msra.mxu0 0.0
    %3208 = vmatprep.subr.mxu0 0.0
    %3209 = vmatpush1.msra.mxu0 0.0
    %3210 = vmatprep.subr.mxu0 0.0
    %3211 = vmatpush1.msra.mxu0 0.0
    %3212 = vmatprep.subr.mxu0 0.0
    %3213 = vmatpush1.msra.mxu0 0.0
    %3214 = vmatprep.subr.mxu0 0.0
    %3215 = vmatpush1.msra.mxu0 0.0
    %3216 = vmatprep.subr.mxu0 0.0
    %3217 = vmatpush1.msra.mxu0 0.0
    %3218 = vmatprep.subr.mxu0 0.0
    %3219 = vmatpush1.msra.mxu0 0.0
    %3220 = vmatprep.subr.mxu0 0.0
    %3221 = vmatpush1.msra.mxu0 0.0
    %3222 = vmatprep.subr.mxu0 0.0
    %3223 = vmatpush1.msra.mxu0 0.0
    %3224 = vmatprep.subr.mxu0 0.0
    %3225 = vmatpush1.msra.mxu0 0.0
    %3226 = vmatprep.subr.mxu0 0.0
    %3227 = vmatpush1.msra.mxu0 0.0
    %3228 = vmatprep.subr.mxu0 0.0
    %3229 = vmatpush1.msra.mxu0 0.0
    %3230 = vmatprep.subr.mxu0 0.0
    %3231 = vmatpush1.msra.mxu0 0.0
    %3232 = vmatprep.subr.mxu0 0.0
    %3233 = vmatpush1.msra.mxu0 0.0
    %3234 = vmatprep.subr.mxu0 0.0
    %3235 = vmatpush1.msra.mxu0 0.0
    %3236 = vmatprep.subr.mxu0 0.0
    %3237 = vmatpush1.msra.mxu0 0.0
    %3238 = vmatprep.subr.mxu0 0.0
    %3239 = vmatpush1.msra.mxu0 0.0
    %3240 = vmatprep.subr.mxu0 0.0
    %3241 = vmatpush1.msra.mxu0 0.0
    %3242 = vmatprep.subr.mxu0 0.0
    %3243 = vmatpush1.msra.mxu0 0.0
    %3244 = vmatprep.subr.mxu0 0.0
    %3245 = vmatpush1.msra.mxu0 0.0
    %3246 = vmatprep.subr.mxu0 0.0
    %3247 = vmatpush1.msra.mxu0 0.0
    %3248 = vmatprep.subr.mxu0 0.0
    %3249 = vmatpush1.msra.mxu0 0.0
    %3250 = vmatprep.subr.mxu0 0.0
    %3251 = vmatpush1.msra.mxu0 0.0
    %3252 = vmatprep.subr.mxu0 0.0
    %3253 = vmatpush1.msra.mxu0 0.0
    %3254 = vmatprep.subr.mxu0 0.0
    %3255 = vmatpush1.msra.mxu0 0.0
    %3256 = vmatprep.subr.mxu0 0.0
    %3257 = vmatpush1.msra.mxu0 0.0
    %3258 = vmatprep.subr.mxu0 0.0
    %3259 = vmatpush1.msra.mxu0 0.0
    %3260 = vmatprep.subr.mxu0 0.0
    %3261 = vmatpush1.msra.mxu0 0.0
    %3262 = vmatprep.subr.mxu0 0.0
    %3263 = vmatpush1.msra.mxu0 0.0
    %3264 = vmatprep.subr.mxu0 0.0
    %3265 = vmatpush1.msra.mxu0 0.0
    %3266 = vmatprep.mubr.f32.mxu0 0.0
    %3267 = vmatmul.mubr.f32.gmra.mrb[0].mxu0 %v3197
    %v3268 = vpop.f32.mrb[0].mxu0
    %v3269 = vadd.f32 0.0, %v3268
    %v3270 = vpop.f32.mrb[0].mxu0
    %3271 = vmatprep.mubr.f32.mxu0 0.0
    %3272 = vmatmul.mubr.f32.gmra.mrb[0].mxu0 %v3200
    %v3273 = vpop.f32.mrb[0].mxu0
    %v3274 = vadd.f32 0.0, %v3273
    %v3275 = vpop.f32.mrb[0].mxu0
    %3276 = vdwg.mxu0
    %v3278 = vsel %vm466, %v2783, 0
    %v3281 = vsel %vm466, %v2859, 0
    %3283 = vmatprep.subr.mxu0 0.0
    %3284 = vmatpush1.msra.mxu0 %v2526
    %3285 = vmatprep.subr.mxu0 0.0
    %3286 = vmatpush1.msra.mxu0 0.0
    %3287 = vmatprep.subr.mxu0 0.0
    %3288 = vmatpush1.msra.mxu0 0.0
    %3289 = vmatprep.subr.mxu0 0.0
    %3290 = vmatpush1.msra.mxu0 0.0
    %3291 = vmatprep.subr.mxu0 0.0
    %3292 = vmatpush1.msra.mxu0 0.0
    %3293 = vmatprep.subr.mxu0 0.0
    %3294 = vmatpush1.msra.mxu0 0.0
    %3295 = vmatprep.subr.mxu0 0.0
    %3296 = vmatpush1.msra.mxu0 0.0
    %3297 = vmatprep.subr.mxu0 0.0
    %3298 = vmatpush1.msra.mxu0 0.0
    %3299 = vmatprep.subr.mxu0 0.0
    %3300 = vmatpush1.msra.mxu0 0.0
    %3301 = vmatprep.subr.mxu0 0.0
    %3302 = vmatpush1.msra.mxu0 0.0
    %3303 = vmatprep.subr.mxu0 0.0
    %3304 = vmatpush1.msra.mxu0 0.0
    %3305 = vmatprep.subr.mxu0 0.0
    %3306 = vmatpush1.msra.mxu0 0.0
    %3307 = vmatprep.subr.mxu0 0.0
    %3308 = vmatpush1.msra.mxu0 0.0
    %3309 = vmatprep.subr.mxu0 0.0
    %3310 = vmatpush1.msra.mxu0 0.0
    %3311 = vmatprep.subr.mxu0 0.0
    %3312 = vmatpush1.msra.mxu0 0.0
    %3313 = vmatprep.subr.mxu0 0.0
    %3314 = vmatpush1.msra.mxu0 0.0
    %3315 = vmatprep.subr.mxu0 0.0
    %3316 = vmatpush1.msra.mxu0 0.0
    %3317 = vmatprep.subr.mxu0 0.0
    %3318 = vmatpush1.msra.mxu0 0.0
    %3319 = vmatprep.subr.mxu0 0.0
    %3320 = vmatpush1.msra.mxu0 0.0
    %3321 = vmatprep.subr.mxu0 0.0
    %3322 = vmatpush1.msra.mxu0 0.0
    %3323 = vmatprep.subr.mxu0 0.0
    %3324 = vmatpush1.msra.mxu0 0.0
    %3325 = vmatprep.subr.mxu0 0.0
    %3326 = vmatpush1.msra.mxu0 0.0
    %3327 = vmatprep.subr.mxu0 0.0
    %3328 = vmatpush1.msra.mxu0 0.0
    %3329 = vmatprep.subr.mxu0 0.0
    %3330 = vmatpush1.msra.mxu0 0.0
    %3331 = vmatprep.subr.mxu0 0.0
    %3332 = vmatpush1.msra.mxu0 0.0
    %3333 = vmatprep.subr.mxu0 0.0
    %3334 = vmatpush1.msra.mxu0 0.0
    %3335 = vmatprep.subr.mxu0 0.0
    %3336 = vmatpush1.msra.mxu0 0.0
    %3337 = vmatprep.subr.mxu0 0.0
    %3338 = vmatpush1.msra.mxu0 0.0
    %3339 = vmatprep.subr.mxu0 0.0
    %3340 = vmatpush1.msra.mxu0 0.0
    %3341 = vmatprep.subr.mxu0 0.0
    %3342 = vmatpush1.msra.mxu0 0.0
    %3343 = vmatprep.subr.mxu0 0.0
    %3344 = vmatpush1.msra.mxu0 0.0
    %3345 = vmatprep.subr.mxu0 0.0
    %3346 = vmatpush1.msra.mxu0 0.0
    %3347 = vmatprep.mubr.f32.mxu0 0.0
    %3348 = vmatmul.mubr.f32.gmra.mrb[0].mxu0 %v3278
    %v3349 = vpop.f32.mrb[0].mxu0
    %v3350 = vadd.f32 %v3269, %v3349
    %v3351 = vpop.f32.mrb[0].mxu0
    %3352 = vmatprep.mubr.f32.mxu0 0.0
    %3353 = vmatmul.mubr.f32.gmra.mrb[0].mxu0 %v3281
    %v3354 = vpop.f32.mrb[0].mxu0
    %v3355 = vadd.f32 %v3274, %v3354
    %v3356 = vpop.f32.mrb[0].mxu0
    %3357 = vdwg.mxu0
    %3358 = vrot.lane.b32.xlu0 %v2517, 112
    %v3359 = vpop.permute.xlu0 %3358
    %3360 = vrot.lane.b32.xlu0 %v2517, 80
    %v3361 = vpop.permute.xlu0 %3360
    %v3362 = vsel %vm466, %v3359, 0
    %v3364 = vsel %vm466, %v3361, 0
    %3366 = vmatprep.subr.mxu0 0.0
    %3367 = vmatpush1.xpose.msra.mxu0 %v3364
    %3368 = vmatprep.subr.mxu0 0.0
    %3369 = vmatpush1.xpose.msra.mxu0 0.0
    %3370 = vmatprep.subr.mxu0 0.0
    %3371 = vmatpush1.xpose.msra.mxu0 0.0
    %3372 = vmatprep.subr.mxu0 0.0
    %3373 = vmatpush1.xpose.msra.mxu0 0.0
    %3374 = vmatprep.subr.mxu0 0.0
    %3375 = vmatpush1.xpose.msra.mxu0 0.0
    %3376 = vmatprep.subr.mxu0 0.0
    %3377 = vmatpush1.xpose.msra.mxu0 0.0
    %3378 = vmatprep.subr.mxu0 0.0
    %3379 = vmatpush1.xpose.msra.mxu0 0.0
    %3380 = vmatprep.subr.mxu0 0.0
    %3381 = vmatpush1.xpose.msra.mxu0 0.0
    %3382 = vmatprep.subr.mxu0 0.0
    %3383 = vmatpush1.xpose.msra.mxu0 0.0
    %3384 = vmatprep.subr.mxu0 0.0
    %3385 = vmatpush1.xpose.msra.mxu0 0.0
    %3386 = vmatprep.subr.mxu0 0.0
    %3387 = vmatpush1.xpose.msra.mxu0 0.0
    %3388 = vmatprep.subr.mxu0 0.0
    %3389 = vmatpush1.xpose.msra.mxu0 0.0
    %3390 = vmatprep.subr.mxu0 0.0
    %3391 = vmatpush1.xpose.msra.mxu0 0.0
    %3392 = vmatprep.subr.mxu0 0.0
    %3393 = vmatpush1.xpose.msra.mxu0 0.0
    %3394 = vmatprep.subr.mxu0 0.0
    %3395 = vmatpush1.xpose.msra.mxu0 0.0
    %3396 = vmatprep.subr.mxu0 0.0
    %3397 = vmatpush1.xpose.msra.mxu0 0.0
    %3398 = vmatprep.subr.mxu0 0.0
    %3399 = vmatpush1.xpose.msra.mxu0 0.0
    %3400 = vmatprep.subr.mxu0 0.0
    %3401 = vmatpush1.xpose.msra.mxu0 0.0
    %3402 = vmatprep.subr.mxu0 0.0
    %3403 = vmatpush1.xpose.msra.mxu0 0.0
    %3404 = vmatprep.subr.mxu0 0.0
    %3405 = vmatpush1.xpose.msra.mxu0 0.0
    %3406 = vmatprep.subr.mxu0 0.0
    %3407 = vmatpush1.xpose.msra.mxu0 0.0
    %3408 = vmatprep.subr.mxu0 0.0
    %3409 = vmatpush1.xpose.msra.mxu0 0.0
    %3410 = vmatprep.subr.mxu0 0.0
    %3411 = vmatpush1.xpose.msra.mxu0 0.0
    %3412 = vmatprep.subr.mxu0 0.0
    %3413 = vmatpush1.xpose.msra.mxu0 0.0
    %3414 = vmatprep.subr.mxu0 0.0
    %3415 = vmatpush1.xpose.msra.mxu0 0.0
    %3416 = vmatprep.subr.mxu0 0.0
    %3417 = vmatpush1.xpose.msra.mxu0 0.0
    %3418 = vmatprep.subr.mxu0 0.0
    %3419 = vmatpush1.xpose.msra.mxu0 0.0
    %3420 = vmatprep.subr.mxu0 0.0
    %3421 = vmatpush1.xpose.msra.mxu0 0.0
    %3422 = vmatprep.subr.mxu0 0.0
    %3423 = vmatpush1.xpose.msra.mxu0 0.0
    %3424 = vmatprep.subr.mxu0 0.0
    %3425 = vmatpush1.xpose.msra.mxu0 0.0
    %3426 = vmatprep.subr.mxu0 0.0
    %3427 = vmatpush1.xpose.msra.mxu0 0.0
    %3428 = vmatprep.subr.mxu0 0.0
    %3429 = vmatpush1.xpose.msra.mxu0 0.0
    %3430 = vmatprep.mubr.f32.mxu0 0.0
    %3431 = vmatmul.mubr.f32.gmra.mrb[0].mxu0 %v3362
    %v3432 = vpop.f32.mrb[0].mxu0
    %v3433 = vadd.f32 0.0, %v3432
    %v3434 = vpop.f32.mrb[0].mxu0
    %3435 = vdwg.mxu0
    %3436 = vrot.lane.b32.xlu0 %v2522, 112
    %v3437 = vpop.permute.xlu0 %3436
    %3438 = vrot.lane.b32.xlu0 %v2522, 80
    %v3439 = vpop.permute.xlu0 %3438
    %v3440 = vsel %vm466, %v3437, 0
    %v3442 = vsel %vm466, %v3439, 0
    %3444 = vmatprep.subr.mxu0 0.0
    %3445 = vmatpush1.xpose.msra.mxu0 %v3442
    %3446 = vmatprep.subr.mxu0 0.0
    %3447 = vmatpush1.xpose.msra.mxu0 0.0
    %3448 = vmatprep.subr.mxu0 0.0
    %3449 = vmatpush1.xpose.msra.mxu0 0.0
    %3450 = vmatprep.subr.mxu0 0.0
    %3451 = vmatpush1.xpose.msra.mxu0 0.0
    %3452 = vmatprep.subr.mxu0 0.0
    %3453 = vmatpush1.xpose.msra.mxu0 0.0
    %3454 = vmatprep.subr.mxu0 0.0
    %3455 = vmatpush1.xpose.msra.mxu0 0.0
    %3456 = vmatprep.subr.mxu0 0.0
    %3457 = vmatpush1.xpose.msra.mxu0 0.0
    %3458 = vmatprep.subr.mxu0 0.0
    %3459 = vmatpush1.xpose.msra.mxu0 0.0
    %3460 = vmatprep.subr.mxu0 0.0
    %3461 = vmatpush1.xpose.msra.mxu0 0.0
    %3462 = vmatprep.subr.mxu0 0.0
    %3463 = vmatpush1.xpose.msra.mxu0 0.0
    %3464 = vmatprep.subr.mxu0 0.0
    %3465 = vmatpush1.xpose.msra.mxu0 0.0
    %3466 = vmatprep.subr.mxu0 0.0
    %3467 = vmatpush1.xpose.msra.mxu0 0.0
    %3468 = vmatprep.subr.mxu0 0.0
    %3469 = vmatpush1.xpose.msra.mxu0 0.0
    %3470 = vmatprep.subr.mxu0 0.0
    %3471 = vmatpush1.xpose.msra.mxu0 0.0
    %3472 = vmatprep.subr.mxu0 0.0
    %3473 = vmatpush1.xpose.msra.mxu0 0.0
    %3474 = vmatprep.subr.mxu0 0.0
    %3475 = vmatpush1.xpose.msra.mxu0 0.0
    %3476 = vmatprep.subr.mxu0 0.0
    %3477 = vmatpush1.xpose.msra.mxu0 0.0
    %3478 = vmatprep.subr.mxu0 0.0
    %3479 = vmatpush1.xpose.msra.mxu0 0.0
    %3480 = vmatprep.subr.mxu0 0.0
    %3481 = vmatpush1.xpose.msra.mxu0 0.0
    %3482 = vmatprep.subr.mxu0 0.0
    %3483 = vmatpush1.xpose.msra.mxu0 0.0
    %3484 = vmatprep.subr.mxu0 0.0
    %3485 = vmatpush1.xpose.msra.mxu0 0.0
    %3486 = vmatprep.subr.mxu0 0.0
    %3487 = vmatpush1.xpose.msra.mxu0 0.0
    %3488 = vmatprep.subr.mxu0 0.0
    %3489 = vmatpush1.xpose.msra.mxu0 0.0
    %3490 = vmatprep.subr.mxu0 0.0
    %3491 = vmatpush1.xpose.msra.mxu0 0.0
    %3492 = vmatprep.subr.mxu0 0.0
    %3493 = vmatpush1.xpose.msra.mxu0 0.0
    %3494 = vmatprep.subr.mxu0 0.0
    %3495 = vmatpush1.xpose.msra.mxu0 0.0
    %3496 = vmatprep.subr.mxu0 0.0
    %3497 = vmatpush1.xpose.msra.mxu0 0.0
    %3498 = vmatprep.subr.mxu0 0.0
    %3499 = vmatpush1.xpose.msra.mxu0 0.0
    %3500 = vmatprep.subr.mxu0 0.0
    %3501 = vmatpush1.xpose.msra.mxu0 0.0
    %3502 = vmatprep.subr.mxu0 0.0
    %3503 = vmatpush1.xpose.msra.mxu0 0.0
    %3504 = vmatprep.subr.mxu0 0.0
    %3505 = vmatpush1.xpose.msra.mxu0 0.0
    %3506 = vmatprep.subr.mxu0 0.0
    %3507 = vmatpush1.xpose.msra.mxu0 0.0
    %3508 = vmatprep.mubr.f32.mxu0 0.0
    %3509 = vmatmul.mubr.f32.gmra.mrb[0].mxu0 %v3440
    %v3510 = vpop.f32.mrb[0].mxu0
    %v3511 = vadd.f32 0.0, %v3510
    %v3512 = vpop.f32.mrb[0].mxu0
    %3513 = vdwg.mxu0
    %v3514 = vmul.f32 %v3433, 0.35355338
    %v3515 = vmul.f32 %v3511, 0.35355338
    %v3516 = vadd.f32 %v3514, %v360
    %v3517 = vadd.f32 %v3515, %v364
    %v3518 = vsel %vm466, %v3516, -inf
    %3519 = vmax.xlane.f32.xlu0 %v3518
    %v3520 = vpop.xlane.xlu0 %3519
    %v3521 = vsel %vm466, %v3517, -inf
    %3522 = vmax.xlane.f32.xlu0 %v3521
    %v3523 = vpop.xlane.xlu0 %3522
    %v3524 = vsub.f32 %v3516, %v3520
    %v3525 = vsub.f32 %v3517, %v3523
    %v3526 = vmul.f32 %v3524, 1.442695
    %v3527 = vpow.pop %v3526
    %v3528 = vmul.f32 %v3525, 1.442695
    %v3529 = vpow.pop %v3528
    %v3530 = vsel %vm466, %v3527, 0.0
    %3531 = vadd.xlane.f32.xlu0 %v3530
    %v3532 = vpop.xlane.xlu0 %3531
    %v3533 = vsel %vm466, %v3529, 0.0
    %3534 = vadd.xlane.f32.xlu0 %v3533
    %v3535 = vpop.xlane.xlu0 %3534
    %v3536 = vrcp.pop %v3532
    %v3537 = vrcp.pop %v3535
    %v3538 = vmul.f32 %v3527, %v3536
    %v3539 = vmul.f32 %v3529, %v3537
    %3540 = vrot.lane.b32.xlu0 %v2517, 48
    %v3541 = vpop.permute.xlu0 %3540
    %v3544 = vsel %vm466, %v3538, 0
    %3546 = vmatprep.subr.mxu0 0.0
    %3547 = vmatpush1.msra.mxu0 %v3541
    %3548 = vmatprep.subr.mxu0 0.0
    %3549 = vmatpush1.msra.mxu0 0.0
    %3550 = vmatprep.subr.mxu0 0.0
    %3551 = vmatpush1.msra.mxu0 0.0
    %3552 = vmatprep.subr.mxu0 0.0
    %3553 = vmatpush1.msra.mxu0 0.0
    %3554 = vmatprep.subr.mxu0 0.0
    %3555 = vmatpush1.msra.mxu0 0.0
    %3556 = vmatprep.subr.mxu0 0.0
    %3557 = vmatpush1.msra.mxu0 0.0
    %3558 = vmatprep.subr.mxu0 0.0
    %3559 = vmatpush1.msra.mxu0 0.0
    %3560 = vmatprep.subr.mxu0 0.0
    %3561 = vmatpush1.msra.mxu0 0.0
    %3562 = vmatprep.subr.mxu0 0.0
    %3563 = vmatpush1.msra.mxu0 0.0
    %3564 = vmatprep.subr.mxu0 0.0
    %3565 = vmatpush1.msra.mxu0 0.0
    %3566 = vmatprep.subr.mxu0 0.0
    %3567 = vmatpush1.msra.mxu0 0.0
    %3568 = vmatprep.subr.mxu0 0.0
    %3569 = vmatpush1.msra.mxu0 0.0
    %3570 = vmatprep.subr.mxu0 0.0
    %3571 = vmatpush1.msra.mxu0 0.0
    %3572 = vmatprep.subr.mxu0 0.0
    %3573 = vmatpush1.msra.mxu0 0.0
    %3574 = vmatprep.subr.mxu0 0.0
    %3575 = vmatpush1.msra.mxu0 0.0
    %3576 = vmatprep.subr.mxu0 0.0
    %3577 = vmatpush1.msra.mxu0 0.0
    %3578 = vmatprep.subr.mxu0 0.0
    %3579 = vmatpush1.msra.mxu0 0.0
    %3580 = vmatprep.subr.mxu0 0.0
    %3581 = vmatpush1.msra.mxu0 0.0
    %3582 = vmatprep.subr.mxu0 0.0
    %3583 = vmatpush1.msra.mxu0 0.0
    %3584 = vmatprep.subr.mxu0 0.0
    %3585 = vmatpush1.msra.mxu0 0.0
    %3586 = vmatprep.subr.mxu0 0.0
    %3587 = vmatpush1.msra.mxu0 0.0
    %3588 = vmatprep.subr.mxu0 0.0
    %3589 = vmatpush1.msra.mxu0 0.0
    %3590 = vmatprep.subr.mxu0 0.0
    %3591 = vmatpush1.msra.mxu0 0.0
    %3592 = vmatprep.subr.mxu0 0.0
    %3593 = vmatpush1.msra.mxu0 0.0
    %3594 = vmatprep.subr.mxu0 0.0
    %3595 = vmatpush1.msra.mxu0 0.0
    %3596 = vmatprep.subr.mxu0 0.0
    %3597 = vmatpush1.msra.mxu0 0.0
    %3598 = vmatprep.subr.mxu0 0.0
    %3599 = vmatpush1.msra.mxu0 0.0
    %3600 = vmatprep.subr.mxu0 0.0
    %3601 = vmatpush1.msra.mxu0 0.0
    %3602 = vmatprep.subr.mxu0 0.0
    %3603 = vmatpush1.msra.mxu0 0.0
    %3604 = vmatprep.subr.mxu0 0.0
    %3605 = vmatpush1.msra.mxu0 0.0
    %3606 = vmatprep.subr.mxu0 0.0
    %3607 = vmatpush1.msra.mxu0 0.0
    %3608 = vmatprep.subr.mxu0 0.0
    %3609 = vmatpush1.msra.mxu0 0.0
    %3610 = vmatprep.mubr.f32.mxu0 0.0
    %3611 = vmatmul.mubr.f32.gmra.mrb[0].mxu0 %v3544
    %v3612 = vpop.f32.mrb[0].mxu0
    %v3613 = vadd.f32 0.0, %v3612
    %v3614 = vpop.f32.mrb[0].mxu0
    %3615 = vdwg.mxu0
    %3616 = vrot.lane.b32.xlu0 %v2522, 48
    %v3617 = vpop.permute.xlu0 %3616
    %v3620 = vsel %vm466, %v3539, 0
    %3622 = vmatprep.subr.mxu0 0.0
    %3623 = vmatpush1.msra.mxu0 %v3617
    %3624 = vmatprep.subr.mxu0 0.0
    %3625 = vmatpush1.msra.mxu0 0.0
    %3626 = vmatprep.subr.mxu0 0.0
    %3627 = vmatpush1.msra.mxu0 0.0
    %3628 = vmatprep.subr.mxu0 0.0
    %3629 = vmatpush1.msra.mxu0 0.0
    %3630 = vmatprep.subr.mxu0 0.0
    %3631 = vmatpush1.msra.mxu0 0.0
    %3632 = vmatprep.subr.mxu0 0.0
    %3633 = vmatpush1.msra.mxu0 0.0
    %3634 = vmatprep.subr.mxu0 0.0
    %3635 = vmatpush1.msra.mxu0 0.0
    %3636 = vmatprep.subr.mxu0 0.0
    %3637 = vmatpush1.msra.mxu0 0.0
    %3638 = vmatprep.subr.mxu0 0.0
    %3639 = vmatpush1.msra.mxu0 0.0
    %3640 = vmatprep.subr.mxu0 0.0
    %3641 = vmatpush1.msra.mxu0 0.0
    %3642 = vmatprep.subr.mxu0 0.0
    %3643 = vmatpush1.msra.mxu0 0.0
    %3644 = vmatprep.subr.mxu0 0.0
    %3645 = vmatpush1.msra.mxu0 0.0
    %3646 = vmatprep.subr.mxu0 0.0
    %3647 = vmatpush1.msra.mxu0 0.0
    %3648 = vmatprep.subr.mxu0 0.0
    %3649 = vmatpush1.msra.mxu0 0.0
    %3650 = vmatprep.subr.mxu0 0.0
    %3651 = vmatpush1.msra.mxu0 0.0
    %3652 = vmatprep.subr.mxu0 0.0
    %3653 = vmatpush1.msra.mxu0 0.0
    %3654 = vmatprep.subr.mxu0 0.0
    %3655 = vmatpush1.msra.mxu0 0.0
    %3656 = vmatprep.subr.mxu0 0.0
    %3657 = vmatpush1.msra.mxu0 0.0
    %3658 = vmatprep.subr.mxu0 0.0
    %3659 = vmatpush1.msra.mxu0 0.0
    %3660 = vmatprep.subr.mxu0 0.0
    %3661 = vmatpush1.msra.mxu0 0.0
    %3662 = vmatprep.subr.mxu0 0.0
    %3663 = vmatpush1.msra.mxu0 0.0
    %3664 = vmatprep.subr.mxu0 0.0
    %3665 = vmatpush1.msra.mxu0 0.0
    %3666 = vmatprep.subr.mxu0 0.0
    %3667 = vmatpush1.msra.mxu0 0.0
    %3668 = vmatprep.subr.mxu0 0.0
    %3669 = vmatpush1.msra.mxu0 0.0
    %3670 = vmatprep.subr.mxu0 0.0
    %3671 = vmatpush1.msra.mxu0 0.0
    %3672 = vmatprep.subr.mxu0 0.0
    %3673 = vmatpush1.msra.mxu0 0.0
    %3674 = vmatprep.subr.mxu0 0.0
    %3675 = vmatpush1.msra.mxu0 0.0
    %3676 = vmatprep.subr.mxu0 0.0
    %3677 = vmatpush1.msra.mxu0 0.0
    %3678 = vmatprep.subr.mxu0 0.0
    %3679 = vmatpush1.msra.mxu0 0.0
    %3680 = vmatprep.subr.mxu0 0.0
    %3681 = vmatpush1.msra.mxu0 0.0
    %3682 = vmatprep.subr.mxu0 0.0
    %3683 = vmatpush1.msra.mxu0 0.0
    %3684 = vmatprep.subr.mxu0 0.0
    %3685 = vmatpush1.msra.mxu0 0.0
    %3686 = vmatprep.mubr.f32.mxu0 0.0
    %3687 = vmatmul.mubr.f32.gmra.mrb[0].mxu0 %v3620
    %v3688 = vpop.f32.mrb[0].mxu0
    %v3689 = vadd.f32 0.0, %v3688
    %v3690 = vpop.f32.mrb[0].mxu0
    %3691 = vdwg.mxu0
    %v3693 = vsel %vm466, %v3613, 0
    %v3696 = vsel %vm466, %v3689, 0
    %3698 = vmatprep.subr.mxu0 0.0
    %3699 = vmatpush1.msra.mxu0 %v2528
    %3700 = vmatprep.subr.mxu0 0.0
    %3701 = vmatpush1.msra.mxu0 0.0
    %3702 = vmatprep.subr.mxu0 0.0
    %3703 = vmatpush1.msra.mxu0 0.0
    %3704 = vmatprep.subr.mxu0 0.0
    %3705 = vmatpush1.msra.mxu0 0.0
    %3706 = vmatprep.subr.mxu0 0.0
    %3707 = vmatpush1.msra.mxu0 0.0
    %3708 = vmatprep.subr.mxu0 0.0
    %3709 = vmatpush1.msra.mxu0 0.0
    %3710 = vmatprep.subr.mxu0 0.0
    %3711 = vmatpush1.msra.mxu0 0.0
    %3712 = vmatprep.subr.mxu0 0.0
    %3713 = vmatpush1.msra.mxu0 0.0
    %3714 = vmatprep.subr.mxu0 0.0
    %3715 = vmatpush1.msra.mxu0 0.0
    %3716 = vmatprep.subr.mxu0 0.0
    %3717 = vmatpush1.msra.mxu0 0.0
    %3718 = vmatprep.subr.mxu0 0.0
    %3719 = vmatpush1.msra.mxu0 0.0
    %3720 = vmatprep.subr.mxu0 0.0
    %3721 = vmatpush1.msra.mxu0 0.0
    %3722 = vmatprep.subr.mxu0 0.0
    %3723 = vmatpush1.msra.mxu0 0.0
    %3724 = vmatprep.subr.mxu0 0.0
    %3725 = vmatpush1.msra.mxu0 0.0
    %3726 = vmatprep.subr.mxu0 0.0
    %3727 = vmatpush1.msra.mxu0 0.0
    %3728 = vmatprep.subr.mxu0 0.0
    %3729 = vmatpush1.msra.mxu0 0.0
    %3730 = vmatprep.subr.mxu0 0.0
    %3731 = vmatpush1.msra.mxu0 0.0
    %3732 = vmatprep.subr.mxu0 0.0
    %3733 = vmatpush1.msra.mxu0 0.0
    %3734 = vmatprep.subr.mxu0 0.0
    %3735 = vmatpush1.msra.mxu0 0.0
    %3736 = vmatprep.subr.mxu0 0.0
    %3737 = vmatpush1.msra.mxu0 0.0
    %3738 = vmatprep.subr.mxu0 0.0
    %3739 = vmatpush1.msra.mxu0 0.0
    %3740 = vmatprep.subr.mxu0 0.0
    %3741 = vmatpush1.msra.mxu0 0.0
    %3742 = vmatprep.subr.mxu0 0.0
    %3743 = vmatpush1.msra.mxu0 0.0
    %3744 = vmatprep.subr.mxu0 0.0
    %3745 = vmatpush1.msra.mxu0 0.0
    %3746 = vmatprep.subr.mxu0 0.0
    %3747 = vmatpush1.msra.mxu0 0.0
    %3748 = vmatprep.subr.mxu0 0.0
    %3749 = vmatpush1.msra.mxu0 0.0
    %3750 = vmatprep.subr.mxu0 0.0
    %3751 = vmatpush1.msra.mxu0 0.0
    %3752 = vmatprep.subr.mxu0 0.0
    %3753 = vmatpush1.msra.mxu0 0.0
    %3754 = vmatprep.subr.mxu0 0.0
    %3755 = vmatpush1.msra.mxu0 0.0
    %3756 = vmatprep.subr.mxu0 0.0
    %3757 = vmatpush1.msra.mxu0 0.0
    %3758 = vmatprep.subr.mxu0 0.0
    %3759 = vmatpush1.msra.mxu0 0.0
    %3760 = vmatprep.subr.mxu0 0.0
    %3761 = vmatpush1.msra.mxu0 0.0
    %3762 = vmatprep.mubr.f32.mxu0 0.0
    %3763 = vmatmul.mubr.f32.gmra.mrb[0].mxu0 %v3693
    %v3764 = vpop.f32.mrb[0].mxu0
    %v3765 = vadd.f32 0.0, %v3764
    %v3766 = vpop.f32.mrb[0].mxu0
    %3767 = vmatprep.mubr.f32.mxu0 0.0
    %3768 = vmatmul.mubr.f32.gmra.mrb[0].mxu0 %v3696
    %v3769 = vpop.f32.mrb[0].mxu0
    %v3770 = vadd.f32 0.0, %v3769
    %v3771 = vpop.f32.mrb[0].mxu0
    %3772 = vdwg.mxu0
    %v3773 = vadd.f32 %v3350, %v3765
    %v3774 = vadd.f32 %v3355, %v3770
    %3775 = vrot.lane.b32.xlu0 %v2517, 104
    %v3776 = vpop.permute.xlu0 %3775
    %3777 = vrot.lane.b32.xlu0 %v2517, 72
    %v3778 = vpop.permute.xlu0 %3777
    %v3779 = vsel %vm466, %v3776, 0
    %v3781 = vsel %vm466, %v3778, 0
    %3783 = vmatprep.subr.mxu0 0.0
    %3784 = vmatpush1.xpose.msra.mxu0 %v3781
    %3785 = vmatprep.subr.mxu0 0.0
    %3786 = vmatpush1.xpose.msra.mxu0 0.0
    %3787 = vmatprep.subr.mxu0 0.0
    %3788 = vmatpush1.xpose.msra.mxu0 0.0
    %3789 = vmatprep.subr.mxu0 0.0
    %3790 = vmatpush1.xpose.msra.mxu0 0.0
    %3791 = vmatprep.subr.mxu0 0.0
    %3792 = vmatpush1.xpose.msra.mxu0 0.0
    %3793 = vmatprep.subr.mxu0 0.0
    %3794 = vmatpush1.xpose.msra.mxu0 0.0
    %3795 = vmatprep.subr.mxu0 0.0
    %3796 = vmatpush1.xpose.msra.mxu0 0.0
    %3797 = vmatprep.subr.mxu0 0.0
    %3798 = vmatpush1.xpose.msra.mxu0 0.0
    %3799 = vmatprep.subr.mxu0 0.0
    %3800 = vmatpush1.xpose.msra.mxu0 0.0
    %3801 = vmatprep.subr.mxu0 0.0
    %3802 = vmatpush1.xpose.msra.mxu0 0.0
    %3803 = vmatprep.subr.mxu0 0.0
    %3804 = vmatpush1.xpose.msra.mxu0 0.0
    %3805 = vmatprep.subr.mxu0 0.0
    %3806 = vmatpush1.xpose.msra.mxu0 0.0
    %3807 = vmatprep.subr.mxu0 0.0
    %3808 = vmatpush1.xpose.msra.mxu0 0.0
    %3809 = vmatprep.subr.mxu0 0.0
    %3810 = vmatpush1.xpose.msra.mxu0 0.0
    %3811 = vmatprep.subr.mxu0 0.0
    %3812 = vmatpush1.xpose.msra.mxu0 0.0
    %3813 = vmatprep.subr.mxu0 0.0
    %3814 = vmatpush1.xpose.msra.mxu0 0.0
    %3815 = vmatprep.subr.mxu0 0.0
    %3816 = vmatpush1.xpose.msra.mxu0 0.0
    %3817 = vmatprep.subr.mxu0 0.0
    %3818 = vmatpush1.xpose.msra.mxu0 0.0
    %3819 = vmatprep.subr.mxu0 0.0
    %3820 = vmatpush1.xpose.msra.mxu0 0.0
    %3821 = vmatprep.subr.mxu0 0.0
    %3822 = vmatpush1.xpose.msra.mxu0 0.0
    %3823 = vmatprep.subr.mxu0 0.0
    %3824 = vmatpush1.xpose.msra.mxu0 0.0
    %3825 = vmatprep.subr.mxu0 0.0
    %3826 = vmatpush1.xpose.msra.mxu0 0.0
    %3827 = vmatprep.subr.mxu0 0.0
    %3828 = vmatpush1.xpose.msra.mxu0 0.0
    %3829 = vmatprep.subr.mxu0 0.0
    %3830 = vmatpush1.xpose.msra.mxu0 0.0
    %3831 = vmatprep.subr.mxu0 0.0
    %3832 = vmatpush1.xpose.msra.mxu0 0.0
    %3833 = vmatprep.subr.mxu0 0.0
    %3834 = vmatpush1.xpose.msra.mxu0 0.0
    %3835 = vmatprep.subr.mxu0 0.0
    %3836 = vmatpush1.xpose.msra.mxu0 0.0
    %3837 = vmatprep.subr.mxu0 0.0
    %3838 = vmatpush1.xpose.msra.mxu0 0.0
    %3839 = vmatprep.subr.mxu0 0.0
    %3840 = vmatpush1.xpose.msra.mxu0 0.0
    %3841 = vmatprep.subr.mxu0 0.0
    %3842 = vmatpush1.xpose.msra.mxu0 0.0
    %3843 = vmatprep.subr.mxu0 0.0
    %3844 = vmatpush1.xpose.msra.mxu0 0.0
    %3845 = vmatprep.subr.mxu0 0.0
    %3846 = vmatpush1.xpose.msra.mxu0 0.0
    %3847 = vmatprep.mubr.f32.mxu0 0.0
    %3848 = vmatmul.mubr.f32.gmra.mrb[0].mxu0 %v3779
    %v3849 = vpop.f32.mrb[0].mxu0
    %v3850 = vadd.f32 0.0, %v3849
    %v3851 = vpop.f32.mrb[0].mxu0
    %3852 = vdwg.mxu0
    %3853 = vrot.lane.b32.xlu0 %v2522, 104
    %v3854 = vpop.permute.xlu0 %3853
    %3855 = vrot.lane.b32.xlu0 %v2522, 72
    %v3856 = vpop.permute.xlu0 %3855
    %v3857 = vsel %vm466, %v3854, 0
    %v3859 = vsel %vm466, %v3856, 0
    %3861 = vmatprep.subr.mxu0 0.0
    %3862 = vmatpush1.xpose.msra.mxu0 %v3859
    %3863 = vmatprep.subr.mxu0 0.0
    %3864 = vmatpush1.xpose.msra.mxu0 0.0
    %3865 = vmatprep.subr.mxu0 0.0
    %3866 = vmatpush1.xpose.msra.mxu0 0.0
    %3867 = vmatprep.subr.mxu0 0.0
    %3868 = vmatpush1.xpose.msra.mxu0 0.0
    %3869 = vmatprep.subr.mxu0 0.0
    %3870 = vmatpush1.xpose.msra.mxu0 0.0
    %3871 = vmatprep.subr.mxu0 0.0
    %3872 = vmatpush1.xpose.msra.mxu0 0.0
    %3873 = vmatprep.subr.mxu0 0.0
    %3874 = vmatpush1.xpose.msra.mxu0 0.0
    %3875 = vmatprep.subr.mxu0 0.0
    %3876 = vmatpush1.xpose.msra.mxu0 0.0
    %3877 = vmatprep.subr.mxu0 0.0
    %3878 = vmatpush1.xpose.msra.mxu0 0.0
    %3879 = vmatprep.subr.mxu0 0.0
    %3880 = vmatpush1.xpose.msra.mxu0 0.0
    %3881 = vmatprep.subr.mxu0 0.0
    %3882 = vmatpush1.xpose.msra.mxu0 0.0
    %3883 = vmatprep.subr.mxu0 0.0
    %3884 = vmatpush1.xpose.msra.mxu0 0.0
    %3885 = vmatprep.subr.mxu0 0.0
    %3886 = vmatpush1.xpose.msra.mxu0 0.0
    %3887 = vmatprep.subr.mxu0 0.0
    %3888 = vmatpush1.xpose.msra.mxu0 0.0
    %3889 = vmatprep.subr.mxu0 0.0
    %3890 = vmatpush1.xpose.msra.mxu0 0.0
    %3891 = vmatprep.subr.mxu0 0.0
    %3892 = vmatpush1.xpose.msra.mxu0 0.0
    %3893 = vmatprep.subr.mxu0 0.0
    %3894 = vmatpush1.xpose.msra.mxu0 0.0
    %3895 = vmatprep.subr.mxu0 0.0
    %3896 = vmatpush1.xpose.msra.mxu0 0.0
    %3897 = vmatprep.subr.mxu0 0.0
    %3898 = vmatpush1.xpose.msra.mxu0 0.0
    %3899 = vmatprep.subr.mxu0 0.0
    %3900 = vmatpush1.xpose.msra.mxu0 0.0
    %3901 = vmatprep.subr.mxu0 0.0
    %3902 = vmatpush1.xpose.msra.mxu0 0.0
    %3903 = vmatprep.subr.mxu0 0.0
    %3904 = vmatpush1.xpose.msra.mxu0 0.0
    %3905 = vmatprep.subr.mxu0 0.0
    %3906 = vmatpush1.xpose.msra.mxu0 0.0
    %3907 = vmatprep.subr.mxu0 0.0
    %3908 = vmatpush1.xpose.msra.mxu0 0.0
    %3909 = vmatprep.subr.mxu0 0.0
    %3910 = vmatpush1.xpose.msra.mxu0 0.0
    %3911 = vmatprep.subr.mxu0 0.0
    %3912 = vmatpush1.xpose.msra.mxu0 0.0
    %3913 = vmatprep.subr.mxu0 0.0
    %3914 = vmatpush1.xpose.msra.mxu0 0.0
    %3915 = vmatprep.subr.mxu0 0.0
    %3916 = vmatpush1.xpose.msra.mxu0 0.0
    %3917 = vmatprep.subr.mxu0 0.0
    %3918 = vmatpush1.xpose.msra.mxu0 0.0
    %3919 = vmatprep.subr.mxu0 0.0
    %3920 = vmatpush1.xpose.msra.mxu0 0.0
    %3921 = vmatprep.subr.mxu0 0.0
    %3922 = vmatpush1.xpose.msra.mxu0 0.0
    %3923 = vmatprep.subr.mxu0 0.0
    %3924 = vmatpush1.xpose.msra.mxu0 0.0
    %3925 = vmatprep.mubr.f32.mxu0 0.0
    %3926 = vmatmul.mubr.f32.gmra.mrb[0].mxu0 %v3857
    %v3927 = vpop.f32.mrb[0].mxu0
    %v3928 = vadd.f32 0.0, %v3927
    %v3929 = vpop.f32.mrb[0].mxu0
    %3930 = vdwg.mxu0
    %v3931 = vmul.f32 %v3850, 0.35355338
    %v3932 = vmul.f32 %v3928, 0.35355338
    %v3933 = vadd.f32 %v3931, %v360
    %v3934 = vadd.f32 %v3932, %v364
    %v3935 = vsel %vm466, %v3933, -inf
    %3936 = vmax.xlane.f32.xlu0 %v3935
    %v3937 = vpop.xlane.xlu0 %3936
    %v3938 = vsel %vm466, %v3934, -inf
    %3939 = vmax.xlane.f32.xlu0 %v3938
    %v3940 = vpop.xlane.xlu0 %3939
    %v3941 = vsub.f32 %v3933, %v3937
    %v3942 = vsub.f32 %v3934, %v3940
    %v3943 = vmul.f32 %v3941, 1.442695
    %v3944 = vpow.pop %v3943
    %v3945 = vmul.f32 %v3942, 1.442695
    %v3946 = vpow.pop %v3945
    %v3947 = vsel %vm466, %v3944, 0.0
    %3948 = vadd.xlane.f32.xlu0 %v3947
    %v3949 = vpop.xlane.xlu0 %3948
    %v3950 = vsel %vm466, %v3946, 0.0
    %3951 = vadd.xlane.f32.xlu0 %v3950
    %v3952 = vpop.xlane.xlu0 %3951
    %v3953 = vrcp.pop %v3949
    %v3954 = vrcp.pop %v3952
    %v3955 = vmul.f32 %v3944, %v3953
    %v3956 = vmul.f32 %v3946, %v3954
    %3957 = vrot.lane.b32.xlu0 %v2517, 40
    %v3958 = vpop.permute.xlu0 %3957
    %v3961 = vsel %vm466, %v3955, 0
    %3963 = vmatprep.subr.mxu0 0.0
    %3964 = vmatpush1.msra.mxu0 %v3958
    %3965 = vmatprep.subr.mxu0 0.0
    %3966 = vmatpush1.msra.mxu0 0.0
    %3967 = vmatprep.subr.mxu0 0.0
    %3968 = vmatpush1.msra.mxu0 0.0
    %3969 = vmatprep.subr.mxu0 0.0
    %3970 = vmatpush1.msra.mxu0 0.0
    %3971 = vmatprep.subr.mxu0 0.0
    %3972 = vmatpush1.msra.mxu0 0.0
    %3973 = vmatprep.subr.mxu0 0.0
    %3974 = vmatpush1.msra.mxu0 0.0
    %3975 = vmatprep.subr.mxu0 0.0
    %3976 = vmatpush1.msra.mxu0 0.0
    %3977 = vmatprep.subr.mxu0 0.0
    %3978 = vmatpush1.msra.mxu0 0.0
    %3979 = vmatprep.subr.mxu0 0.0
    %3980 = vmatpush1.msra.mxu0 0.0
    %3981 = vmatprep.subr.mxu0 0.0
    %3982 = vmatpush1.msra.mxu0 0.0
    %3983 = vmatprep.subr.mxu0 0.0
    %3984 = vmatpush1.msra.mxu0 0.0
    %3985 = vmatprep.subr.mxu0 0.0
    %3986 = vmatpush1.msra.mxu0 0.0
    %3987 = vmatprep.subr.mxu0 0.0
    %3988 = vmatpush1.msra.mxu0 0.0
    %3989 = vmatprep.subr.mxu0 0.0
    %3990 = vmatpush1.msra.mxu0 0.0
    %3991 = vmatprep.subr.mxu0 0.0
    %3992 = vmatpush1.msra.mxu0 0.0
    %3993 = vmatprep.subr.mxu0 0.0
    %3994 = vmatpush1.msra.mxu0 0.0
    %3995 = vmatprep.subr.mxu0 0.0
    %3996 = vmatpush1.msra.mxu0 0.0
    %3997 = vmatprep.subr.mxu0 0.0
    %3998 = vmatpush1.msra.mxu0 0.0
    %3999 = vmatprep.subr.mxu0 0.0
    %4000 = vmatpush1.msra.mxu0 0.0
    %4001 = vmatprep.subr.mxu0 0.0
    %4002 = vmatpush1.msra.mxu0 0.0
    %4003 = vmatprep.subr.mxu0 0.0
    %4004 = vmatpush1.msra.mxu0 0.0
    %4005 = vmatprep.subr.mxu0 0.0
    %4006 = vmatpush1.msra.mxu0 0.0
    %4007 = vmatprep.subr.mxu0 0.0
    %4008 = vmatpush1.msra.mxu0 0.0
    %4009 = vmatprep.subr.mxu0 0.0
    %4010 = vmatpush1.msra.mxu0 0.0
    %4011 = vmatprep.subr.mxu0 0.0
    %4012 = vmatpush1.msra.mxu0 0.0
    %4013 = vmatprep.subr.mxu0 0.0
    %4014 = vmatpush1.msra.mxu0 0.0
    %4015 = vmatprep.subr.mxu0 0.0
    %4016 = vmatpush1.msra.mxu0 0.0
    %4017 = vmatprep.subr.mxu0 0.0
    %4018 = vmatpush1.msra.mxu0 0.0
    %4019 = vmatprep.subr.mxu0 0.0
    %4020 = vmatpush1.msra.mxu0 0.0
    %4021 = vmatprep.subr.mxu0 0.0
    %4022 = vmatpush1.msra.mxu0 0.0
    %4023 = vmatprep.subr.mxu0 0.0
    %4024 = vmatpush1.msra.mxu0 0.0
    %4025 = vmatprep.subr.mxu0 0.0
    %4026 = vmatpush1.msra.mxu0 0.0
    %4027 = vmatprep.mubr.f32.mxu0 0.0
    %4028 = vmatmul.mubr.f32.gmra.mrb[0].mxu0 %v3961
    %v4029 = vpop.f32.mrb[0].mxu0
    %v4030 = vadd.f32 0.0, %v4029
    %v4031 = vpop.f32.mrb[0].mxu0
    %4032 = vdwg.mxu0
    %4033 = vrot.lane.b32.xlu0 %v2522, 40
    %v4034 = vpop.permute.xlu0 %4033
    %v4037 = vsel %vm466, %v3956, 0
    %4039 = vmatprep.subr.mxu0 0.0
    %4040 = vmatpush1.msra.mxu0 %v4034
    %4041 = vmatprep.subr.mxu0 0.0
    %4042 = vmatpush1.msra.mxu0 0.0
    %4043 = vmatprep.subr.mxu0 0.0
    %4044 = vmatpush1.msra.mxu0 0.0
    %4045 = vmatprep.subr.mxu0 0.0
    %4046 = vmatpush1.msra.mxu0 0.0
    %4047 = vmatprep.subr.mxu0 0.0
    %4048 = vmatpush1.msra.mxu0 0.0
    %4049 = vmatprep.subr.mxu0 0.0
    %4050 = vmatpush1.msra.mxu0 0.0
    %4051 = vmatprep.subr.mxu0 0.0
    %4052 = vmatpush1.msra.mxu0 0.0
    %4053 = vmatprep.subr.mxu0 0.0
    %4054 = vmatpush1.msra.mxu0 0.0
    %4055 = vmatprep.subr.mxu0 0.0
    %4056 = vmatpush1.msra.mxu0 0.0
    %4057 = vmatprep.subr.mxu0 0.0
    %4058 = vmatpush1.msra.mxu0 0.0
    %4059 = vmatprep.subr.mxu0 0.0
    %4060 = vmatpush1.msra.mxu0 0.0
    %4061 = vmatprep.subr.mxu0 0.0
    %4062 = vmatpush1.msra.mxu0 0.0
    %4063 = vmatprep.subr.mxu0 0.0
    %4064 = vmatpush1.msra.mxu0 0.0
    %4065 = vmatprep.subr.mxu0 0.0
    %4066 = vmatpush1.msra.mxu0 0.0
    %4067 = vmatprep.subr.mxu0 0.0
    %4068 = vmatpush1.msra.mxu0 0.0
    %4069 = vmatprep.subr.mxu0 0.0
    %4070 = vmatpush1.msra.mxu0 0.0
    %4071 = vmatprep.subr.mxu0 0.0
    %4072 = vmatpush1.msra.mxu0 0.0
    %4073 = vmatprep.subr.mxu0 0.0
    %4074 = vmatpush1.msra.mxu0 0.0
    %4075 = vmatprep.subr.mxu0 0.0
    %4076 = vmatpush1.msra.mxu0 0.0
    %4077 = vmatprep.subr.mxu0 0.0
    %4078 = vmatpush1.msra.mxu0 0.0
    %4079 = vmatprep.subr.mxu0 0.0
    %4080 = vmatpush1.msra.mxu0 0.0
    %4081 = vmatprep.subr.mxu0 0.0
    %4082 = vmatpush1.msra.mxu0 0.0
    %4083 = vmatprep.subr.mxu0 0.0
    %4084 = vmatpush1.msra.mxu0 0.0
    %4085 = vmatprep.subr.mxu0 0.0
    %4086 = vmatpush1.msra.mxu0 0.0
    %4087 = vmatprep.subr.mxu0 0.0
    %4088 = vmatpush1.msra.mxu0 0.0
    %4089 = vmatprep.subr.mxu0 0.0
    %4090 = vmatpush1.msra.mxu0 0.0
    %4091 = vmatprep.subr.mxu0 0.0
    %4092 = vmatpush1.msra.mxu0 0.0
    %4093 = vmatprep.subr.mxu0 0.0
    %4094 = vmatpush1.msra.mxu0 0.0
    %4095 = vmatprep.subr.mxu0 0.0
    %4096 = vmatpush1.msra.mxu0 0.0
    %4097 = vmatprep.subr.mxu0 0.0
    %4098 = vmatpush1.msra.mxu0 0.0
    %4099 = vmatprep.subr.mxu0 0.0
    %4100 = vmatpush1.msra.mxu0 0.0
    %4101 = vmatprep.subr.mxu0 0.0
    %4102 = vmatpush1.msra.mxu0 0.0
    %4103 = vmatprep.mubr.f32.mxu0 0.0
    %4104 = vmatmul.mubr.f32.gmra.mrb[0].mxu0 %v4037
    %v4105 = vpop.f32.mrb[0].mxu0
    %v4106 = vadd.f32 0.0, %v4105
    %v4107 = vpop.f32.mrb[0].mxu0
    %4108 = vdwg.mxu0
    %v4110 = vsel %vm466, %v4030, 0
    %v4113 = vsel %vm466, %v4106, 0
    %4115 = vmatprep.subr.mxu0 0.0
    %4116 = vmatpush1.msra.mxu0 %v2529
    %4117 = vmatprep.subr.mxu0 0.0
    %4118 = vmatpush1.msra.mxu0 0.0
    %4119 = vmatprep.subr.mxu0 0.0
    %4120 = vmatpush1.msra.mxu0 0.0
    %4121 = vmatprep.subr.mxu0 0.0
    %4122 = vmatpush1.msra.mxu0 0.0
    %4123 = vmatprep.subr.mxu0 0.0
    %4124 = vmatpush1.msra.mxu0 0.0
    %4125 = vmatprep.subr.mxu0 0.0
    %4126 = vmatpush1.msra.mxu0 0.0
    %4127 = vmatprep.subr.mxu0 0.0
    %4128 = vmatpush1.msra.mxu0 0.0
    %4129 = vmatprep.subr.mxu0 0.0
    %4130 = vmatpush1.msra.mxu0 0.0
    %4131 = vmatprep.subr.mxu0 0.0
    %4132 = vmatpush1.msra.mxu0 0.0
    %4133 = vmatprep.subr.mxu0 0.0
    %4134 = vmatpush1.msra.mxu0 0.0
    %4135 = vmatprep.subr.mxu0 0.0
    %4136 = vmatpush1.msra.mxu0 0.0
    %4137 = vmatprep.subr.mxu0 0.0
    %4138 = vmatpush1.msra.mxu0 0.0
    %4139 = vmatprep.subr.mxu0 0.0
    %4140 = vmatpush1.msra.mxu0 0.0
    %4141 = vmatprep.subr.mxu0 0.0
    %4142 = vmatpush1.msra.mxu0 0.0
    %4143 = vmatprep.subr.mxu0 0.0
    %4144 = vmatpush1.msra.mxu0 0.0
    %4145 = vmatprep.subr.mxu0 0.0
    %4146 = vmatpush1.msra.mxu0 0.0
    %4147 = vmatprep.subr.mxu0 0.0
    %4148 = vmatpush1.msra.mxu0 0.0
    %4149 = vmatprep.subr.mxu0 0.0
    %4150 = vmatpush1.msra.mxu0 0.0
    %4151 = vmatprep.subr.mxu0 0.0
    %4152 = vmatpush1.msra.mxu0 0.0
    %4153 = vmatprep.subr.mxu0 0.0
    %4154 = vmatpush1.msra.mxu0 0.0
    %4155 = vmatprep.subr.mxu0 0.0
    %4156 = vmatpush1.msra.mxu0 0.0
    %4157 = vmatprep.subr.mxu0 0.0
    %4158 = vmatpush1.msra.mxu0 0.0
    %4159 = vmatprep.subr.mxu0 0.0
    %4160 = vmatpush1.msra.mxu0 0.0
    %4161 = vmatprep.subr.mxu0 0.0
    %4162 = vmatpush1.msra.mxu0 0.0
    %4163 = vmatprep.subr.mxu0 0.0
    %4164 = vmatpush1.msra.mxu0 0.0
    %4165 = vmatprep.subr.mxu0 0.0
    %4166 = vmatpush1.msra.mxu0 0.0
    %4167 = vmatprep.subr.mxu0 0.0
    %4168 = vmatpush1.msra.mxu0 0.0
    %4169 = vmatprep.subr.mxu0 0.0
    %4170 = vmatpush1.msra.mxu0 0.0
    %4171 = vmatprep.subr.mxu0 0.0
    %4172 = vmatpush1.msra.mxu0 0.0
    %4173 = vmatprep.subr.mxu0 0.0
    %4174 = vmatpush1.msra.mxu0 0.0
    %4175 = vmatprep.subr.mxu0 0.0
    %4176 = vmatpush1.msra.mxu0 0.0
    %4177 = vmatprep.subr.mxu0 0.0
    %4178 = vmatpush1.msra.mxu0 0.0
    %4179 = vmatprep.mubr.f32.mxu0 0.0
    %4180 = vmatmul.mubr.f32.gmra.mrb[0].mxu0 %v4110
    %v4181 = vpop.f32.mrb[0].mxu0
    %v4182 = vadd.f32 0.0, %v4181
    %v4183 = vpop.f32.mrb[0].mxu0
    %4184 = vmatprep.mubr.f32.mxu0 0.0
    %4185 = vmatmul.mubr.f32.gmra.mrb[0].mxu0 %v4113
    %v4186 = vpop.f32.mrb[0].mxu0
    %v4187 = vadd.f32 0.0, %v4186
    %v4188 = vpop.f32.mrb[0].mxu0
    %4189 = vdwg.mxu0
    %v4190 = vadd.f32 %v3773, %v4182
    %v4191 = vadd.f32 %v3774, %v4187
    %s4192 = scalar_lea.vmem %s9, 1
    %v4193 = vld [vmem:[%s4192] sm:$0x1]
    %v4195 = vlaneseq
    %v4196 = vshrl.u32 %v4195, 7
    %v4197 = vsub.s32 0, %v4196
    %v4198 = vrot.slane %v4193, %v4197
    %v4200 = vadd.f32 %v4190, %v4198
    %v4201 = vadd.f32 %v4191, %v4198
    %v4202 = vadd.f32 %v4200, %v2429
    %v4203 = vadd.f32 %v4201, %v2430
    %v4204 = vsel %vm177, %v4202, 0.0
    %4205 = vadd.xlane.f32.xlu0 %v4204
    %v4206 = vpop.xlane.xlu0 %4205
    %v4207 = vsel %vm177, %v4203, 0.0
    %4208 = vadd.xlane.f32.xlu0 %v4207
    %v4209 = vpop.xlane.xlu0 %4208
    %v4210 = vrot.slane %v4206, 4
    %v4211 = vadd.f32 %v4206, %v4210
    %v4212 = vrot.slane %v4211, 2
    %v4213 = vadd.f32 %v4211, %v4212
    %v4214 = vrot.slane %v4213, 1
    %v4215 = vadd.f32 %v4213, %v4214
    %v4216 = vrot.slane %v4209, 4
    %v4217 = vadd.f32 %v4209, %v4216
    %v4218 = vrot.slane %v4217, 2
    %v4219 = vadd.f32 %v4217, %v4218
    %v4220 = vrot.slane %v4219, 1
    %v4221 = vadd.f32 %v4219, %v4220
    %v4222 = vmul.f32 %v4215, 0.00390625
    %v4223 = vmul.f32 %v4221, 0.00390625
    %v4224 = vsub.f32 %v4202, %v4222
    %v4225 = vsub.f32 %v4203, %v4223
    %v4226 = vmul.f32 %v4224, %v4224
    %v4227 = vmul.f32 %v4225, %v4225
    %v4228 = vsel %vm177, %v4226, 0.0
    %4229 = vadd.xlane.f32.xlu0 %v4228
    %v4230 = vpop.xlane.xlu0 %4229
    %v4231 = vsel %vm177, %v4227, 0.0
    %4232 = vadd.xlane.f32.xlu0 %v4231
    %v4233 = vpop.xlane.xlu0 %4232
    %v4234 = vrot.slane %v4230, 4
    %v4235 = vadd.f32 %v4230, %v4234
    %v4236 = vrot.slane %v4235, 2
    %v4237 = vadd.f32 %v4235, %v4236
    %v4238 = vrot.slane %v4237, 1
    %v4239 = vadd.f32 %v4237, %v4238
    %v4240 = vrot.slane %v4233, 4
    %v4241 = vadd.f32 %v4233, %v4240
    %v4242 = vrot.slane %v4241, 2
    %v4243 = vadd.f32 %v4241, %v4242
    %v4244 = vrot.slane %v4243, 1
    %v4245 = vadd.f32 %v4243, %v4244
    %v4246 = vmul.f32 %v4239, 0.00390625
    %v4247 = vmul.f32 %v4245, 0.00390625
    %v4248 = vadd.f32 %v4246, 1e-05
    %v4249 = vadd.f32 %v4247, 1e-05
    %v4250 = vrsqrt.pop %v4248
    %v4251 = vrsqrt.pop %v4249
    %v4252 = vmul.f32 %v4224, %v4250
    %v4253 = vmul.f32 %v4225, %v4251
    %s4254 = scalar_lea.vmem [#allocation5], 8
    %v4255 = vld [vmem:[%s4254] sm:$0xff]
    %v4256 = vmul.f32 %v4252, %v4255
    %v4257 = vmul.f32 %v4253, %v4255
    %s4258 = scalar_lea.vmem [#allocation7], 8
    %v4259 = vld [vmem:[%s4258] sm:$0xff]
    %v4260 = vadd.f32 %v4256, %v4259
    %v4261 = vadd.f32 %v4257, %v4259
    %s4262 = scalar_lea.vmem %s12, 32
    %v4263 = vld [vmem:[%s4262] sm:$0xff]
    %v4264 = vld [vmem:[%s4262 + $0x8] sm:$0xff]
    %v4265 = vld [vmem:[%s4262 + $0x10] sm:$0xff]
    %v4266 = vld [vmem:[%s4262 + $0x18] sm:$0xff]
    %s4267 = scalar_lea.vmem %s13, 1
    %v4268 = vld [vmem:[%s4267] sm:$0x1]
    %v4270 = vlaneseq
    %v4271 = vshrl.u32 %v4270, 7
    %v4272 = vsub.s32 0, %v4271
    %v4273 = vrot.slane %v4268, %v4272
    %v4276 = vsel %vm177, %v4260, 0
    %v4279 = vsel %vm177, %v4261, 0
    %4281 = vmatprep.subr.mxu0 0.0
    %4282 = vmatpush1.msra.mxu0 %v4263
    %4283 = vmatprep.subr.mxu0 0.0
    %4284 = vmatpush1.msra.mxu0 %v4264
    %4285 = vmatprep.subr.mxu0 0.0
    %4286 = vmatpush1.msra.mxu0 %v4265
    %4287 = vmatprep.subr.mxu0 0.0
    %4288 = vmatpush1.msra.mxu0 %v4266
    %4289 = vmatprep.subr.mxu0 0.0
    %4290 = vmatpush1.msra.mxu0 0.0
    %4291 = vmatprep.subr.mxu0 0.0
    %4292 = vmatpush1.msra.mxu0 0.0
    %4293 = vmatprep.subr.mxu0 0.0
    %4294 = vmatpush1.msra.mxu0 0.0
    %4295 = vmatprep.subr.mxu0 0.0
    %4296 = vmatpush1.msra.mxu0 0.0
    %4297 = vmatprep.subr.mxu0 0.0
    %4298 = vmatpush1.msra.mxu0 0.0
    %4299 = vmatprep.subr.mxu0 0.0
    %4300 = vmatpush1.msra.mxu0 0.0
    %4301 = vmatprep.subr.mxu0 0.0
    %4302 = vmatpush1.msra.mxu0 0.0
    %4303 = vmatprep.subr.mxu0 0.0
    %4304 = vmatpush1.msra.mxu0 0.0
    %4305 = vmatprep.subr.mxu0 0.0
    %4306 = vmatpush1.msra.mxu0 0.0
    %4307 = vmatprep.subr.mxu0 0.0
    %4308 = vmatpush1.msra.mxu0 0.0
    %4309 = vmatprep.subr.mxu0 0.0
    %4310 = vmatpush1.msra.mxu0 0.0
    %4311 = vmatprep.subr.mxu0 0.0
    %4312 = vmatpush1.msra.mxu0 0.0
    %4313 = vmatprep.subr.mxu0 0.0
    %4314 = vmatpush1.msra.mxu0 0.0
    %4315 = vmatprep.subr.mxu0 0.0
    %4316 = vmatpush1.msra.mxu0 0.0
    %4317 = vmatprep.subr.mxu0 0.0
    %4318 = vmatpush1.msra.mxu0 0.0
    %4319 = vmatprep.subr.mxu0 0.0
    %4320 = vmatpush1.msra.mxu0 0.0
    %4321 = vmatprep.subr.mxu0 0.0
    %4322 = vmatpush1.msra.mxu0 0.0
    %4323 = vmatprep.subr.mxu0 0.0
    %4324 = vmatpush1.msra.mxu0 0.0
    %4325 = vmatprep.subr.mxu0 0.0
    %4326 = vmatpush1.msra.mxu0 0.0
    %4327 = vmatprep.subr.mxu0 0.0
    %4328 = vmatpush1.msra.mxu0 0.0
    %4329 = vmatprep.subr.mxu0 0.0
    %4330 = vmatpush1.msra.mxu0 0.0
    %4331 = vmatprep.subr.mxu0 0.0
    %4332 = vmatpush1.msra.mxu0 0.0
    %4333 = vmatprep.subr.mxu0 0.0
    %4334 = vmatpush1.msra.mxu0 0.0
    %4335 = vmatprep.subr.mxu0 0.0
    %4336 = vmatpush1.msra.mxu0 0.0
    %4337 = vmatprep.subr.mxu0 0.0
    %4338 = vmatpush1.msra.mxu0 0.0
    %4339 = vmatprep.subr.mxu0 0.0
    %4340 = vmatpush1.msra.mxu0 0.0
    %4341 = vmatprep.subr.mxu0 0.0
    %4342 = vmatpush1.msra.mxu0 0.0
    %4343 = vmatprep.subr.mxu0 0.0
    %4344 = vmatpush1.msra.mxu0 0.0
    %4345 = vmatprep.mubr.f32.mxu0 0.0
    %4346 = vmatmul.mubr.f32.gmra.mrb[0].mxu0 %v4276
    %v4347 = vpop.f32.mrb[0].mxu0
    %v4348 = vadd.f32 %v4273, %v4347
    %v4349 = vpop.f32.mrb[0].mxu0
    %4350 = vmatprep.mubr.f32.mxu0 0.0
    %4351 = vmatmul.mubr.f32.gmra.mrb[0].mxu0 %v4279
    %v4352 = vpop.f32.mrb[0].mxu0
    %v4353 = vadd.f32 %v4273, %v4352
    %v4354 = vpop.f32.mrb[0].mxu0
    %4355 = vdwg.mxu0
    %v4356 = vmax.f32 %v4348, 0.0
    %v4357 = vmax.f32 %v4353, 0.0
    %s4358 = scalar_lea.vmem %s14, 64
    %v4359 = vld [vmem:[%s4358] sm:$0xff]
    %v4360 = vld [vmem:[%s4358 + $0x8] sm:$0xff]
    %v4361 = vld [vmem:[%s4358 + $0x10] sm:$0xff]
    %v4362 = vld [vmem:[%s4358 + $0x18] sm:$0xff]
    %v4363 = vld [vmem:[%s4358 + $0x20] sm:$0xff]
    %v4364 = vld [vmem:[%s4358 + $0x28] sm:$0xff]
    %v4365 = vld [vmem:[%s4358 + $0x30] sm:$0xff]
    %v4366 = vld [vmem:[%s4358 + $0x38] sm:$0xff]
    %s4367 = scalar_lea.vmem [#allocation8], 1
    %v4368 = vld [vmem:[%s4367] sm:$0x1]
    %v4370 = vlaneseq
    %v4371 = vshrl.u32 %v4370, 7
    %v4372 = vsub.s32 0, %v4371
    %v4373 = vrot.slane %v4368, %v4372
    %v4376 = vsel %vm2302, %v4356, 0
    %v4379 = vsel %vm2302, %v4357, 0
    %4381 = vmatprep.subr.mxu0 0.0
    %4382 = vmatpush1.msra.mxu0 %v4359
    %4383 = vmatprep.subr.mxu0 0.0
    %4384 = vmatpush1.msra.mxu0 %v4360
    %4385 = vmatprep.subr.mxu0 0.0
    %4386 = vmatpush1.msra.mxu0 %v4361
    %4387 = vmatprep.subr.mxu0 0.0
    %4388 = vmatpush1.msra.mxu0 %v4362
    %4389 = vmatprep.subr.mxu0 0.0
    %4390 = vmatpush1.msra.mxu0 %v4363
    %4391 = vmatprep.subr.mxu0 0.0
    %4392 = vmatpush1.msra.mxu0 %v4364
    %4393 = vmatprep.subr.mxu0 0.0
    %4394 = vmatpush1.msra.mxu0 %v4365
    %4395 = vmatprep.subr.mxu0 0.0
    %4396 = vmatpush1.msra.mxu0 %v4366
    %4397 = vmatprep.subr.mxu0 0.0
    %4398 = vmatpush1.msra.mxu0 0.0
    %4399 = vmatprep.subr.mxu0 0.0
    %4400 = vmatpush1.msra.mxu0 0.0
    %4401 = vmatprep.subr.mxu0 0.0
    %4402 = vmatpush1.msra.mxu0 0.0
    %4403 = vmatprep.subr.mxu0 0.0
    %4404 = vmatpush1.msra.mxu0 0.0
    %4405 = vmatprep.subr.mxu0 0.0
    %4406 = vmatpush1.msra.mxu0 0.0
    %4407 = vmatprep.subr.mxu0 0.0
    %4408 = vmatpush1.msra.mxu0 0.0
    %4409 = vmatprep.subr.mxu0 0.0
    %4410 = vmatpush1.msra.mxu0 0.0
    %4411 = vmatprep.subr.mxu0 0.0
    %4412 = vmatpush1.msra.mxu0 0.0
    %4413 = vmatprep.subr.mxu0 0.0
    %4414 = vmatpush1.msra.mxu0 0.0
    %4415 = vmatprep.subr.mxu0 0.0
    %4416 = vmatpush1.msra.mxu0 0.0
    %4417 = vmatprep.subr.mxu0 0.0
    %4418 = vmatpush1.msra.mxu0 0.0
    %4419 = vmatprep.subr.mxu0 0.0
    %4420 = vmatpush1.msra.mxu0 0.0
    %4421 = vmatprep.subr.mxu0 0.0
    %4422 = vmatpush1.msra.mxu0 0.0
    %4423 = vmatprep.subr.mxu0 0.0
    %4424 = vmatpush1.msra.mxu0 0.0
    %4425 = vmatprep.subr.mxu0 0.0
    %4426 = vmatpush1.msra.mxu0 0.0
    %4427 = vmatprep.subr.mxu0 0.0
    %4428 = vmatpush1.msra.mxu0 0.0
    %4429 = vmatprep.subr.mxu0 0.0
    %4430 = vmatpush1.msra.mxu0 0.0
    %4431 = vmatprep.subr.mxu0 0.0
    %4432 = vmatpush1.msra.mxu0 0.0
    %4433 = vmatprep.subr.mxu0 0.0
    %4434 = vmatpush1.msra.mxu0 0.0
    %4435 = vmatprep.subr.mxu0 0.0
    %4436 = vmatpush1.msra.mxu0 0.0
    %4437 = vmatprep.subr.mxu0 0.0
    %4438 = vmatpush1.msra.mxu0 0.0
    %4439 = vmatprep.subr.mxu0 0.0
    %4440 = vmatpush1.msra.mxu0 0.0
    %4441 = vmatprep.subr.mxu0 0.0
    %4442 = vmatpush1.msra.mxu0 0.0
    %4443 = vmatprep.subr.mxu0 0.0
    %4444 = vmatpush1.msra.mxu0 0.0
    %4445 = vmatprep.mubr.f32.mxu0 0.0
    %4446 = vmatmul.mubr.f32.gmra.mrb[0].mxu0 %v4376
    %v4447 = vpop.f32.mrb[0].mxu0
    %v4448 = vadd.f32 %v4373, %v4447
    %v4449 = vpop.f32.mrb[0].mxu0
    %4450 = vmatprep.mubr.f32.mxu0 0.0
    %4451 = vmatmul.mubr.f32.gmra.mrb[0].mxu0 %v4379
    %v4452 = vpop.f32.mrb[0].mxu0
    %v4453 = vadd.f32 %v4373, %v4452
    %v4454 = vpop.f32.mrb[0].mxu0
    %4455 = vdwg.mxu0
    %v4456 = vadd.f32 %v4448, %v4260
    %v4457 = vadd.f32 %v4453, %v4261
    %v4458 = vsel %vm177, %v4456, 0.0
    %4459 = vadd.xlane.f32.xlu0 %v4458
    %v4460 = vpop.xlane.xlu0 %4459
    %v4461 = vsel %vm177, %v4457, 0.0
    %4462 = vadd.xlane.f32.xlu0 %v4461
    %v4463 = vpop.xlane.xlu0 %4462
    %v4464 = vmul.f32 %v4460, %v2392
    %v4465 = vmul.f32 %v4463, %v2392
    %v4466 = vsub.f32 %v4456, %v4464
    %v4467 = vsub.f32 %v4457, %v4465
    %v4468 = vmul.f32 %v4466, %v4466
    %v4469 = vmul.f32 %v4467, %v4467
    %v4470 = vsel %vm177, %v4468, 0.0
    %4471 = vadd.xlane.f32.xlu0 %v4470
    %v4472 = vpop.xlane.xlu0 %4471
    %v4473 = vsel %vm177, %v4469, 0.0
    %4474 = vadd.xlane.f32.xlu0 %v4473
    %v4475 = vpop.xlane.xlu0 %4474
    %v4476 = vmul.f32 %v4472, %v2392
    %v4477 = vmul.f32 %v4475, %v2392
    %v4478 = vadd.f32 %v4476, 1e-05
    %v4479 = vadd.f32 %v4477, 1e-05
    %v4480 = vrsqrt.pop %v4478
    %v4481 = vrsqrt.pop %v4479
    %v4482 = vmul.f32 %v4466, %v4480
    %v4483 = vmul.f32 %v4467, %v4481
    %s4484 = scalar_lea.vmem [#allocation10], 1
    %v4485 = vld [vmem:[%s4484] sm:$0x1]
    %v4487 = vlaneseq
    %v4488 = vshrl.u32 %v4487, 7
    %v4489 = vsub.s32 0, %v4488
    %v4490 = vrot.slane %v4485, %v4489
    %v4492 = vmul.f32 %v4482, %v4490
    %v4493 = vmul.f32 %v4483, %v4490
    %s4494 = scalar_lea.vmem [#allocation11], 1
    %v4495 = vld [vmem:[%s4494] sm:$0x1]
    %v4497 = vlaneseq
    %v4498 = vshrl.u32 %v4497, 7
    %v4499 = vsub.s32 0, %v4498
    %v4500 = vrot.slane %v4495, %v4499
    %v4502 = vadd.f32 %v4492, %v4500
    %v4503 = vadd.f32 %v4493, %v4500
    %v4504 = vld [vmem:[%s18] sm:$0xff]
    %v4505 = vld [vmem:[%s18 + $0x8] sm:$0xff]
    %v4506 = vld [vmem:[%s18 + $0x10] sm:$0xff]
    %v4507 = vld [vmem:[%s18 + $0x18] sm:$0xff]
    %v4508 = vld [vmem:[#allocation13] sm:$0x1]
    %v4510 = vlaneseq
    %v4511 = vshrl.u32 %v4510, 7
    %v4512 = vsub.s32 0, %v4511
    %v4513 = vrot.slane %v4508, %v4512
    %v4516 = vsel %vm177, %v4502, 0
    %v4519 = vsel %vm177, %v4503, 0
    %4521 = vmatprep.subr.mxu0 0.0
    %4522 = vmatpush1.msra.mxu0 %v4504
    %4523 = vmatprep.subr.mxu0 0.0
    %4524 = vmatpush1.msra.mxu0 %v4505
    %4525 = vmatprep.subr.mxu0 0.0
    %4526 = vmatpush1.msra.mxu0 %v4506
    %4527 = vmatprep.subr.mxu0 0.0
    %4528 = vmatpush1.msra.mxu0 %v4507
    %4529 = vmatprep.subr.mxu0 0.0
    %4530 = vmatpush1.msra.mxu0 0.0
    %4531 = vmatprep.subr.mxu0 0.0
    %4532 = vmatpush1.msra.mxu0 0.0
    %4533 = vmatprep.subr.mxu0 0.0
    %4534 = vmatpush1.msra.mxu0 0.0
    %4535 = vmatprep.subr.mxu0 0.0
    %4536 = vmatpush1.msra.mxu0 0.0
    %4537 = vmatprep.subr.mxu0 0.0
    %4538 = vmatpush1.msra.mxu0 0.0
    %4539 = vmatprep.subr.mxu0 0.0
    %4540 = vmatpush1.msra.mxu0 0.0
    %4541 = vmatprep.subr.mxu0 0.0
    %4542 = vmatpush1.msra.mxu0 0.0
    %4543 = vmatprep.subr.mxu0 0.0
    %4544 = vmatpush1.msra.mxu0 0.0
    %4545 = vmatprep.subr.mxu0 0.0
    %4546 = vmatpush1.msra.mxu0 0.0
    %4547 = vmatprep.subr.mxu0 0.0
    %4548 = vmatpush1.msra.mxu0 0.0
    %4549 = vmatprep.subr.mxu0 0.0
    %4550 = vmatpush1.msra.mxu0 0.0
    %4551 = vmatprep.subr.mxu0 0.0
    %4552 = vmatpush1.msra.mxu0 0.0
    %4553 = vmatprep.subr.mxu0 0.0
    %4554 = vmatpush1.msra.mxu0 0.0
    %4555 = vmatprep.subr.mxu0 0.0
    %4556 = vmatpush1.msra.mxu0 0.0
    %4557 = vmatprep.subr.mxu0 0.0
    %4558 = vmatpush1.msra.mxu0 0.0
    %4559 = vmatprep.subr.mxu0 0.0
    %4560 = vmatpush1.msra.mxu0 0.0
    %4561 = vmatprep.subr.mxu0 0.0
    %4562 = vmatpush1.msra.mxu0 0.0
    %4563 = vmatprep.subr.mxu0 0.0
    %4564 = vmatpush1.msra.mxu0 0.0
    %4565 = vmatprep.subr.mxu0 0.0
    %4566 = vmatpush1.msra.mxu0 0.0
    %4567 = vmatprep.subr.mxu0 0.0
    %4568 = vmatpush1.msra.mxu0 0.0
    %4569 = vmatprep.subr.mxu0 0.0
    %4570 = vmatpush1.msra.mxu0 0.0
    %4571 = vmatprep.subr.mxu0 0.0
    %4572 = vmatpush1.msra.mxu0 0.0
    %4573 = vmatprep.subr.mxu0 0.0
    %4574 = vmatpush1.msra.mxu0 0.0
    %4575 = vmatprep.subr.mxu0 0.0
    %4576 = vmatpush1.msra.mxu0 0.0
    %4577 = vmatprep.subr.mxu0 0.0
    %4578 = vmatpush1.msra.mxu0 0.0
    %4579 = vmatprep.subr.mxu0 0.0
    %4580 = vmatpush1.msra.mxu0 0.0
    %4581 = vmatprep.subr.mxu0 0.0
    %4582 = vmatpush1.msra.mxu0 0.0
    %4583 = vmatprep.subr.mxu0 0.0
    %4584 = vmatpush1.msra.mxu0 0.0
    %4585 = vmatprep.mubr.f32.mxu0 0.0
    %4586 = vmatmul.mubr.f32.gmra.mrb[0].mxu0 %v4516
    %v4587 = vpop.f32.mrb[0].mxu0
    %v4588 = vadd.f32 %v4513, %v4587
    %v4589 = vpop.f32.mrb[0].mxu0
    %4590 = vmatprep.mubr.f32.mxu0 0.0
    %4591 = vmatmul.mubr.f32.gmra.mrb[0].mxu0 %v4519
    %v4592 = vpop.f32.mrb[0].mxu0
    %v4593 = vadd.f32 %v4513, %v4592
    %v4594 = vpop.f32.mrb[0].mxu0
    %4595 = vdwg.mxu0
    %4596 = vst.msk [vmem:[#allocation14] sm:$0xff] %vm177, %v4588
    %4597 = vst.msk [vmem:[#allocation14 + $0x8] sm:$0xff] %vm177, %v4593
    // Predicated region
    $region110: #{encoder_transformer_forward.1} parent=1 // pred_check
      _
    $region111: #{encoder_transformer_forward.1} parent=1 // pred_check_branch
      %4599 = sbr.rel (0) target = $region113
    $region112: #{encoder_transformer_forward.1} parent=1 // pred_region
      %s4601 = ssub.s32 256, 256
      %4602 = vsyncadd [#allocation4], %s4601
      %s4603 = sshll.u32 [#allocation14], 4
      %s4604 = int_to_ptr.vmem [resolvable:$true] %s4603
      %4609 = dma.vmem_to_hbm [thread:$0]  %s4604, 256, %s20, [#allocation4], 128, 128, 8
    $region113: #{encoder_transformer_forward.1} parent=1 // pred_fallthru
      _
    // Predicated region
    $region114: #{encoder_transformer_forward.1} parent=1 // pred_check
      _
    $region115: #{encoder_transformer_forward.1} parent=1 // pred_check_branch
      %4611 = sbr.rel (0) target = $region117
    $region116: #{encoder_transformer_forward.1} parent=1 // pred_region
      %4612 = dma.done [#allocation4], 256
    $region117: #{encoder_transformer_forward.1} parent=1 // pred_fallthru
      _
    %4613 = vsyncpa [#allocation3], 1
    %4614 = vsyncpa [#allocation6], 1
    %4615 = vsyncpa [#allocation9], 1
    %4616 = vsyncpa [#allocation12], 1
    %4617 = vsyncpa [#allocation4], 1

</llo_original>
